<compile_context>
chip_gen: v7x
topology: tpu7x:2x2x1
jax: 0.10.0
libtpu: 0.0.40
codegen_flags: <defaults>
</compile_context>

<pallas_src>
import jax
import jax.numpy as jnp
import numpy as np
from jax.experimental import pallas as pl
from jax.experimental.pallas import tpu as pltpu

EMBEDDING_DIM = 768
HIDDEN_DIM = 128
NUM_ENCODERS = 5
LN_EPS = 1e-5  # torch.nn.LayerNorm default

# Batch tile: 5 double-buffered (Bt,768) f32 input tiles ~= 7.9 MiB at Bt=256, plus the
# ~1.2 MiB bf16 weight slab -> fits v5e's scoped default and v7x's 64 MiB physical VMEM.
MAX_BATCH_TILE = 256

# torch multiply order: frame * agent * state * action * task  (indices into the 5 inputs)
_PRODUCT_ORDER = (0, 1, 2, 4, 3)


def _round_up(n, m):
    return ((n + m - 1) // m) * m


def _encoder_block(x_f32, w1, small, w2):
    """One encoder. x:(Bt,E) f32, w1:(E,H) bf16, small:(4,H) f32 rows=[b1,gamma,beta,b2], w2:(H,H) bf16."""
    b1 = small[0:1, :]
    gamma = small[1:2, :]
    beta = small[2:3, :]
    b2 = small[3:4, :]

    # Linear 1: bf16 operands (explicit precision policy), f32 accumulation.
    h = jnp.dot(x_f32.astype(jnp.bfloat16), w1,
                preferred_element_type=jnp.float32) + b1
    # LayerNorm over last dim (population variance, eps matches torch) — all f32.
    mu = jnp.mean(h, axis=-1, keepdims=True)
    var = jnp.mean((h - mu) * (h - mu), axis=-1, keepdims=True)
    hn = (h - mu) * jax.lax.rsqrt(var + LN_EPS)
    hn = hn * gamma + beta
    # ReLU
    hn = jnp.maximum(hn, 0.0)
    # Linear 2
    return jnp.dot(hn.astype(jnp.bfloat16), w2,
                   preferred_element_type=jnp.float32) + b2


def _rl_kernel(scale_bias_ref,                          # SMEM (2,)  [output_scale, output_bias]
               x0_ref, x1_ref, x2_ref, x3_ref, x4_ref,  # VMEM (Bt, E) f32 each
               w1_ref,                                  # VMEM (5, E, H) bf16   (resident)
               small_ref,                               # VMEM (5, 4, H) f32    (resident)
               w2_ref,                                  # VMEM (5, H, H) bf16   (resident)
               out_ref):                                # VMEM (Bt, 1) f32
    x_refs = (x0_ref, x1_ref, x2_ref, x3_ref, x4_ref)

    # Fold output_scale / H into one scalar; read SMEM once before the loop.
    scale = scale_bias_ref[0] * (1.0 / HIDDEN_DIM)
    bias = scale_bias_ref[1]

    prod = None
    for e in _PRODUCT_ORDER:                            # fully unrolled (static Python loop)
        y = _encoder_block(x_refs[e][...], w1_ref[e], small_ref[e], w2_ref[e])
        prod = y if prod is None else prod * y
    # TODO(synk): if bundle dumps show vreg spills at large Bt, switch to a
    # lax.fori_loop over a stacked (5, Bt, E) input ref to bound live ranges.

    q = jnp.sum(prod, axis=-1, keepdims=True)           # (Bt, 1); mean folded into `scale`
    out_ref[...] = q * scale + bias


def rl_model_forward(params, frame, agent_id, state, task, action):
    """All embeddings: (B, 1, E) float32. Returns (B, 1) float32."""
    B = frame.shape[0]
    E, H, N = EMBEDDING_DIM, HIDDEN_DIM, NUM_ENCODERS

    # squeeze(1) as a free reshape (row-major contiguous) — no extra copy.
    xs = [x.reshape(B, E) for x in (frame, agent_id, state, task, action)]

    Bt = min(MAX_BATCH_TILE, _round_up(B, 8))
    num_tiles = pl.cdiv(B, Bt)
    B_pad = num_tiles * Bt
    if B_pad != B:
        xs = [jnp.pad(x, ((0, B_pad - B), (0, 0))) for x in xs]

    x_spec = pl.BlockSpec((Bt, E), lambda i: (i, 0))
    resident = lambda i: (0, 0, 0)  # same block every step -> weights stay VMEM-resident

    weight_bytes = (N * E * H + N * H * H) * 2 + N * 4 * H * 4 + 8
    cost = pl.CostEstimate(
        flops=2 * B_pad * N * (E * H + H * H),
        transcendentals=B_pad * N,                       # one rsqrt per row per encoder
        bytes_accessed=5 * B_pad * E * 4 + weight_bytes + B_pad * 4,
    )

    out = pl.pallas_call(
        _rl_kernel,
        out_shape=jax.ShapeDtypeStruct((B_pad, 1), jnp.float32),
        grid=(num_tiles,),
        in_specs=[pl.BlockSpec(memory_space=pltpu.MemorySpace.SMEM)]   # scale/bias scalars
                 + [x_spec] * N
                 + [pl.BlockSpec((N, E, H), resident),
                    pl.BlockSpec((N, 4, H), resident),
                    pl.BlockSpec((N, H, H), resident)],
        out_specs=pl.BlockSpec((Bt, 1), lambda i: (i, 0)),
        compiler_params=pltpu.CompilerParams(
            dimension_semantics=("parallel",),           # v7x: shard batch tiles across 2 TCs
            vmem_limit_bytes=32 * 1024 * 1024),
        cost_estimate=cost,
    )(params["scale_bias"], *xs, params["w1"], params["small"], params["w2"])

    return out[:B]


def init_params(key):
    """Deterministic parameter init matching the module's shapes.
    small[:, 0] = b1, small[:, 1] = gamma (=1), small[:, 2] = beta (=0), small[:, 3] = b2."""
    E, H, N = EMBEDDING_DIM, HIDDEN_DIM, NUM_ENCODERS
    k1, k2, k3, k4 = jax.random.split(key, 4)
    b1 = jax.random.normal(k2, (N, 1, H), jnp.float32) * 0.01
    b2 = jax.random.normal(k4, (N, 1, H), jnp.float32) * 0.01
    gamma = jnp.ones((N, 1, H), jnp.float32)
    beta = jnp.zeros((N, 1, H), jnp.float32)
    params = {
        # bf16 weight storage: halves the dominant HBM read; matmul accumulates in f32.
        "w1": (jax.random.normal(k1, (N, E, H), jnp.float32) * (1.0 / np.sqrt(E))
               ).astype(jnp.bfloat16),
        "w2": (jax.random.normal(k3, (N, H, H), jnp.float32) * (1.0 / np.sqrt(H))
               ).astype(jnp.bfloat16),
        "small": jnp.concatenate([b1, gamma, beta, b2], axis=1),   # (N, 4, H) f32
        "scale_bias": jnp.array([1.0, 0.0], jnp.float32),          # output_scale, output_bias
    }
    return params


def _reference_forward(params, frame, agent_id, state, task, action):
    """Pure-JAX reference mirroring the PyTorch forward (same bf16 weight / f32 acc policy)."""
    def enc(x, i):
        b1 = params["small"][i, 0]
        gamma = params["small"][i, 1]
        beta = params["small"][i, 2]
        b2 = params["small"][i, 3]
        h = jnp.dot(x.astype(jnp.bfloat16), params["w1"][i],
                    preferred_element_type=jnp.float32) + b1
        mu = jnp.mean(h, axis=-1, keepdims=True)
        var = jnp.mean((h - mu) ** 2, axis=-1, keepdims=True)
        h = (h - mu) * jax.lax.rsqrt(var + LN_EPS)
        h = h * gamma + beta
        h = jnp.maximum(h, 0.0)
        return jnp.dot(h.astype(jnp.bfloat16), params["w2"][i],
                       preferred_element_type=jnp.float32) + b2

    xs = [frame, agent_id, state, task, action]
    outs = [enc(x, i) for i, x in enumerate(xs)]              # each (B, 1, H)
    # torch order: frame * agent * state * action * task
    q = outs[0] * outs[1] * outs[2] * outs[4] * outs[3]
    q = q[:, 0, :]                                            # squeeze(1)
    q = jnp.mean(q, axis=1, keepdims=True)                    # (B, 1)
    return q * params["scale_bias"][0] + params["scale_bias"][1]


if __name__ == "__main__":
    B = 8
    key = jax.random.PRNGKey(0)
    kp, kf, ka, ks, kt, kc = jax.random.split(key, 6)

    params = init_params(kp)
    frame = jax.random.normal(kf, (B, 1, EMBEDDING_DIM), jnp.float32)
    agent_id = jax.random.normal(ka, (B, 1, EMBEDDING_DIM), jnp.float32)
    state = jax.random.normal(ks, (B, 1, EMBEDDING_DIM), jnp.float32)
    task = jax.random.normal(kt, (B, 1, EMBEDDING_DIM), jnp.float32)
    action = jax.random.normal(kc, (B, 1, EMBEDDING_DIM), jnp.float32)

    out = jax.jit(rl_model_forward)(params, frame, agent_id, state, task, action)
    out = jax.block_until_ready(out)
    assert out.shape == (B, 1)

    ref = _reference_forward(params, frame, agent_id, state, task, action)
    np.testing.assert_allclose(np.asarray(out), np.asarray(ref), rtol=5e-3, atol=2e-3)

    print("KERNEL_OK")
</pallas_src>

<mosaic_0001>
module attributes {stable_mosaic.version = 11 : i64} {
  func.func @_rl_kernel(%arg0: i32, %arg1: memref<2xf32, #tpu.memory_space<smem>>, %arg2: memref<8x768xf32, #tpu.memory_space<vmem>>, %arg3: memref<8x768xf32, #tpu.memory_space<vmem>>, %arg4: memref<8x768xf32, #tpu.memory_space<vmem>>, %arg5: memref<8x768xf32, #tpu.memory_space<vmem>>, %arg6: memref<8x768xf32, #tpu.memory_space<vmem>>, %arg7: memref<5x768x128xbf16, #tpu.memory_space<vmem>>, %arg8: memref<5x4x128xf32, #tpu.memory_space<vmem>>, %arg9: memref<5x128x128xbf16, #tpu.memory_space<vmem>>, %arg10: memref<8x1xf32, #tpu.memory_space<vmem>>) attributes {dimension_semantics = [#tpu.dimension_semantics<parallel>], iteration_bounds = array<i64: 1>, scalar_prefetch = 0 : i64, scratch_operands = 0 : i64, tpu.core_type = #tpu.core_type<tc>, window_params = [{transform_indices = @transform_0, window_bounds = array<i64: 2>}, {transform_indices = @transform_1, window_bounds = array<i64: 8, 768>}, {transform_indices = @transform_2, window_bounds = array<i64: 8, 768>}, {transform_indices = @transform_3, window_bounds = array<i64: 8, 768>}, {transform_indices = @transform_4, window_bounds = array<i64: 8, 768>}, {transform_indices = @transform_5, window_bounds = array<i64: 8, 768>}, {pipeline_mode = #tpu.pipeline_mode<synchronous>, transform_indices = @transform_6, window_bounds = array<i64: 5, 768, 128>}, {pipeline_mode = #tpu.pipeline_mode<synchronous>, transform_indices = @transform_7, window_bounds = array<i64: 5, 4, 128>}, {pipeline_mode = #tpu.pipeline_mode<synchronous>, transform_indices = @transform_8, window_bounds = array<i64: 5, 128, 128>}, {transform_indices = @transform_9, window_bounds = array<i64: 8, 1>}]} {
    %c0 = arith.constant 0 : index
    %0 = memref.load %arg1[%c0] : memref<2xf32, #tpu.memory_space<smem>>
    %cst = arith.constant 7.812500e-03 : f32
    %1 = arith.mulf %0, %cst : f32
    %c1 = arith.constant 1 : index
    %2 = memref.load %arg1[%c1] : memref<2xf32, #tpu.memory_space<smem>>
    %c0_0 = arith.constant 0 : index
    %c0_1 = arith.constant 0 : index
    %3 = vector.load %arg2[%c0_0, %c0_1] : memref<8x768xf32, #tpu.memory_space<vmem>>, vector<8x768xf32>
    %c0_2 = arith.constant 0 : index
    %c0_3 = arith.constant 0 : index
    %c0_4 = arith.constant 0 : index
    %4 = vector.load %arg7[%c0_2, %c0_3, %c0_4] : memref<5x768x128xbf16, #tpu.memory_space<vmem>>, vector<1x768x128xbf16>
    %5 = vector.shape_cast %4 : vector<1x768x128xbf16> to vector<768x128xbf16>
    %c0_5 = arith.constant 0 : index
    %c0_6 = arith.constant 0 : index
    %c0_7 = arith.constant 0 : index
    %6 = vector.load %arg8[%c0_5, %c0_6, %c0_7] : memref<5x4x128xf32, #tpu.memory_space<vmem>>, vector<1x4x128xf32>
    %7 = vector.shape_cast %6 : vector<1x4x128xf32> to vector<4x128xf32>
    %c0_8 = arith.constant 0 : index
    %c0_9 = arith.constant 0 : index
    %c0_10 = arith.constant 0 : index
    %8 = vector.load %arg9[%c0_8, %c0_9, %c0_10] : memref<5x128x128xbf16, #tpu.memory_space<vmem>>, vector<1x128x128xbf16>
    %9 = vector.shape_cast %8 : vector<1x128x128xbf16> to vector<128x128xbf16>
    %10 = vector.extract_strided_slice %7 {offsets = [0, 0], sizes = [1, 128], strides = [1, 1]} : vector<4x128xf32> to vector<1x128xf32>
    %11 = vector.extract_strided_slice %7 {offsets = [1, 0], sizes = [1, 128], strides = [1, 1]} : vector<4x128xf32> to vector<1x128xf32>
    %12 = vector.extract_strided_slice %7 {offsets = [2, 0], sizes = [1, 128], strides = [1, 1]} : vector<4x128xf32> to vector<1x128xf32>
    %13 = vector.extract_strided_slice %7 {offsets = [3, 0], sizes = [1, 128], strides = [1, 1]} : vector<4x128xf32> to vector<1x128xf32>
    %14 = arith.truncf %3 : vector<8x768xf32> to vector<8x768xbf16>
    %cst_11 = arith.constant dense<0.000000e+00> : vector<8x128xf32>
    %15 = tpu.matmul %14, %5, %cst_11 {dimension_numbers = #tpu.dot_dimension_numbers<[1], [0], [0], [1], [0, 0, 1, 1], [], []>} : vector<8x768xbf16>, vector<768x128xbf16>, vector<8x128xf32> -> vector<8x128xf32>
    %16 = vector.broadcast %10 : vector<1x128xf32> to vector<8x128xf32>
    %17 = arith.addf %15, %16 : vector<8x128xf32>
    %cst_12 = arith.constant dense<0.000000e+00> : vector<8xf32>
    %18 = vector.multi_reduction <add>, %17, %cst_12 [1] : vector<8x128xf32> to vector<8xf32>
    %19 = vector.shape_cast %18 : vector<8xf32> to vector<8x1xf32>
    %cst_13 = arith.constant 1.280000e+02 : f32
    %20 = vector.broadcast %cst_13 : f32 to vector<8x1xf32>
    %21 = arith.divf %19, %20 : vector<8x1xf32>
    %22 = vector.broadcast %21 : vector<8x1xf32> to vector<8x128xf32>
    %23 = arith.subf %17, %22 : vector<8x128xf32>
    %24 = vector.broadcast %21 : vector<8x1xf32> to vector<8x128xf32>
    %25 = arith.subf %17, %24 : vector<8x128xf32>
    %26 = arith.mulf %23, %25 : vector<8x128xf32>
    %cst_14 = arith.constant dense<0.000000e+00> : vector<8xf32>
    %27 = vector.multi_reduction <add>, %26, %cst_14 [1] : vector<8x128xf32> to vector<8xf32>
    %28 = vector.shape_cast %27 : vector<8xf32> to vector<8x1xf32>
    %cst_15 = arith.constant 1.280000e+02 : f32
    %29 = vector.broadcast %cst_15 : f32 to vector<8x1xf32>
    %30 = arith.divf %28, %29 : vector<8x1xf32>
    %31 = vector.broadcast %21 : vector<8x1xf32> to vector<8x128xf32>
    %32 = arith.subf %17, %31 : vector<8x128xf32>
    %cst_16 = arith.constant 9.99999974E-6 : f32
    %33 = vector.broadcast %cst_16 : f32 to vector<8x1xf32>
    %34 = arith.addf %30, %33 : vector<8x1xf32>
    %35 = math.rsqrt %34 : vector<8x1xf32>
    %36 = vector.broadcast %35 : vector<8x1xf32> to vector<8x128xf32>
    %37 = arith.mulf %32, %36 : vector<8x128xf32>
    %38 = vector.broadcast %11 : vector<1x128xf32> to vector<8x128xf32>
    %39 = arith.mulf %37, %38 : vector<8x128xf32>
    %40 = vector.broadcast %12 : vector<1x128xf32> to vector<8x128xf32>
    %41 = arith.addf %39, %40 : vector<8x128xf32>
    %cst_17 = arith.constant 0.000000e+00 : f32
    %42 = vector.broadcast %cst_17 : f32 to vector<8x128xf32>
    %43 = arith.maximumf %41, %42 : vector<8x128xf32>
    %44 = arith.truncf %43 : vector<8x128xf32> to vector<8x128xbf16>
    %cst_18 = arith.constant dense<0.000000e+00> : vector<8x128xf32>
    %45 = tpu.matmul %44, %9, %cst_18 {dimension_numbers = #tpu.dot_dimension_numbers<[1], [0], [0], [1], [0, 0, 1, 1], [], []>} : vector<8x128xbf16>, vector<128x128xbf16>, vector<8x128xf32> -> vector<8x128xf32>
    %46 = vector.broadcast %13 : vector<1x128xf32> to vector<8x128xf32>
    %47 = arith.addf %45, %46 : vector<8x128xf32>
    %c0_19 = arith.constant 0 : index
    %c0_20 = arith.constant 0 : index
    %48 = vector.load %arg3[%c0_19, %c0_20] : memref<8x768xf32, #tpu.memory_space<vmem>>, vector<8x768xf32>
    %c1_21 = arith.constant 1 : index
    %c0_22 = arith.constant 0 : index
    %c0_23 = arith.constant 0 : index
    %49 = vector.load %arg7[%c1_21, %c0_22, %c0_23] : memref<5x768x128xbf16, #tpu.memory_space<vmem>>, vector<1x768x128xbf16>
    %50 = vector.shape_cast %49 : vector<1x768x128xbf16> to vector<768x128xbf16>
    %c1_24 = arith.constant 1 : index
    %c0_25 = arith.constant 0 : index
    %c0_26 = arith.constant 0 : index
    %51 = vector.load %arg8[%c1_24, %c0_25, %c0_26] : memref<5x4x128xf32, #tpu.memory_space<vmem>>, vector<1x4x128xf32>
    %52 = vector.shape_cast %51 : vector<1x4x128xf32> to vector<4x128xf32>
    %c1_27 = arith.constant 1 : index
    %c0_28 = arith.constant 0 : index
    %c0_29 = arith.constant 0 : index
    %53 = vector.load %arg9[%c1_27, %c0_28, %c0_29] : memref<5x128x128xbf16, #tpu.memory_space<vmem>>, vector<1x128x128xbf16>
    %54 = vector.shape_cast %53 : vector<1x128x128xbf16> to vector<128x128xbf16>
    %55 = vector.extract_strided_slice %52 {offsets = [0, 0], sizes = [1, 128], strides = [1, 1]} : vector<4x128xf32> to vector<1x128xf32>
    %56 = vector.extract_strided_slice %52 {offsets = [1, 0], sizes = [1, 128], strides = [1, 1]} : vector<4x128xf32> to vector<1x128xf32>
    %57 = vector.extract_strided_slice %52 {offsets = [2, 0], sizes = [1, 128], strides = [1, 1]} : vector<4x128xf32> to vector<1x128xf32>
    %58 = vector.extract_strided_slice %52 {offsets = [3, 0], sizes = [1, 128], strides = [1, 1]} : vector<4x128xf32> to vector<1x128xf32>
    %59 = arith.truncf %48 : vector<8x768xf32> to vector<8x768xbf16>
    %cst_30 = arith.constant dense<0.000000e+00> : vector<8x128xf32>
    %60 = tpu.matmul %59, %50, %cst_30 {dimension_numbers = #tpu.dot_dimension_numbers<[1], [0], [0], [1], [0, 0, 1, 1], [], []>} : vector<8x768xbf16>, vector<768x128xbf16>, vector<8x128xf32> -> vector<8x128xf32>
    %61 = vector.broadcast %55 : vector<1x128xf32> to vector<8x128xf32>
    %62 = arith.addf %60, %61 : vector<8x128xf32>
    %cst_31 = arith.constant dense<0.000000e+00> : vector<8xf32>
    %63 = vector.multi_reduction <add>, %62, %cst_31 [1] : vector<8x128xf32> to vector<8xf32>
    %64 = vector.shape_cast %63 : vector<8xf32> to vector<8x1xf32>
    %cst_32 = arith.constant 1.280000e+02 : f32
    %65 = vector.broadcast %cst_32 : f32 to vector<8x1xf32>
    %66 = arith.divf %64, %65 : vector<8x1xf32>
    %67 = vector.broadcast %66 : vector<8x1xf32> to vector<8x128xf32>
    %68 = arith.subf %62, %67 : vector<8x128xf32>
    %69 = vector.broadcast %66 : vector<8x1xf32> to vector<8x128xf32>
    %70 = arith.subf %62, %69 : vector<8x128xf32>
    %71 = arith.mulf %68, %70 : vector<8x128xf32>
    %cst_33 = arith.constant dense<0.000000e+00> : vector<8xf32>
    %72 = vector.multi_reduction <add>, %71, %cst_33 [1] : vector<8x128xf32> to vector<8xf32>
    %73 = vector.shape_cast %72 : vector<8xf32> to vector<8x1xf32>
    %cst_34 = arith.constant 1.280000e+02 : f32
    %74 = vector.broadcast %cst_34 : f32 to vector<8x1xf32>
    %75 = arith.divf %73, %74 : vector<8x1xf32>
    %76 = vector.broadcast %66 : vector<8x1xf32> to vector<8x128xf32>
    %77 = arith.subf %62, %76 : vector<8x128xf32>
    %cst_35 = arith.constant 9.99999974E-6 : f32
    %78 = vector.broadcast %cst_35 : f32 to vector<8x1xf32>
    %79 = arith.addf %75, %78 : vector<8x1xf32>
    %80 = math.rsqrt %79 : vector<8x1xf32>
    %81 = vector.broadcast %80 : vector<8x1xf32> to vector<8x128xf32>
    %82 = arith.mulf %77, %81 : vector<8x128xf32>
    %83 = vector.broadcast %56 : vector<1x128xf32> to vector<8x128xf32>
    %84 = arith.mulf %82, %83 : vector<8x128xf32>
    %85 = vector.broadcast %57 : vector<1x128xf32> to vector<8x128xf32>
    %86 = arith.addf %84, %85 : vector<8x128xf32>
    %cst_36 = arith.constant 0.000000e+00 : f32
    %87 = vector.broadcast %cst_36 : f32 to vector<8x128xf32>
    %88 = arith.maximumf %86, %87 : vector<8x128xf32>
    %89 = arith.truncf %88 : vector<8x128xf32> to vector<8x128xbf16>
    %cst_37 = arith.constant dense<0.000000e+00> : vector<8x128xf32>
    %90 = tpu.matmul %89, %54, %cst_37 {dimension_numbers = #tpu.dot_dimension_numbers<[1], [0], [0], [1], [0, 0, 1, 1], [], []>} : vector<8x128xbf16>, vector<128x128xbf16>, vector<8x128xf32> -> vector<8x128xf32>
    %91 = vector.broadcast %58 : vector<1x128xf32> to vector<8x128xf32>
    %92 = arith.addf %90, %91 : vector<8x128xf32>
    %93 = arith.mulf %47, %92 : vector<8x128xf32>
    %c0_38 = arith.constant 0 : index
    %c0_39 = arith.constant 0 : index
    %94 = vector.load %arg4[%c0_38, %c0_39] : memref<8x768xf32, #tpu.memory_space<vmem>>, vector<8x768xf32>
    %c2 = arith.constant 2 : index
    %c0_40 = arith.constant 0 : index
    %c0_41 = arith.constant 0 : index
    %95 = vector.load %arg7[%c2, %c0_40, %c0_41] : memref<5x768x128xbf16, #tpu.memory_space<vmem>>, vector<1x768x128xbf16>
    %96 = vector.shape_cast %95 : vector<1x768x128xbf16> to vector<768x128xbf16>
    %c2_42 = arith.constant 2 : index
    %c0_43 = arith.constant 0 : index
    %c0_44 = arith.constant 0 : index
    %97 = vector.load %arg8[%c2_42, %c0_43, %c0_44] : memref<5x4x128xf32, #tpu.memory_space<vmem>>, vector<1x4x128xf32>
    %98 = vector.shape_cast %97 : vector<1x4x128xf32> to vector<4x128xf32>
    %c2_45 = arith.constant 2 : index
    %c0_46 = arith.constant 0 : index
    %c0_47 = arith.constant 0 : index
    %99 = vector.load %arg9[%c2_45, %c0_46, %c0_47] : memref<5x128x128xbf16, #tpu.memory_space<vmem>>, vector<1x128x128xbf16>
    %100 = vector.shape_cast %99 : vector<1x128x128xbf16> to vector<128x128xbf16>
    %101 = vector.extract_strided_slice %98 {offsets = [0, 0], sizes = [1, 128], strides = [1, 1]} : vector<4x128xf32> to vector<1x128xf32>
    %102 = vector.extract_strided_slice %98 {offsets = [1, 0], sizes = [1, 128], strides = [1, 1]} : vector<4x128xf32> to vector<1x128xf32>
    %103 = vector.extract_strided_slice %98 {offsets = [2, 0], sizes = [1, 128], strides = [1, 1]} : vector<4x128xf32> to vector<1x128xf32>
    %104 = vector.extract_strided_slice %98 {offsets = [3, 0], sizes = [1, 128], strides = [1, 1]} : vector<4x128xf32> to vector<1x128xf32>
    %105 = arith.truncf %94 : vector<8x768xf32> to vector<8x768xbf16>
    %cst_48 = arith.constant dense<0.000000e+00> : vector<8x128xf32>
    %106 = tpu.matmul %105, %96, %cst_48 {dimension_numbers = #tpu.dot_dimension_numbers<[1], [0], [0], [1], [0, 0, 1, 1], [], []>} : vector<8x768xbf16>, vector<768x128xbf16>, vector<8x128xf32> -> vector<8x128xf32>
    %107 = vector.broadcast %101 : vector<1x128xf32> to vector<8x128xf32>
    %108 = arith.addf %106, %107 : vector<8x128xf32>
    %cst_49 = arith.constant dense<0.000000e+00> : vector<8xf32>
    %109 = vector.multi_reduction <add>, %108, %cst_49 [1] : vector<8x128xf32> to vector<8xf32>
    %110 = vector.shape_cast %109 : vector<8xf32> to vector<8x1xf32>
    %cst_50 = arith.constant 1.280000e+02 : f32
    %111 = vector.broadcast %cst_50 : f32 to vector<8x1xf32>
    %112 = arith.divf %110, %111 : vector<8x1xf32>
    %113 = vector.broadcast %112 : vector<8x1xf32> to vector<8x128xf32>
    %114 = arith.subf %108, %113 : vector<8x128xf32>
    %115 = vector.broadcast %112 : vector<8x1xf32> to vector<8x128xf32>
    %116 = arith.subf %108, %115 : vector<8x128xf32>
    %117 = arith.mulf %114, %116 : vector<8x128xf32>
    %cst_51 = arith.constant dense<0.000000e+00> : vector<8xf32>
    %118 = vector.multi_reduction <add>, %117, %cst_51 [1] : vector<8x128xf32> to vector<8xf32>
    %119 = vector.shape_cast %118 : vector<8xf32> to vector<8x1xf32>
    %cst_52 = arith.constant 1.280000e+02 : f32
    %120 = vector.broadcast %cst_52 : f32 to vector<8x1xf32>
    %121 = arith.divf %119, %120 : vector<8x1xf32>
    %122 = vector.broadcast %112 : vector<8x1xf32> to vector<8x128xf32>
    %123 = arith.subf %108, %122 : vector<8x128xf32>
    %cst_53 = arith.constant 9.99999974E-6 : f32
    %124 = vector.broadcast %cst_53 : f32 to vector<8x1xf32>
    %125 = arith.addf %121, %124 : vector<8x1xf32>
    %126 = math.rsqrt %125 : vector<8x1xf32>
    %127 = vector.broadcast %126 : vector<8x1xf32> to vector<8x128xf32>
    %128 = arith.mulf %123, %127 : vector<8x128xf32>
    %129 = vector.broadcast %102 : vector<1x128xf32> to vector<8x128xf32>
    %130 = arith.mulf %128, %129 : vector<8x128xf32>
    %131 = vector.broadcast %103 : vector<1x128xf32> to vector<8x128xf32>
    %132 = arith.addf %130, %131 : vector<8x128xf32>
    %cst_54 = arith.constant 0.000000e+00 : f32
    %133 = vector.broadcast %cst_54 : f32 to vector<8x128xf32>
    %134 = arith.maximumf %132, %133 : vector<8x128xf32>
    %135 = arith.truncf %134 : vector<8x128xf32> to vector<8x128xbf16>
    %cst_55 = arith.constant dense<0.000000e+00> : vector<8x128xf32>
    %136 = tpu.matmul %135, %100, %cst_55 {dimension_numbers = #tpu.dot_dimension_numbers<[1], [0], [0], [1], [0, 0, 1, 1], [], []>} : vector<8x128xbf16>, vector<128x128xbf16>, vector<8x128xf32> -> vector<8x128xf32>
    %137 = vector.broadcast %104 : vector<1x128xf32> to vector<8x128xf32>
    %138 = arith.addf %136, %137 : vector<8x128xf32>
    %139 = arith.mulf %93, %138 : vector<8x128xf32>
    %c0_56 = arith.constant 0 : index
    %c0_57 = arith.constant 0 : index
    %140 = vector.load %arg6[%c0_56, %c0_57] : memref<8x768xf32, #tpu.memory_space<vmem>>, vector<8x768xf32>
    %c4 = arith.constant 4 : index
    %c0_58 = arith.constant 0 : index
    %c0_59 = arith.constant 0 : index
    %141 = vector.load %arg7[%c4, %c0_58, %c0_59] : memref<5x768x128xbf16, #tpu.memory_space<vmem>>, vector<1x768x128xbf16>
    %142 = vector.shape_cast %141 : vector<1x768x128xbf16> to vector<768x128xbf16>
    %c4_60 = arith.constant 4 : index
    %c0_61 = arith.constant 0 : index
    %c0_62 = arith.constant 0 : index
    %143 = vector.load %arg8[%c4_60, %c0_61, %c0_62] : memref<5x4x128xf32, #tpu.memory_space<vmem>>, vector<1x4x128xf32>
    %144 = vector.shape_cast %143 : vector<1x4x128xf32> to vector<4x128xf32>
    %c4_63 = arith.constant 4 : index
    %c0_64 = arith.constant 0 : index
    %c0_65 = arith.constant 0 : index
    %145 = vector.load %arg9[%c4_63, %c0_64, %c0_65] : memref<5x128x128xbf16, #tpu.memory_space<vmem>>, vector<1x128x128xbf16>
    %146 = vector.shape_cast %145 : vector<1x128x128xbf16> to vector<128x128xbf16>
    %147 = vector.extract_strided_slice %144 {offsets = [0, 0], sizes = [1, 128], strides = [1, 1]} : vector<4x128xf32> to vector<1x128xf32>
    %148 = vector.extract_strided_slice %144 {offsets = [1, 0], sizes = [1, 128], strides = [1, 1]} : vector<4x128xf32> to vector<1x128xf32>
    %149 = vector.extract_strided_slice %144 {offsets = [2, 0], sizes = [1, 128], strides = [1, 1]} : vector<4x128xf32> to vector<1x128xf32>
    %150 = vector.extract_strided_slice %144 {offsets = [3, 0], sizes = [1, 128], strides = [1, 1]} : vector<4x128xf32> to vector<1x128xf32>
    %151 = arith.truncf %140 : vector<8x768xf32> to vector<8x768xbf16>
    %cst_66 = arith.constant dense<0.000000e+00> : vector<8x128xf32>
    %152 = tpu.matmul %151, %142, %cst_66 {dimension_numbers = #tpu.dot_dimension_numbers<[1], [0], [0], [1], [0, 0, 1, 1], [], []>} : vector<8x768xbf16>, vector<768x128xbf16>, vector<8x128xf32> -> vector<8x128xf32>
    %153 = vector.broadcast %147 : vector<1x128xf32> to vector<8x128xf32>
    %154 = arith.addf %152, %153 : vector<8x128xf32>
    %cst_67 = arith.constant dense<0.000000e+00> : vector<8xf32>
    %155 = vector.multi_reduction <add>, %154, %cst_67 [1] : vector<8x128xf32> to vector<8xf32>
    %156 = vector.shape_cast %155 : vector<8xf32> to vector<8x1xf32>
    %cst_68 = arith.constant 1.280000e+02 : f32
    %157 = vector.broadcast %cst_68 : f32 to vector<8x1xf32>
    %158 = arith.divf %156, %157 : vector<8x1xf32>
    %159 = vector.broadcast %158 : vector<8x1xf32> to vector<8x128xf32>
    %160 = arith.subf %154, %159 : vector<8x128xf32>
    %161 = vector.broadcast %158 : vector<8x1xf32> to vector<8x128xf32>
    %162 = arith.subf %154, %161 : vector<8x128xf32>
    %163 = arith.mulf %160, %162 : vector<8x128xf32>
    %cst_69 = arith.constant dense<0.000000e+00> : vector<8xf32>
    %164 = vector.multi_reduction <add>, %163, %cst_69 [1] : vector<8x128xf32> to vector<8xf32>
    %165 = vector.shape_cast %164 : vector<8xf32> to vector<8x1xf32>
    %cst_70 = arith.constant 1.280000e+02 : f32
    %166 = vector.broadcast %cst_70 : f32 to vector<8x1xf32>
    %167 = arith.divf %165, %166 : vector<8x1xf32>
    %168 = vector.broadcast %158 : vector<8x1xf32> to vector<8x128xf32>
    %169 = arith.subf %154, %168 : vector<8x128xf32>
    %cst_71 = arith.constant 9.99999974E-6 : f32
    %170 = vector.broadcast %cst_71 : f32 to vector<8x1xf32>
    %171 = arith.addf %167, %170 : vector<8x1xf32>
    %172 = math.rsqrt %171 : vector<8x1xf32>
    %173 = vector.broadcast %172 : vector<8x1xf32> to vector<8x128xf32>
    %174 = arith.mulf %169, %173 : vector<8x128xf32>
    %175 = vector.broadcast %148 : vector<1x128xf32> to vector<8x128xf32>
    %176 = arith.mulf %174, %175 : vector<8x128xf32>
    %177 = vector.broadcast %149 : vector<1x128xf32> to vector<8x128xf32>
    %178 = arith.addf %176, %177 : vector<8x128xf32>
    %cst_72 = arith.constant 0.000000e+00 : f32
    %179 = vector.broadcast %cst_72 : f32 to vector<8x128xf32>
    %180 = arith.maximumf %178, %179 : vector<8x128xf32>
    %181 = arith.truncf %180 : vector<8x128xf32> to vector<8x128xbf16>
    %cst_73 = arith.constant dense<0.000000e+00> : vector<8x128xf32>
    %182 = tpu.matmul %181, %146, %cst_73 {dimension_numbers = #tpu.dot_dimension_numbers<[1], [0], [0], [1], [0, 0, 1, 1], [], []>} : vector<8x128xbf16>, vector<128x128xbf16>, vector<8x128xf32> -> vector<8x128xf32>
    %183 = vector.broadcast %150 : vector<1x128xf32> to vector<8x128xf32>
    %184 = arith.addf %182, %183 : vector<8x128xf32>
    %185 = arith.mulf %139, %184 : vector<8x128xf32>
    %c0_74 = arith.constant 0 : index
    %c0_75 = arith.constant 0 : index
    %186 = vector.load %arg5[%c0_74, %c0_75] : memref<8x768xf32, #tpu.memory_space<vmem>>, vector<8x768xf32>
    %c3 = arith.constant 3 : index
    %c0_76 = arith.constant 0 : index
    %c0_77 = arith.constant 0 : index
    %187 = vector.load %arg7[%c3, %c0_76, %c0_77] : memref<5x768x128xbf16, #tpu.memory_space<vmem>>, vector<1x768x128xbf16>
    %188 = vector.shape_cast %187 : vector<1x768x128xbf16> to vector<768x128xbf16>
    %c3_78 = arith.constant 3 : index
    %c0_79 = arith.constant 0 : index
    %c0_80 = arith.constant 0 : index
    %189 = vector.load %arg8[%c3_78, %c0_79, %c0_80] : memref<5x4x128xf32, #tpu.memory_space<vmem>>, vector<1x4x128xf32>
    %190 = vector.shape_cast %189 : vector<1x4x128xf32> to vector<4x128xf32>
    %c3_81 = arith.constant 3 : index
    %c0_82 = arith.constant 0 : index
    %c0_83 = arith.constant 0 : index
    %191 = vector.load %arg9[%c3_81, %c0_82, %c0_83] : memref<5x128x128xbf16, #tpu.memory_space<vmem>>, vector<1x128x128xbf16>
    %192 = vector.shape_cast %191 : vector<1x128x128xbf16> to vector<128x128xbf16>
    %193 = vector.extract_strided_slice %190 {offsets = [0, 0], sizes = [1, 128], strides = [1, 1]} : vector<4x128xf32> to vector<1x128xf32>
    %194 = vector.extract_strided_slice %190 {offsets = [1, 0], sizes = [1, 128], strides = [1, 1]} : vector<4x128xf32> to vector<1x128xf32>
    %195 = vector.extract_strided_slice %190 {offsets = [2, 0], sizes = [1, 128], strides = [1, 1]} : vector<4x128xf32> to vector<1x128xf32>
    %196 = vector.extract_strided_slice %190 {offsets = [3, 0], sizes = [1, 128], strides = [1, 1]} : vector<4x128xf32> to vector<1x128xf32>
    %197 = arith.truncf %186 : vector<8x768xf32> to vector<8x768xbf16>
    %cst_84 = arith.constant dense<0.000000e+00> : vector<8x128xf32>
    %198 = tpu.matmul %197, %188, %cst_84 {dimension_numbers = #tpu.dot_dimension_numbers<[1], [0], [0], [1], [0, 0, 1, 1], [], []>} : vector<8x768xbf16>, vector<768x128xbf16>, vector<8x128xf32> -> vector<8x128xf32>
    %199 = vector.broadcast %193 : vector<1x128xf32> to vector<8x128xf32>
    %200 = arith.addf %198, %199 : vector<8x128xf32>
    %cst_85 = arith.constant dense<0.000000e+00> : vector<8xf32>
    %201 = vector.multi_reduction <add>, %200, %cst_85 [1] : vector<8x128xf32> to vector<8xf32>
    %202 = vector.shape_cast %201 : vector<8xf32> to vector<8x1xf32>
    %cst_86 = arith.constant 1.280000e+02 : f32
    %203 = vector.broadcast %cst_86 : f32 to vector<8x1xf32>
    %204 = arith.divf %202, %203 : vector<8x1xf32>
    %205 = vector.broadcast %204 : vector<8x1xf32> to vector<8x128xf32>
    %206 = arith.subf %200, %205 : vector<8x128xf32>
    %207 = vector.broadcast %204 : vector<8x1xf32> to vector<8x128xf32>
    %208 = arith.subf %200, %207 : vector<8x128xf32>
    %209 = arith.mulf %206, %208 : vector<8x128xf32>
    %cst_87 = arith.constant dense<0.000000e+00> : vector<8xf32>
    %210 = vector.multi_reduction <add>, %209, %cst_87 [1] : vector<8x128xf32> to vector<8xf32>
    %211 = vector.shape_cast %210 : vector<8xf32> to vector<8x1xf32>
    %cst_88 = arith.constant 1.280000e+02 : f32
    %212 = vector.broadcast %cst_88 : f32 to vector<8x1xf32>
    %213 = arith.divf %211, %212 : vector<8x1xf32>
    %214 = vector.broadcast %204 : vector<8x1xf32> to vector<8x128xf32>
    %215 = arith.subf %200, %214 : vector<8x128xf32>
    %cst_89 = arith.constant 9.99999974E-6 : f32
    %216 = vector.broadcast %cst_89 : f32 to vector<8x1xf32>
    %217 = arith.addf %213, %216 : vector<8x1xf32>
    %218 = math.rsqrt %217 : vector<8x1xf32>
    %219 = vector.broadcast %218 : vector<8x1xf32> to vector<8x128xf32>
    %220 = arith.mulf %215, %219 : vector<8x128xf32>
    %221 = vector.broadcast %194 : vector<1x128xf32> to vector<8x128xf32>
    %222 = arith.mulf %220, %221 : vector<8x128xf32>
    %223 = vector.broadcast %195 : vector<1x128xf32> to vector<8x128xf32>
    %224 = arith.addf %222, %223 : vector<8x128xf32>
    %cst_90 = arith.constant 0.000000e+00 : f32
    %225 = vector.broadcast %cst_90 : f32 to vector<8x128xf32>
    %226 = arith.maximumf %224, %225 : vector<8x128xf32>
    %227 = arith.truncf %226 : vector<8x128xf32> to vector<8x128xbf16>
    %cst_91 = arith.constant dense<0.000000e+00> : vector<8x128xf32>
    %228 = tpu.matmul %227, %192, %cst_91 {dimension_numbers = #tpu.dot_dimension_numbers<[1], [0], [0], [1], [0, 0, 1, 1], [], []>} : vector<8x128xbf16>, vector<128x128xbf16>, vector<8x128xf32> -> vector<8x128xf32>
    %229 = vector.broadcast %196 : vector<1x128xf32> to vector<8x128xf32>
    %230 = arith.addf %228, %229 : vector<8x128xf32>
    %231 = arith.mulf %185, %230 : vector<8x128xf32>
    %cst_92 = arith.constant dense<0.000000e+00> : vector<8xf32>
    %232 = vector.multi_reduction <add>, %231, %cst_92 [1] : vector<8x128xf32> to vector<8xf32>
    %233 = vector.shape_cast %232 : vector<8xf32> to vector<8x1xf32>
    %234 = vector.broadcast %1 : f32 to vector<8x1xf32>
    %235 = arith.mulf %233, %234 : vector<8x1xf32>
    %236 = vector.broadcast %2 : f32 to vector<8x1xf32>
    %237 = arith.addf %235, %236 : vector<8x1xf32>
    %c0_93 = arith.constant 0 : index
    %c0_94 = arith.constant 0 : index
    %238 = vector.load %arg10[%c0_93, %c0_94] : memref<8x1xf32, #tpu.memory_space<vmem>>, vector<8x1xf32>
    tpu.vector_store %arg10[%c0_93, %c0_94], %237 {strides = array<i32>} : memref<8x1xf32, #tpu.memory_space<vmem>>, vector<8x1xf32>,
    return
  }
  func.func @transform_0(%arg0: i32) -> i32 {
    %c0_i32 = arith.constant 0 : i32
    %c0_i32_0 = arith.constant 0 : i32
    return %c0_i32 : i32
  }
  func.func @transform_1(%arg0: i32) -> (i32, i32) {
    %c0_i32 = arith.constant 0 : i32
    %c0_i32_0 = arith.constant 0 : i32
    return %arg0, %c0_i32 : i32, i32
  }
  func.func @transform_2(%arg0: i32) -> (i32, i32) {
    %c0_i32 = arith.constant 0 : i32
    %c0_i32_0 = arith.constant 0 : i32
    return %arg0, %c0_i32 : i32, i32
  }
  func.func @transform_3(%arg0: i32) -> (i32, i32) {
    %c0_i32 = arith.constant 0 : i32
    %c0_i32_0 = arith.constant 0 : i32
    return %arg0, %c0_i32 : i32, i32
  }
  func.func @transform_4(%arg0: i32) -> (i32, i32) {
    %c0_i32 = arith.constant 0 : i32
    %c0_i32_0 = arith.constant 0 : i32
    return %arg0, %c0_i32 : i32, i32
  }
  func.func @transform_5(%arg0: i32) -> (i32, i32) {
    %c0_i32 = arith.constant 0 : i32
    %c0_i32_0 = arith.constant 0 : i32
    return %arg0, %c0_i32 : i32, i32
  }
  func.func @transform_6(%arg0: i32) -> (i32, i32, i32) {
    %c0_i32 = arith.constant 0 : i32
    %c0_i32_0 = arith.constant 0 : i32
    %c0_i32_1 = arith.constant 0 : i32
    %c0_i32_2 = arith.constant 0 : i32
    return %c0_i32, %c0_i32_0, %c0_i32_1 : i32, i32, i32
  }
  func.func @transform_7(%arg0: i32) -> (i32, i32, i32) {
    %c0_i32 = arith.constant 0 : i32
    %c0_i32_0 = arith.constant 0 : i32
    %c0_i32_1 = arith.constant 0 : i32
    %c0_i32_2 = arith.constant 0 : i32
    return %c0_i32, %c0_i32_0, %c0_i32_1 : i32, i32, i32
  }
  func.func @transform_8(%arg0: i32) -> (i32, i32, i32) {
    %c0_i32 = arith.constant 0 : i32
    %c0_i32_0 = arith.constant 0 : i32
    %c0_i32_1 = arith.constant 0 : i32
    %c0_i32_2 = arith.constant 0 : i32
    return %c0_i32, %c0_i32_0, %c0_i32_1 : i32, i32, i32
  }
  func.func @transform_9(%arg0: i32) -> (i32, i32) {
    %c0_i32 = arith.constant 0 : i32
    %c0_i32_0 = arith.constant 0 : i32
    return %arg0, %c0_i32 : i32, i32
  }
}

</mosaic_0001>

<llo_original>
// kernel: rl_model_forward.1
$region0: #{rl_model_forward.1}
  #allocation0 [shape = 'u32[]', space=smem, size = 0x4, offset = 0x4, fixed_abs, tag = 'smem constant byte address 0x4 - core index']
  #allocation1 [shape = 'u32[144,128]{1,0:T(1,128)}', space=vmem, size = 0x12000, scoped, tag = 'internal scratch']
  %s0 = inlined_call_operand.vmem [shape: f32[2], index: 0, kind: input, shape index: {}]
  %s1 = inlined_call_operand.vmem [shape: f32[8,768], index: 1, kind: input, shape index: {}]
  %s2 = inlined_call_operand.vmem [shape: f32[8,768], index: 2, kind: input, shape index: {}]
  %s3 = inlined_call_operand.vmem [shape: f32[8,768], index: 3, kind: input, shape index: {}]
  %s4 = inlined_call_operand.vmem [shape: f32[8,768], index: 4, kind: input, shape index: {}]
  %s5 = inlined_call_operand.vmem [shape: f32[8,768], index: 5, kind: input, shape index: {}]
  %s6 = inlined_call_operand.hbm [shape: bf16[5,768,128], index: 6, kind: input, shape index: {}]
  %s7 = inlined_call_operand.vmem [shape: f32[5,4,128], index: 7, kind: input, shape index: {}]
  %s8 = inlined_call_operand.vmem [shape: bf16[5,128,128], index: 8, kind: input, shape index: {}]
  %s9 = inlined_call_operand.vmem [shape: f32[8,1], index: 9, kind: output, shape index: {}]
  %s10 = sld [smem:[#allocation0]]
  $region54: #{rl_model_forward.1} parent=0
    _
  %s12 = ssub.s32 1, %s10
  %s13 = scalar_select 0, %s12, %s10
  $region1: #{rl_model_forward.1} parent=0
    #allocation2 [shape = 'u8[512]{0}', space=smem, size = 0x200, scoped, tag = 'input window, operand 0, single buffered']
    #allocation3 [shape = 's32[1]{0}', space=sflag, size = 0x4, scoped, tag = 'scoped memory for rl_model_forward.1']
    #allocation4 [shape = 's32[1]{0}', space=sflag, size = 0x4, scoped, tag = 'scoped memory for rl_model_forward.1']
    #allocation5 [shape = 'u8[983040]{0}', space=vmem, size = 0xf0000, scoped, tag = 'input window, operand 6, single buffered']
    %14 = vsyncpa [#allocation4], 0
    %15 = vsyncpa [#allocation3], 0
    // Predicated region
    $region2: #{rl_model_forward.1} parent=1 // pred_check
      _
    $region3: #{rl_model_forward.1} parent=1 // pred_check_branch
      %17 = sbr.rel (0) target = $region5
    $region4: #{rl_model_forward.1} parent=1 // pred_region
      %s19 = ssub.s32 16, 16
      %20 = vsyncadd [#allocation4], %s19
      %s22 = sshll.u32 %s0, 4
      %s23 = int_to_ptr.vmem [resolvable:$true] %s22
      %25 = dma.vmem_to_smem %s23, 16, [#allocation2], [#allocation4]
    $region5: #{rl_model_forward.1} parent=1 // pred_fallthru
      _
    // Predicated region
    $region6: #{rl_model_forward.1} parent=1 // pred_check
      _
    $region7: #{rl_model_forward.1} parent=1 // pred_check_branch
      %27 = sbr.rel (0) target = $region9
    $region8: #{rl_model_forward.1} parent=1 // pred_region
      _
    $region9: #{rl_model_forward.1} parent=1 // pred_fallthru
      _
    // Predicated region
    $region10: #{rl_model_forward.1} parent=1 // pred_check
      _
    $region11: #{rl_model_forward.1} parent=1 // pred_check_branch
      %29 = sbr.rel (0) target = $region13
    $region12: #{rl_model_forward.1} parent=1 // pred_region
      _
    $region13: #{rl_model_forward.1} parent=1 // pred_fallthru
      _
    // Predicated region
    $region14: #{rl_model_forward.1} parent=1 // pred_check
      _
    $region15: #{rl_model_forward.1} parent=1 // pred_check_branch
      %31 = sbr.rel (0) target = $region17
    $region16: #{rl_model_forward.1} parent=1 // pred_region
      _
    $region17: #{rl_model_forward.1} parent=1 // pred_fallthru
      _
    // Predicated region
    $region18: #{rl_model_forward.1} parent=1 // pred_check
      _
    $region19: #{rl_model_forward.1} parent=1 // pred_check_branch
      %33 = sbr.rel (0) target = $region21
    $region20: #{rl_model_forward.1} parent=1 // pred_region
      _
    $region21: #{rl_model_forward.1} parent=1 // pred_fallthru
      _
    // Predicated region
    $region22: #{rl_model_forward.1} parent=1 // pred_check
      _
    $region23: #{rl_model_forward.1} parent=1 // pred_check_branch
      %35 = sbr.rel (0) target = $region25
    $region24: #{rl_model_forward.1} parent=1 // pred_region
      _
    $region25: #{rl_model_forward.1} parent=1 // pred_fallthru
      _
    // Predicated region
    $region26: #{rl_model_forward.1} parent=1 // pred_check
      _
    $region27: #{rl_model_forward.1} parent=1 // pred_check_branch
      %37 = sbr.rel (0) target = $region29
    $region28: #{rl_model_forward.1} parent=1 // pred_region
      %s39 = ssub.s32 30720, 30720
      %40 = vsyncadd [#allocation3], %s39
      %s41 = sshll.u32 [#allocation5], 4
      %s42 = int_to_ptr.vmem [resolvable:$true] %s41
      %47 = dma.hbm_to_vmem [thread:$0]  %s6, 30720, %s42, [#allocation3], 64, 64, 4
    $region29: #{rl_model_forward.1} parent=1 // pred_fallthru
      _
    // Predicated region
    $region30: #{rl_model_forward.1} parent=1 // pred_check
      _
    $region31: #{rl_model_forward.1} parent=1 // pred_check_branch
      %49 = sbr.rel (0) target = $region33
    $region32: #{rl_model_forward.1} parent=1 // pred_region
      _
    $region33: #{rl_model_forward.1} parent=1 // pred_fallthru
      _
    // Predicated region
    $region34: #{rl_model_forward.1} parent=1 // pred_check
      _
    $region35: #{rl_model_forward.1} parent=1 // pred_check_branch
      %51 = sbr.rel (0) target = $region37
    $region36: #{rl_model_forward.1} parent=1 // pred_region
      _
    $region37: #{rl_model_forward.1} parent=1 // pred_fallthru
      _
    // Predicated region
    $region38: #{rl_model_forward.1} parent=1 // pred_check
      _
    $region39: #{rl_model_forward.1} parent=1 // pred_check_branch
      %53 = sbr.rel (0) target = $region41
    $region40: #{rl_model_forward.1} parent=1 // pred_region
      %54 = dma.done [#allocation4], 16
    $region41: #{rl_model_forward.1} parent=1 // pred_fallthru
      _
    // Predicated region
    $region42: #{rl_model_forward.1} parent=1 // pred_check
      _
    $region43: #{rl_model_forward.1} parent=1 // pred_check_branch
      %56 = sbr.rel (0) target = $region45
    $region44: #{rl_model_forward.1} parent=1 // pred_region
      %57 = dma.done [#allocation3], 30720
    $region45: #{rl_model_forward.1} parent=1 // pred_fallthru
      _
    %58 = sfence
    %s60 = sld [smem:[#allocation2]]
    %s61 = smul.f32 %s60, 0.0078125
    %s62 = sld [smem:[#allocation2 + $0x1]]
    %v63 = vld [vmem:[%s1] sm:$0xff]
    %v64 = vld [vmem:[%s1 + $0x8] sm:$0xff]
    %v65 = vld [vmem:[%s1 + $0x10] sm:$0xff]
    %v66 = vld [vmem:[%s1 + $0x18] sm:$0xff]
    %v67 = vld [vmem:[%s1 + $0x20] sm:$0xff]
    %v68 = vld [vmem:[%s1 + $0x28] sm:$0xff]
    %v69 = vld [vmem:[#allocation5] sm:$0xf]
    %v70 = vld [vmem:[#allocation5 + $0x4] sm:$0xf]
    %v71 = vld [vmem:[#allocation5 + $0x8] sm:$0xf]
    %v72 = vld [vmem:[#allocation5 + $0xc] sm:$0xf]
    %v73 = vld [vmem:[#allocation5 + $0x10] sm:$0xf]
    %v74 = vld [vmem:[#allocation5 + $0x14] sm:$0xf]
    %v75 = vld [vmem:[#allocation5 + $0x18] sm:$0xf]
    %v76 = vld [vmem:[#allocation5 + $0x1c] sm:$0xf]
    %v77 = vld [vmem:[#allocation5 + $0x20] sm:$0xf]
    %v78 = vld [vmem:[#allocation5 + $0x24] sm:$0xf]
    %v79 = vld [vmem:[#allocation5 + $0x28] sm:$0xf]
    %v80 = vld [vmem:[#allocation5 + $0x2c] sm:$0xf]
    %v81 = vld [vmem:[#allocation5 + $0x30] sm:$0xf]
    %v82 = vld [vmem:[#allocation5 + $0x34] sm:$0xf]
    %v83 = vld [vmem:[#allocation5 + $0x38] sm:$0xf]
    %v84 = vld [vmem:[#allocation5 + $0x3c] sm:$0xf]
    %v85 = vld [vmem:[#allocation5 + $0x40] sm:$0xf]
    %v86 = vld [vmem:[#allocation5 + $0x44] sm:$0xf]
    %v87 = vld [vmem:[#allocation5 + $0x48] sm:$0xf]
    %v88 = vld [vmem:[#allocation5 + $0x4c] sm:$0xf]
    %v89 = vld [vmem:[#allocation5 + $0x50] sm:$0xf]
    %v90 = vld [vmem:[#allocation5 + $0x54] sm:$0xf]
    %v91 = vld [vmem:[#allocation5 + $0x58] sm:$0xf]
    %v92 = vld [vmem:[#allocation5 + $0x5c] sm:$0xf]
    %v93 = vld [vmem:[#allocation5 + $0x60] sm:$0xf]
    %v94 = vld [vmem:[#allocation5 + $0x64] sm:$0xf]
    %v95 = vld [vmem:[#allocation5 + $0x68] sm:$0xf]
    %v96 = vld [vmem:[#allocation5 + $0x6c] sm:$0xf]
    %v97 = vld [vmem:[#allocation5 + $0x70] sm:$0xf]
    %v98 = vld [vmem:[#allocation5 + $0x74] sm:$0xf]
    %v99 = vld [vmem:[#allocation5 + $0x78] sm:$0xf]
    %v100 = vld [vmem:[#allocation5 + $0x7c] sm:$0xf]
    %v101 = vld [vmem:[#allocation5 + $0x80] sm:$0xf]
    %v102 = vld [vmem:[#allocation5 + $0x84] sm:$0xf]
    %v103 = vld [vmem:[#allocation5 + $0x88] sm:$0xf]
    %v104 = vld [vmem:[#allocation5 + $0x8c] sm:$0xf]
    %v105 = vld [vmem:[#allocation5 + $0x90] sm:$0xf]
    %v106 = vld [vmem:[#allocation5 + $0x94] sm:$0xf]
    %v107 = vld [vmem:[#allocation5 + $0x98] sm:$0xf]
    %v108 = vld [vmem:[#allocation5 + $0x9c] sm:$0xf]
    %v109 = vld [vmem:[#allocation5 + $0xa0] sm:$0xf]
    %v110 = vld [vmem:[#allocation5 + $0xa4] sm:$0xf]
    %v111 = vld [vmem:[#allocation5 + $0xa8] sm:$0xf]
    %v112 = vld [vmem:[#allocation5 + $0xac] sm:$0xf]
    %v113 = vld [vmem:[#allocation5 + $0xb0] sm:$0xf]
    %v114 = vld [vmem:[#allocation5 + $0xb4] sm:$0xf]
    %v115 = vld [vmem:[#allocation5 + $0xb8] sm:$0xf]
    %v116 = vld [vmem:[#allocation5 + $0xbc] sm:$0xf]
    %v117 = vld [vmem:[#allocation5 + $0xc0] sm:$0xf]
    %v118 = vld [vmem:[#allocation5 + $0xc4] sm:$0xf]
    %v119 = vld [vmem:[#allocation5 + $0xc8] sm:$0xf]
    %v120 = vld [vmem:[#allocation5 + $0xcc] sm:$0xf]
    %v121 = vld [vmem:[#allocation5 + $0xd0] sm:$0xf]
    %v122 = vld [vmem:[#allocation5 + $0xd4] sm:$0xf]
    %v123 = vld [vmem:[#allocation5 + $0xd8] sm:$0xf]
    %v124 = vld [vmem:[#allocation5 + $0xdc] sm:$0xf]
    %v125 = vld [vmem:[#allocation5 + $0xe0] sm:$0xf]
    %v126 = vld [vmem:[#allocation5 + $0xe4] sm:$0xf]
    %v127 = vld [vmem:[#allocation5 + $0xe8] sm:$0xf]
    %v128 = vld [vmem:[#allocation5 + $0xec] sm:$0xf]
    %v129 = vld [vmem:[#allocation5 + $0xf0] sm:$0xf]
    %v130 = vld [vmem:[#allocation5 + $0xf4] sm:$0xf]
    %v131 = vld [vmem:[#allocation5 + $0xf8] sm:$0xf]
    %v132 = vld [vmem:[#allocation5 + $0xfc] sm:$0xf]
    %v133 = vld [vmem:[#allocation5 + $0x100] sm:$0xf]
    %v134 = vld [vmem:[#allocation5 + $0x104] sm:$0xf]
    %v135 = vld [vmem:[#allocation5 + $0x108] sm:$0xf]
    %v136 = vld [vmem:[#allocation5 + $0x10c] sm:$0xf]
    %v137 = vld [vmem:[#allocation5 + $0x110] sm:$0xf]
    %v138 = vld [vmem:[#allocation5 + $0x114] sm:$0xf]
    %v139 = vld [vmem:[#allocation5 + $0x118] sm:$0xf]
    %v140 = vld [vmem:[#allocation5 + $0x11c] sm:$0xf]
    %v141 = vld [vmem:[#allocation5 + $0x120] sm:$0xf]
    %v142 = vld [vmem:[#allocation5 + $0x124] sm:$0xf]
    %v143 = vld [vmem:[#allocation5 + $0x128] sm:$0xf]
    %v144 = vld [vmem:[#allocation5 + $0x12c] sm:$0xf]
    %v145 = vld [vmem:[#allocation5 + $0x130] sm:$0xf]
    %v146 = vld [vmem:[#allocation5 + $0x134] sm:$0xf]
    %v147 = vld [vmem:[#allocation5 + $0x138] sm:$0xf]
    %v148 = vld [vmem:[#allocation5 + $0x13c] sm:$0xf]
    %v149 = vld [vmem:[#allocation5 + $0x140] sm:$0xf]
    %v150 = vld [vmem:[#allocation5 + $0x144] sm:$0xf]
    %v151 = vld [vmem:[#allocation5 + $0x148] sm:$0xf]
    %v152 = vld [vmem:[#allocation5 + $0x14c] sm:$0xf]
    %v153 = vld [vmem:[#allocation5 + $0x150] sm:$0xf]
    %v154 = vld [vmem:[#allocation5 + $0x154] sm:$0xf]
    %v155 = vld [vmem:[#allocation5 + $0x158] sm:$0xf]
    %v156 = vld [vmem:[#allocation5 + $0x15c] sm:$0xf]
    %v157 = vld [vmem:[#allocation5 + $0x160] sm:$0xf]
    %v158 = vld [vmem:[#allocation5 + $0x164] sm:$0xf]
    %v159 = vld [vmem:[#allocation5 + $0x168] sm:$0xf]
    %v160 = vld [vmem:[#allocation5 + $0x16c] sm:$0xf]
    %v161 = vld [vmem:[#allocation5 + $0x170] sm:$0xf]
    %v162 = vld [vmem:[#allocation5 + $0x174] sm:$0xf]
    %v163 = vld [vmem:[#allocation5 + $0x178] sm:$0xf]
    %v164 = vld [vmem:[#allocation5 + $0x17c] sm:$0xf]
    %v165 = vld [vmem:[%s7] sm:$0xf]
    %v166 = vld [vmem:[%s8] sm:$0xf]
    %v167 = vld [vmem:[%s8 + $0x4] sm:$0xf]
    %v168 = vld [vmem:[%s8 + $0x8] sm:$0xf]
    %v169 = vld [vmem:[%s8 + $0xc] sm:$0xf]
    %v170 = vld [vmem:[%s8 + $0x10] sm:$0xf]
    %v171 = vld [vmem:[%s8 + $0x14] sm:$0xf]
    %v172 = vld [vmem:[%s8 + $0x18] sm:$0xf]
    %v173 = vld [vmem:[%s8 + $0x1c] sm:$0xf]
    %v174 = vld [vmem:[%s8 + $0x20] sm:$0xf]
    %v175 = vld [vmem:[%s8 + $0x24] sm:$0xf]
    %v176 = vld [vmem:[%s8 + $0x28] sm:$0xf]
    %v177 = vld [vmem:[%s8 + $0x2c] sm:$0xf]
    %v178 = vld [vmem:[%s8 + $0x30] sm:$0xf]
    %v179 = vld [vmem:[%s8 + $0x34] sm:$0xf]
    %v180 = vld [vmem:[%s8 + $0x38] sm:$0xf]
    %v181 = vld [vmem:[%s8 + $0x3c] sm:$0xf]
    %v182 = vpack.c.bf16 %v63, %v63
    %v183 = vpack.c.bf16 %v64, %v64
    %v184 = vpack.c.bf16 %v65, %v65
    %v185 = vpack.c.bf16 %v66, %v66
    %v186 = vpack.c.bf16 %v67, %v67
    %v187 = vpack.c.bf16 %v68, %v68
    %v188 = vlaneseq
    %v189 = vshrl.u32 %v188, 7
    %v190 = vsub.s32 0, %v189
    %v191 = vrot.slane %v165, %v190
    %v288 = vunpack.c.l.b16 %v69
    %v289 = vunpack.c.l.b16 %v70
    %v290 = vunpack.c.l.b16 %v71
    %v291 = vunpack.c.l.b16 %v72
    %v292 = vunpack.c.l.b16 %v73
    %v293 = vunpack.c.l.b16 %v74
    %v294 = vunpack.c.l.b16 %v75
    %v295 = vunpack.c.l.b16 %v76
    %v296 = vunpack.c.l.b16 %v77
    %v297 = vunpack.c.l.b16 %v78
    %v298 = vunpack.c.l.b16 %v79
    %v299 = vunpack.c.l.b16 %v80
    %v300 = vunpack.c.l.b16 %v81
    %v301 = vunpack.c.l.b16 %v82
    %v302 = vunpack.c.l.b16 %v83
    %v303 = vunpack.c.l.b16 %v84
    %v304 = vunpack.c.l.b16 %v85
    %v305 = vunpack.c.l.b16 %v86
    %v306 = vunpack.c.l.b16 %v87
    %v307 = vunpack.c.l.b16 %v88
    %v308 = vunpack.c.l.b16 %v89
    %v309 = vunpack.c.l.b16 %v90
    %v310 = vunpack.c.l.b16 %v91
    %v311 = vunpack.c.l.b16 %v92
    %v312 = vunpack.c.l.b16 %v93
    %v313 = vunpack.c.l.b16 %v94
    %v314 = vunpack.c.l.b16 %v95
    %v315 = vunpack.c.l.b16 %v96
    %v316 = vunpack.c.l.b16 %v97
    %v317 = vunpack.c.l.b16 %v98
    %v318 = vunpack.c.l.b16 %v99
    %v319 = vunpack.c.l.b16 %v100
    %v320 = vunpack.c.l.b16 %v101
    %v321 = vunpack.c.l.b16 %v102
    %v322 = vunpack.c.l.b16 %v103
    %v323 = vunpack.c.l.b16 %v104
    %v324 = vunpack.c.l.b16 %v105
    %v325 = vunpack.c.l.b16 %v106
    %v326 = vunpack.c.l.b16 %v107
    %v327 = vunpack.c.l.b16 %v108
    %v328 = vunpack.c.l.b16 %v109
    %v329 = vunpack.c.l.b16 %v110
    %v330 = vunpack.c.l.b16 %v111
    %v331 = vunpack.c.l.b16 %v112
    %v332 = vunpack.c.l.b16 %v113
    %v333 = vunpack.c.l.b16 %v114
    %v334 = vunpack.c.l.b16 %v115
    %v335 = vunpack.c.l.b16 %v116
    %v336 = vunpack.c.l.b16 %v117
    %v337 = vunpack.c.l.b16 %v118
    %v338 = vunpack.c.l.b16 %v119
    %v339 = vunpack.c.l.b16 %v120
    %v340 = vunpack.c.l.b16 %v121
    %v341 = vunpack.c.l.b16 %v122
    %v342 = vunpack.c.l.b16 %v123
    %v343 = vunpack.c.l.b16 %v124
    %v344 = vunpack.c.l.b16 %v125
    %v345 = vunpack.c.l.b16 %v126
    %v346 = vunpack.c.l.b16 %v127
    %v347 = vunpack.c.l.b16 %v128
    %v348 = vunpack.c.l.b16 %v129
    %v349 = vunpack.c.l.b16 %v130
    %v350 = vunpack.c.l.b16 %v131
    %v351 = vunpack.c.l.b16 %v132
    %v352 = vunpack.c.l.b16 %v133
    %v353 = vunpack.c.l.b16 %v134
    %v354 = vunpack.c.l.b16 %v135
    %v355 = vunpack.c.l.b16 %v136
    %v356 = vunpack.c.l.b16 %v137
    %v357 = vunpack.c.l.b16 %v138
    %v358 = vunpack.c.l.b16 %v139
    %v359 = vunpack.c.l.b16 %v140
    %v360 = vunpack.c.l.b16 %v141
    %v361 = vunpack.c.l.b16 %v142
    %v362 = vunpack.c.l.b16 %v143
    %v363 = vunpack.c.l.b16 %v144
    %v364 = vunpack.c.l.b16 %v145
    %v365 = vunpack.c.l.b16 %v146
    %v366 = vunpack.c.l.b16 %v147
    %v367 = vunpack.c.l.b16 %v148
    %v368 = vunpack.c.l.b16 %v149
    %v369 = vunpack.c.l.b16 %v150
    %v370 = vunpack.c.l.b16 %v151
    %v371 = vunpack.c.l.b16 %v152
    %v372 = vunpack.c.l.b16 %v153
    %v373 = vunpack.c.l.b16 %v154
    %v374 = vunpack.c.l.b16 %v155
    %v375 = vunpack.c.l.b16 %v156
    %v376 = vunpack.c.l.b16 %v157
    %v377 = vunpack.c.l.b16 %v158
    %v378 = vunpack.c.l.b16 %v159
    %v379 = vunpack.c.l.b16 %v160
    %v380 = vunpack.c.l.b16 %v161
    %v381 = vunpack.c.l.b16 %v162
    %v382 = vunpack.c.l.b16 %v163
    %v383 = vunpack.c.l.b16 %v164
    %v384 = vpack.c.b16 %v289, %v288
    %v385 = vpack.c.b16 %v291, %v290
    %v386 = vpack.c.b16 %v293, %v292
    %v387 = vpack.c.b16 %v295, %v294
    %v388 = vpack.c.b16 %v297, %v296
    %v389 = vpack.c.b16 %v299, %v298
    %v390 = vpack.c.b16 %v301, %v300
    %v391 = vpack.c.b16 %v303, %v302
    %v392 = vpack.c.b16 %v305, %v304
    %v393 = vpack.c.b16 %v307, %v306
    %v394 = vpack.c.b16 %v309, %v308
    %v395 = vpack.c.b16 %v311, %v310
    %v396 = vpack.c.b16 %v313, %v312
    %v397 = vpack.c.b16 %v315, %v314
    %v398 = vpack.c.b16 %v317, %v316
    %v399 = vpack.c.b16 %v319, %v318
    %v400 = vpack.c.b16 %v321, %v320
    %v401 = vpack.c.b16 %v323, %v322
    %v402 = vpack.c.b16 %v325, %v324
    %v403 = vpack.c.b16 %v327, %v326
    %v404 = vpack.c.b16 %v329, %v328
    %v405 = vpack.c.b16 %v331, %v330
    %v406 = vpack.c.b16 %v333, %v332
    %v407 = vpack.c.b16 %v335, %v334
    %v408 = vpack.c.b16 %v337, %v336
    %v409 = vpack.c.b16 %v339, %v338
    %v410 = vpack.c.b16 %v341, %v340
    %v411 = vpack.c.b16 %v343, %v342
    %v412 = vpack.c.b16 %v345, %v344
    %v413 = vpack.c.b16 %v347, %v346
    %v414 = vpack.c.b16 %v349, %v348
    %v415 = vpack.c.b16 %v351, %v350
    %v416 = vpack.c.b16 %v353, %v352
    %v417 = vpack.c.b16 %v355, %v354
    %v418 = vpack.c.b16 %v357, %v356
    %v419 = vpack.c.b16 %v359, %v358
    %v420 = vpack.c.b16 %v361, %v360
    %v421 = vpack.c.b16 %v363, %v362
    %v422 = vpack.c.b16 %v365, %v364
    %v423 = vpack.c.b16 %v367, %v366
    %v424 = vpack.c.b16 %v369, %v368
    %v425 = vpack.c.b16 %v371, %v370
    %v426 = vpack.c.b16 %v373, %v372
    %v427 = vpack.c.b16 %v375, %v374
    %v428 = vpack.c.b16 %v377, %v376
    %v429 = vpack.c.b16 %v379, %v378
    %v430 = vpack.c.b16 %v381, %v380
    %v431 = vpack.c.b16 %v383, %v382
    %480 = vmatprep.subr.bf16.mxu0 0
    %481 = vmatpush1.bf16.msra.mxu0 %v384
    %482 = vmatprep.subr.bf16.mxu0 0
    %483 = vmatpush1.bf16.msra.mxu0 %v385
    %484 = vmatprep.subr.bf16.mxu0 0
    %485 = vmatpush1.bf16.msra.mxu0 %v386
    %486 = vmatprep.subr.bf16.mxu0 0
    %487 = vmatpush1.bf16.msra.mxu0 %v387
    %488 = vmatprep.subr.bf16.mxu0 0
    %489 = vmatpush1.bf16.msra.mxu0 %v388
    %490 = vmatprep.subr.bf16.mxu0 0
    %491 = vmatpush1.bf16.msra.mxu0 %v389
    %492 = vmatprep.subr.bf16.mxu0 0
    %493 = vmatpush1.bf16.msra.mxu0 %v390
    %494 = vmatprep.subr.bf16.mxu0 0
    %495 = vmatpush1.bf16.msra.mxu0 %v391
    %496 = vmatprep.subr.bf16.mxu0 0
    %497 = vmatpush1.bf16.msra.mxu0 %v392
    %498 = vmatprep.subr.bf16.mxu0 0
    %499 = vmatpush1.bf16.msra.mxu0 %v393
    %500 = vmatprep.subr.bf16.mxu0 0
    %501 = vmatpush1.bf16.msra.mxu0 %v394
    %502 = vmatprep.subr.bf16.mxu0 0
    %503 = vmatpush1.bf16.msra.mxu0 %v395
    %504 = vmatprep.subr.bf16.mxu0 0
    %505 = vmatpush1.bf16.msra.mxu0 %v396
    %506 = vmatprep.subr.bf16.mxu0 0
    %507 = vmatpush1.bf16.msra.mxu0 %v397
    %508 = vmatprep.subr.bf16.mxu0 0
    %509 = vmatpush1.bf16.msra.mxu0 %v398
    %510 = vmatprep.subr.bf16.mxu0 0
    %511 = vmatpush1.bf16.msra.mxu0 %v399
    %512 = vmatprep.mubr.bf16.mxu0 %v183
    %513 = vmatmul.mubr.bf16.gmra.mrb[0].mxu0 %v182
    %v514 = vpop.f32.mrb[0].mxu0
    %v515 = vadd.f32 %v191, %v514
    %v516 = vpop.f32.mrb[0].mxu0
    %v517 = vpop.f32.mrb[0].mxu0
    %v518 = vpop.f32.mrb[0].mxu0
    %519 = vdwg.mxu0
    %520 = vmatprep.subr.bf16.mxu0 0
    %521 = vmatpush1.bf16.msra.mxu0 %v400
    %522 = vmatprep.subr.bf16.mxu0 0
    %523 = vmatpush1.bf16.msra.mxu0 %v401
    %524 = vmatprep.subr.bf16.mxu0 0
    %525 = vmatpush1.bf16.msra.mxu0 %v402
    %526 = vmatprep.subr.bf16.mxu0 0
    %527 = vmatpush1.bf16.msra.mxu0 %v403
    %528 = vmatprep.subr.bf16.mxu0 0
    %529 = vmatpush1.bf16.msra.mxu0 %v404
    %530 = vmatprep.subr.bf16.mxu0 0
    %531 = vmatpush1.bf16.msra.mxu0 %v405
    %532 = vmatprep.subr.bf16.mxu0 0
    %533 = vmatpush1.bf16.msra.mxu0 %v406
    %534 = vmatprep.subr.bf16.mxu0 0
    %535 = vmatpush1.bf16.msra.mxu0 %v407
    %536 = vmatprep.subr.bf16.mxu0 0
    %537 = vmatpush1.bf16.msra.mxu0 %v408
    %538 = vmatprep.subr.bf16.mxu0 0
    %539 = vmatpush1.bf16.msra.mxu0 %v409
    %540 = vmatprep.subr.bf16.mxu0 0
    %541 = vmatpush1.bf16.msra.mxu0 %v410
    %542 = vmatprep.subr.bf16.mxu0 0
    %543 = vmatpush1.bf16.msra.mxu0 %v411
    %544 = vmatprep.subr.bf16.mxu0 0
    %545 = vmatpush1.bf16.msra.mxu0 %v412
    %546 = vmatprep.subr.bf16.mxu0 0
    %547 = vmatpush1.bf16.msra.mxu0 %v413
    %548 = vmatprep.subr.bf16.mxu0 0
    %549 = vmatpush1.bf16.msra.mxu0 %v414
    %550 = vmatprep.subr.bf16.mxu0 0
    %551 = vmatpush1.bf16.msra.mxu0 %v415
    %552 = vmatprep.mubr.bf16.mxu0 %v185
    %553 = vmatmul.mubr.bf16.gmra.mrb[0].mxu0 %v184
    %v554 = vpop.f32.mrb[0].mxu0
    %v555 = vadd.f32 %v515, %v554
    %v556 = vpop.f32.mrb[0].mxu0
    %v557 = vpop.f32.mrb[0].mxu0
    %v558 = vpop.f32.mrb[0].mxu0
    %559 = vdwg.mxu0
    %560 = vmatprep.subr.bf16.mxu0 0
    %561 = vmatpush1.bf16.msra.mxu0 %v416
    %562 = vmatprep.subr.bf16.mxu0 0
    %563 = vmatpush1.bf16.msra.mxu0 %v417
    %564 = vmatprep.subr.bf16.mxu0 0
    %565 = vmatpush1.bf16.msra.mxu0 %v418
    %566 = vmatprep.subr.bf16.mxu0 0
    %567 = vmatpush1.bf16.msra.mxu0 %v419
    %568 = vmatprep.subr.bf16.mxu0 0
    %569 = vmatpush1.bf16.msra.mxu0 %v420
    %570 = vmatprep.subr.bf16.mxu0 0
    %571 = vmatpush1.bf16.msra.mxu0 %v421
    %572 = vmatprep.subr.bf16.mxu0 0
    %573 = vmatpush1.bf16.msra.mxu0 %v422
    %574 = vmatprep.subr.bf16.mxu0 0
    %575 = vmatpush1.bf16.msra.mxu0 %v423
    %576 = vmatprep.subr.bf16.mxu0 0
    %577 = vmatpush1.bf16.msra.mxu0 %v424
    %578 = vmatprep.subr.bf16.mxu0 0
    %579 = vmatpush1.bf16.msra.mxu0 %v425
    %580 = vmatprep.subr.bf16.mxu0 0
    %581 = vmatpush1.bf16.msra.mxu0 %v426
    %582 = vmatprep.subr.bf16.mxu0 0
    %583 = vmatpush1.bf16.msra.mxu0 %v427
    %584 = vmatprep.subr.bf16.mxu0 0
    %585 = vmatpush1.bf16.msra.mxu0 %v428
    %586 = vmatprep.subr.bf16.mxu0 0
    %587 = vmatpush1.bf16.msra.mxu0 %v429
    %588 = vmatprep.subr.bf16.mxu0 0
    %589 = vmatpush1.bf16.msra.mxu0 %v430
    %590 = vmatprep.subr.bf16.mxu0 0
    %591 = vmatpush1.bf16.msra.mxu0 %v431
    %592 = vmatprep.mubr.bf16.mxu0 %v187
    %593 = vmatmul.mubr.bf16.gmra.mrb[0].mxu0 %v186
    %v594 = vpop.f32.mrb[0].mxu0
    %v595 = vadd.f32 %v555, %v594
    %v596 = vpop.f32.mrb[0].mxu0
    %v597 = vpop.f32.mrb[0].mxu0
    %v598 = vpop.f32.mrb[0].mxu0
    %599 = vdwg.mxu0
    %600 = vadd.xlane.f32.xlu0 %v595
    %v601 = vpop.xlane.xlu0 %600
    %v602 = vrcp.pop 128.0
    %v603 = vmul.f32 %v601, %v602
    %v604 = vsub.f32 %v595, %v603
    %v605 = vmul.f32 %v604, %v604
    %606 = vadd.xlane.f32.xlu0 %v605
    %v607 = vpop.xlane.xlu0 %606
    %v608 = vmul.f32 %v607, %v602
    %v609 = vadd.f32 %v608, 1e-05
    %v610 = vrsqrt.pop %v609
    %v611 = vmul.f32 %v604, %v610
    %v612 = vlaneseq
    %v613 = vshrl.u32 %v612, 7
    %v614 = vsub.s32 1, %v613
    %v615 = vrot.slane %v165, %v614
    %v616 = vmul.f32 %v611, %v615
    %v617 = vlaneseq
    %v618 = vshrl.u32 %v617, 7
    %v619 = vsub.s32 2, %v618
    %v620 = vrot.slane %v165, %v619
    %v621 = vadd.f32 %v616, %v620
    %v622 = vmax.f32 %v621, 0.0
    %v623 = vpack.c.bf16 %v622, %v622
    %v624 = vlaneseq
    %v625 = vshrl.u32 %v624, 7
    %v626 = vsub.s32 3, %v625
    %v627 = vrot.slane %v165, %v626
    %v644 = vunpack.c.l.b16 %v166
    %v645 = vunpack.c.l.b16 %v167
    %v646 = vunpack.c.l.b16 %v168
    %v647 = vunpack.c.l.b16 %v169
    %v648 = vunpack.c.l.b16 %v170
    %v649 = vunpack.c.l.b16 %v171
    %v650 = vunpack.c.l.b16 %v172
    %v651 = vunpack.c.l.b16 %v173
    %v652 = vunpack.c.l.b16 %v174
    %v653 = vunpack.c.l.b16 %v175
    %v654 = vunpack.c.l.b16 %v176
    %v655 = vunpack.c.l.b16 %v177
    %v656 = vunpack.c.l.b16 %v178
    %v657 = vunpack.c.l.b16 %v179
    %v658 = vunpack.c.l.b16 %v180
    %v659 = vunpack.c.l.b16 %v181
    %v660 = vpack.c.b16 %v645, %v644
    %v661 = vpack.c.b16 %v647, %v646
    %v662 = vpack.c.b16 %v649, %v648
    %v663 = vpack.c.b16 %v651, %v650
    %v664 = vpack.c.b16 %v653, %v652
    %v665 = vpack.c.b16 %v655, %v654
    %v666 = vpack.c.b16 %v657, %v656
    %v667 = vpack.c.b16 %v659, %v658
    %676 = vmatprep.subr.bf16.mxu0 0
    %677 = vmatpush1.bf16.msra.mxu0 %v660
    %678 = vmatprep.subr.bf16.mxu0 0
    %679 = vmatpush1.bf16.msra.mxu0 %v661
    %680 = vmatprep.subr.bf16.mxu0 0
    %681 = vmatpush1.bf16.msra.mxu0 %v662
    %682 = vmatprep.subr.bf16.mxu0 0
    %683 = vmatpush1.bf16.msra.mxu0 %v663
    %684 = vmatprep.subr.bf16.mxu0 0
    %685 = vmatpush1.bf16.msra.mxu0 %v664
    %686 = vmatprep.subr.bf16.mxu0 0
    %687 = vmatpush1.bf16.msra.mxu0 %v665
    %688 = vmatprep.subr.bf16.mxu0 0
    %689 = vmatpush1.bf16.msra.mxu0 %v666
    %690 = vmatprep.subr.bf16.mxu0 0
    %691 = vmatpush1.bf16.msra.mxu0 %v667
    %692 = vmatprep.subr.bf16.mxu0 0
    %693 = vmatpush1.bf16.msra.mxu0 0
    %694 = vmatprep.subr.bf16.mxu0 0
    %695 = vmatpush1.bf16.msra.mxu0 0
    %696 = vmatprep.subr.bf16.mxu0 0
    %697 = vmatpush1.bf16.msra.mxu0 0
    %698 = vmatprep.subr.bf16.mxu0 0
    %699 = vmatpush1.bf16.msra.mxu0 0
    %700 = vmatprep.subr.bf16.mxu0 0
    %701 = vmatpush1.bf16.msra.mxu0 0
    %702 = vmatprep.subr.bf16.mxu0 0
    %703 = vmatpush1.bf16.msra.mxu0 0
    %704 = vmatprep.subr.bf16.mxu0 0
    %705 = vmatpush1.bf16.msra.mxu0 0
    %706 = vmatprep.subr.bf16.mxu0 0
    %707 = vmatpush1.bf16.msra.mxu0 0
    %708 = vmatprep.mubr.bf16.mxu0 0
    %709 = vmatmul.mubr.bf16.gmra.mrb[0].mxu0 %v623
    %v710 = vpop.f32.mrb[0].mxu0
    %v711 = vadd.f32 %v627, %v710
    %v712 = vpop.f32.mrb[0].mxu0
    %v713 = vpop.f32.mrb[0].mxu0
    %v714 = vpop.f32.mrb[0].mxu0
    %715 = vdwg.mxu0
    %v716 = vld [vmem:[%s2] sm:$0xff]
    %v717 = vld [vmem:[%s2 + $0x8] sm:$0xff]
    %v718 = vld [vmem:[%s2 + $0x10] sm:$0xff]
    %v719 = vld [vmem:[%s2 + $0x18] sm:$0xff]
    %v720 = vld [vmem:[%s2 + $0x20] sm:$0xff]
    %v721 = vld [vmem:[%s2 + $0x28] sm:$0xff]
    %s722 = scalar_lea.vmem [#allocation5], 384
    %v723 = vld [vmem:[%s722] sm:$0xf]
    %v724 = vld [vmem:[%s722 + $0x4] sm:$0xf]
    %v725 = vld [vmem:[%s722 + $0x8] sm:$0xf]
    %v726 = vld [vmem:[%s722 + $0xc] sm:$0xf]
    %v727 = vld [vmem:[%s722 + $0x10] sm:$0xf]
    %v728 = vld [vmem:[%s722 + $0x14] sm:$0xf]
    %v729 = vld [vmem:[%s722 + $0x18] sm:$0xf]
    %v730 = vld [vmem:[%s722 + $0x1c] sm:$0xf]
    %v731 = vld [vmem:[%s722 + $0x20] sm:$0xf]
    %v732 = vld [vmem:[%s722 + $0x24] sm:$0xf]
    %v733 = vld [vmem:[%s722 + $0x28] sm:$0xf]
    %v734 = vld [vmem:[%s722 + $0x2c] sm:$0xf]
    %v735 = vld [vmem:[%s722 + $0x30] sm:$0xf]
    %v736 = vld [vmem:[%s722 + $0x34] sm:$0xf]
    %v737 = vld [vmem:[%s722 + $0x38] sm:$0xf]
    %v738 = vld [vmem:[%s722 + $0x3c] sm:$0xf]
    %v739 = vld [vmem:[%s722 + $0x40] sm:$0xf]
    %v740 = vld [vmem:[%s722 + $0x44] sm:$0xf]
    %v741 = vld [vmem:[%s722 + $0x48] sm:$0xf]
    %v742 = vld [vmem:[%s722 + $0x4c] sm:$0xf]
    %v743 = vld [vmem:[%s722 + $0x50] sm:$0xf]
    %v744 = vld [vmem:[%s722 + $0x54] sm:$0xf]
    %v745 = vld [vmem:[%s722 + $0x58] sm:$0xf]
    %v746 = vld [vmem:[%s722 + $0x5c] sm:$0xf]
    %v747 = vld [vmem:[%s722 + $0x60] sm:$0xf]
    %v748 = vld [vmem:[%s722 + $0x64] sm:$0xf]
    %v749 = vld [vmem:[%s722 + $0x68] sm:$0xf]
    %v750 = vld [vmem:[%s722 + $0x6c] sm:$0xf]
    %v751 = vld [vmem:[%s722 + $0x70] sm:$0xf]
    %v752 = vld [vmem:[%s722 + $0x74] sm:$0xf]
    %v753 = vld [vmem:[%s722 + $0x78] sm:$0xf]
    %v754 = vld [vmem:[%s722 + $0x7c] sm:$0xf]
    %v755 = vld [vmem:[%s722 + $0x80] sm:$0xf]
    %v756 = vld [vmem:[%s722 + $0x84] sm:$0xf]
    %v757 = vld [vmem:[%s722 + $0x88] sm:$0xf]
    %v758 = vld [vmem:[%s722 + $0x8c] sm:$0xf]
    %v759 = vld [vmem:[%s722 + $0x90] sm:$0xf]
    %v760 = vld [vmem:[%s722 + $0x94] sm:$0xf]
    %v761 = vld [vmem:[%s722 + $0x98] sm:$0xf]
    %v762 = vld [vmem:[%s722 + $0x9c] sm:$0xf]
    %v763 = vld [vmem:[%s722 + $0xa0] sm:$0xf]
    %v764 = vld [vmem:[%s722 + $0xa4] sm:$0xf]
    %v765 = vld [vmem:[%s722 + $0xa8] sm:$0xf]
    %v766 = vld [vmem:[%s722 + $0xac] sm:$0xf]
    %v767 = vld [vmem:[%s722 + $0xb0] sm:$0xf]
    %v768 = vld [vmem:[%s722 + $0xb4] sm:$0xf]
    %v769 = vld [vmem:[%s722 + $0xb8] sm:$0xf]
    %v770 = vld [vmem:[%s722 + $0xbc] sm:$0xf]
    %v771 = vld [vmem:[%s722 + $0xc0] sm:$0xf]
    %v772 = vld [vmem:[%s722 + $0xc4] sm:$0xf]
    %v773 = vld [vmem:[%s722 + $0xc8] sm:$0xf]
    %v774 = vld [vmem:[%s722 + $0xcc] sm:$0xf]
    %v775 = vld [vmem:[%s722 + $0xd0] sm:$0xf]
    %v776 = vld [vmem:[%s722 + $0xd4] sm:$0xf]
    %v777 = vld [vmem:[%s722 + $0xd8] sm:$0xf]
    %v778 = vld [vmem:[%s722 + $0xdc] sm:$0xf]
    %v779 = vld [vmem:[%s722 + $0xe0] sm:$0xf]
    %v780 = vld [vmem:[%s722 + $0xe4] sm:$0xf]
    %v781 = vld [vmem:[%s722 + $0xe8] sm:$0xf]
    %v782 = vld [vmem:[%s722 + $0xec] sm:$0xf]
    %v783 = vld [vmem:[%s722 + $0xf0] sm:$0xf]
    %v784 = vld [vmem:[%s722 + $0xf4] sm:$0xf]
    %v785 = vld [vmem:[%s722 + $0xf8] sm:$0xf]
    %v786 = vld [vmem:[%s722 + $0xfc] sm:$0xf]
    %v787 = vld [vmem:[%s722 + $0x100] sm:$0xf]
    %v788 = vld [vmem:[%s722 + $0x104] sm:$0xf]
    %v789 = vld [vmem:[%s722 + $0x108] sm:$0xf]
    %v790 = vld [vmem:[%s722 + $0x10c] sm:$0xf]
    %v791 = vld [vmem:[%s722 + $0x110] sm:$0xf]
    %v792 = vld [vmem:[%s722 + $0x114] sm:$0xf]
    %v793 = vld [vmem:[%s722 + $0x118] sm:$0xf]
    %v794 = vld [vmem:[%s722 + $0x11c] sm:$0xf]
    %v795 = vld [vmem:[%s722 + $0x120] sm:$0xf]
    %v796 = vld [vmem:[%s722 + $0x124] sm:$0xf]
    %v797 = vld [vmem:[%s722 + $0x128] sm:$0xf]
    %v798 = vld [vmem:[%s722 + $0x12c] sm:$0xf]
    %v799 = vld [vmem:[%s722 + $0x130] sm:$0xf]
    %v800 = vld [vmem:[%s722 + $0x134] sm:$0xf]
    %v801 = vld [vmem:[%s722 + $0x138] sm:$0xf]
    %v802 = vld [vmem:[%s722 + $0x13c] sm:$0xf]
    %v803 = vld [vmem:[%s722 + $0x140] sm:$0xf]
    %v804 = vld [vmem:[%s722 + $0x144] sm:$0xf]
    %v805 = vld [vmem:[%s722 + $0x148] sm:$0xf]
    %v806 = vld [vmem:[%s722 + $0x14c] sm:$0xf]
    %v807 = vld [vmem:[%s722 + $0x150] sm:$0xf]
    %v808 = vld [vmem:[%s722 + $0x154] sm:$0xf]
    %v809 = vld [vmem:[%s722 + $0x158] sm:$0xf]
    %v810 = vld [vmem:[%s722 + $0x15c] sm:$0xf]
    %v811 = vld [vmem:[%s722 + $0x160] sm:$0xf]
    %v812 = vld [vmem:[%s722 + $0x164] sm:$0xf]
    %v813 = vld [vmem:[%s722 + $0x168] sm:$0xf]
    %v814 = vld [vmem:[%s722 + $0x16c] sm:$0xf]
    %v815 = vld [vmem:[%s722 + $0x170] sm:$0xf]
    %v816 = vld [vmem:[%s722 + $0x174] sm:$0xf]
    %v817 = vld [vmem:[%s722 + $0x178] sm:$0xf]
    %v818 = vld [vmem:[%s722 + $0x17c] sm:$0xf]
    %s819 = scalar_lea.vmem %s7, 4
    %v820 = vld [vmem:[%s819] sm:$0xf]
    %s821 = scalar_lea.vmem %s8, 64
    %v822 = vld [vmem:[%s821] sm:$0xf]
    %v823 = vld [vmem:[%s821 + $0x4] sm:$0xf]
    %v824 = vld [vmem:[%s821 + $0x8] sm:$0xf]
    %v825 = vld [vmem:[%s821 + $0xc] sm:$0xf]
    %v826 = vld [vmem:[%s821 + $0x10] sm:$0xf]
    %v827 = vld [vmem:[%s821 + $0x14] sm:$0xf]
    %v828 = vld [vmem:[%s821 + $0x18] sm:$0xf]
    %v829 = vld [vmem:[%s821 + $0x1c] sm:$0xf]
    %v830 = vld [vmem:[%s821 + $0x20] sm:$0xf]
    %v831 = vld [vmem:[%s821 + $0x24] sm:$0xf]
    %v832 = vld [vmem:[%s821 + $0x28] sm:$0xf]
    %v833 = vld [vmem:[%s821 + $0x2c] sm:$0xf]
    %v834 = vld [vmem:[%s821 + $0x30] sm:$0xf]
    %v835 = vld [vmem:[%s821 + $0x34] sm:$0xf]
    %v836 = vld [vmem:[%s821 + $0x38] sm:$0xf]
    %v837 = vld [vmem:[%s821 + $0x3c] sm:$0xf]
    %v838 = vpack.c.bf16 %v716, %v716
    %v839 = vpack.c.bf16 %v717, %v717
    %v840 = vpack.c.bf16 %v718, %v718
    %v841 = vpack.c.bf16 %v719, %v719
    %v842 = vpack.c.bf16 %v720, %v720
    %v843 = vpack.c.bf16 %v721, %v721
    %v844 = vlaneseq
    %v845 = vshrl.u32 %v844, 7
    %v846 = vsub.s32 0, %v845
    %v847 = vrot.slane %v820, %v846
    %v944 = vunpack.c.l.b16 %v723
    %v945 = vunpack.c.l.b16 %v724
    %v946 = vunpack.c.l.b16 %v725
    %v947 = vunpack.c.l.b16 %v726
    %v948 = vunpack.c.l.b16 %v727
    %v949 = vunpack.c.l.b16 %v728
    %v950 = vunpack.c.l.b16 %v729
    %v951 = vunpack.c.l.b16 %v730
    %v952 = vunpack.c.l.b16 %v731
    %v953 = vunpack.c.l.b16 %v732
    %v954 = vunpack.c.l.b16 %v733
    %v955 = vunpack.c.l.b16 %v734
    %v956 = vunpack.c.l.b16 %v735
    %v957 = vunpack.c.l.b16 %v736
    %v958 = vunpack.c.l.b16 %v737
    %v959 = vunpack.c.l.b16 %v738
    %v960 = vunpack.c.l.b16 %v739
    %v961 = vunpack.c.l.b16 %v740
    %v962 = vunpack.c.l.b16 %v741
    %v963 = vunpack.c.l.b16 %v742
    %v964 = vunpack.c.l.b16 %v743
    %v965 = vunpack.c.l.b16 %v744
    %v966 = vunpack.c.l.b16 %v745
    %v967 = vunpack.c.l.b16 %v746
    %v968 = vunpack.c.l.b16 %v747
    %v969 = vunpack.c.l.b16 %v748
    %v970 = vunpack.c.l.b16 %v749
    %v971 = vunpack.c.l.b16 %v750
    %v972 = vunpack.c.l.b16 %v751
    %v973 = vunpack.c.l.b16 %v752
    %v974 = vunpack.c.l.b16 %v753
    %v975 = vunpack.c.l.b16 %v754
    %v976 = vunpack.c.l.b16 %v755
    %v977 = vunpack.c.l.b16 %v756
    %v978 = vunpack.c.l.b16 %v757
    %v979 = vunpack.c.l.b16 %v758
    %v980 = vunpack.c.l.b16 %v759
    %v981 = vunpack.c.l.b16 %v760
    %v982 = vunpack.c.l.b16 %v761
    %v983 = vunpack.c.l.b16 %v762
    %v984 = vunpack.c.l.b16 %v763
    %v985 = vunpack.c.l.b16 %v764
    %v986 = vunpack.c.l.b16 %v765
    %v987 = vunpack.c.l.b16 %v766
    %v988 = vunpack.c.l.b16 %v767
    %v989 = vunpack.c.l.b16 %v768
    %v990 = vunpack.c.l.b16 %v769
    %v991 = vunpack.c.l.b16 %v770
    %v992 = vunpack.c.l.b16 %v771
    %v993 = vunpack.c.l.b16 %v772
    %v994 = vunpack.c.l.b16 %v773
    %v995 = vunpack.c.l.b16 %v774
    %v996 = vunpack.c.l.b16 %v775
    %v997 = vunpack.c.l.b16 %v776
    %v998 = vunpack.c.l.b16 %v777
    %v999 = vunpack.c.l.b16 %v778
    %v1000 = vunpack.c.l.b16 %v779
    %v1001 = vunpack.c.l.b16 %v780
    %v1002 = vunpack.c.l.b16 %v781
    %v1003 = vunpack.c.l.b16 %v782
    %v1004 = vunpack.c.l.b16 %v783
    %v1005 = vunpack.c.l.b16 %v784
    %v1006 = vunpack.c.l.b16 %v785
    %v1007 = vunpack.c.l.b16 %v786
    %v1008 = vunpack.c.l.b16 %v787
    %v1009 = vunpack.c.l.b16 %v788
    %v1010 = vunpack.c.l.b16 %v789
    %v1011 = vunpack.c.l.b16 %v790
    %v1012 = vunpack.c.l.b16 %v791
    %v1013 = vunpack.c.l.b16 %v792
    %v1014 = vunpack.c.l.b16 %v793
    %v1015 = vunpack.c.l.b16 %v794
    %v1016 = vunpack.c.l.b16 %v795
    %v1017 = vunpack.c.l.b16 %v796
    %v1018 = vunpack.c.l.b16 %v797
    %v1019 = vunpack.c.l.b16 %v798
    %v1020 = vunpack.c.l.b16 %v799
    %v1021 = vunpack.c.l.b16 %v800
    %v1022 = vunpack.c.l.b16 %v801
    %v1023 = vunpack.c.l.b16 %v802
    %v1024 = vunpack.c.l.b16 %v803
    %v1025 = vunpack.c.l.b16 %v804
    %v1026 = vunpack.c.l.b16 %v805
    %v1027 = vunpack.c.l.b16 %v806
    %v1028 = vunpack.c.l.b16 %v807
    %v1029 = vunpack.c.l.b16 %v808
    %v1030 = vunpack.c.l.b16 %v809
    %v1031 = vunpack.c.l.b16 %v810
    %v1032 = vunpack.c.l.b16 %v811
    %v1033 = vunpack.c.l.b16 %v812
    %v1034 = vunpack.c.l.b16 %v813
    %v1035 = vunpack.c.l.b16 %v814
    %v1036 = vunpack.c.l.b16 %v815
    %v1037 = vunpack.c.l.b16 %v816
    %v1038 = vunpack.c.l.b16 %v817
    %v1039 = vunpack.c.l.b16 %v818
    %v1040 = vpack.c.b16 %v945, %v944
    %v1041 = vpack.c.b16 %v947, %v946
    %v1042 = vpack.c.b16 %v949, %v948
    %v1043 = vpack.c.b16 %v951, %v950
    %v1044 = vpack.c.b16 %v953, %v952
    %v1045 = vpack.c.b16 %v955, %v954
    %v1046 = vpack.c.b16 %v957, %v956
    %v1047 = vpack.c.b16 %v959, %v958
    %v1048 = vpack.c.b16 %v961, %v960
    %v1049 = vpack.c.b16 %v963, %v962
    %v1050 = vpack.c.b16 %v965, %v964
    %v1051 = vpack.c.b16 %v967, %v966
    %v1052 = vpack.c.b16 %v969, %v968
    %v1053 = vpack.c.b16 %v971, %v970
    %v1054 = vpack.c.b16 %v973, %v972
    %v1055 = vpack.c.b16 %v975, %v974
    %v1056 = vpack.c.b16 %v977, %v976
    %v1057 = vpack.c.b16 %v979, %v978
    %v1058 = vpack.c.b16 %v981, %v980
    %v1059 = vpack.c.b16 %v983, %v982
    %v1060 = vpack.c.b16 %v985, %v984
    %v1061 = vpack.c.b16 %v987, %v986
    %v1062 = vpack.c.b16 %v989, %v988
    %v1063 = vpack.c.b16 %v991, %v990
    %v1064 = vpack.c.b16 %v993, %v992
    %v1065 = vpack.c.b16 %v995, %v994
    %v1066 = vpack.c.b16 %v997, %v996
    %v1067 = vpack.c.b16 %v999, %v998
    %v1068 = vpack.c.b16 %v1001, %v1000
    %v1069 = vpack.c.b16 %v1003, %v1002
    %v1070 = vpack.c.b16 %v1005, %v1004
    %v1071 = vpack.c.b16 %v1007, %v1006
    %v1072 = vpack.c.b16 %v1009, %v1008
    %v1073 = vpack.c.b16 %v1011, %v1010
    %v1074 = vpack.c.b16 %v1013, %v1012
    %v1075 = vpack.c.b16 %v1015, %v1014
    %v1076 = vpack.c.b16 %v1017, %v1016
    %v1077 = vpack.c.b16 %v1019, %v1018
    %v1078 = vpack.c.b16 %v1021, %v1020
    %v1079 = vpack.c.b16 %v1023, %v1022
    %v1080 = vpack.c.b16 %v1025, %v1024
    %v1081 = vpack.c.b16 %v1027, %v1026
    %v1082 = vpack.c.b16 %v1029, %v1028
    %v1083 = vpack.c.b16 %v1031, %v1030
    %v1084 = vpack.c.b16 %v1033, %v1032
    %v1085 = vpack.c.b16 %v1035, %v1034
    %v1086 = vpack.c.b16 %v1037, %v1036
    %v1087 = vpack.c.b16 %v1039, %v1038
    %1136 = vmatprep.subr.bf16.mxu0 0
    %1137 = vmatpush1.bf16.msra.mxu0 %v1040
    %1138 = vmatprep.subr.bf16.mxu0 0
    %1139 = vmatpush1.bf16.msra.mxu0 %v1041
    %1140 = vmatprep.subr.bf16.mxu0 0
    %1141 = vmatpush1.bf16.msra.mxu0 %v1042
    %1142 = vmatprep.subr.bf16.mxu0 0
    %1143 = vmatpush1.bf16.msra.mxu0 %v1043
    %1144 = vmatprep.subr.bf16.mxu0 0
    %1145 = vmatpush1.bf16.msra.mxu0 %v1044
    %1146 = vmatprep.subr.bf16.mxu0 0
    %1147 = vmatpush1.bf16.msra.mxu0 %v1045
    %1148 = vmatprep.subr.bf16.mxu0 0
    %1149 = vmatpush1.bf16.msra.mxu0 %v1046
    %1150 = vmatprep.subr.bf16.mxu0 0
    %1151 = vmatpush1.bf16.msra.mxu0 %v1047
    %1152 = vmatprep.subr.bf16.mxu0 0
    %1153 = vmatpush1.bf16.msra.mxu0 %v1048
    %1154 = vmatprep.subr.bf16.mxu0 0
    %1155 = vmatpush1.bf16.msra.mxu0 %v1049
    %1156 = vmatprep.subr.bf16.mxu0 0
    %1157 = vmatpush1.bf16.msra.mxu0 %v1050
    %1158 = vmatprep.subr.bf16.mxu0 0
    %1159 = vmatpush1.bf16.msra.mxu0 %v1051
    %1160 = vmatprep.subr.bf16.mxu0 0
    %1161 = vmatpush1.bf16.msra.mxu0 %v1052
    %1162 = vmatprep.subr.bf16.mxu0 0
    %1163 = vmatpush1.bf16.msra.mxu0 %v1053
    %1164 = vmatprep.subr.bf16.mxu0 0
    %1165 = vmatpush1.bf16.msra.mxu0 %v1054
    %1166 = vmatprep.subr.bf16.mxu0 0
    %1167 = vmatpush1.bf16.msra.mxu0 %v1055
    %1168 = vmatprep.mubr.bf16.mxu0 %v839
    %1169 = vmatmul.mubr.bf16.gmra.mrb[0].mxu0 %v838
    %v1170 = vpop.f32.mrb[0].mxu0
    %v1171 = vadd.f32 %v847, %v1170
    %v1172 = vpop.f32.mrb[0].mxu0
    %v1173 = vpop.f32.mrb[0].mxu0
    %v1174 = vpop.f32.mrb[0].mxu0
    %1175 = vdwg.mxu0
    %1176 = vmatprep.subr.bf16.mxu0 0
    %1177 = vmatpush1.bf16.msra.mxu0 %v1056
    %1178 = vmatprep.subr.bf16.mxu0 0
    %1179 = vmatpush1.bf16.msra.mxu0 %v1057
    %1180 = vmatprep.subr.bf16.mxu0 0
    %1181 = vmatpush1.bf16.msra.mxu0 %v1058
    %1182 = vmatprep.subr.bf16.mxu0 0
    %1183 = vmatpush1.bf16.msra.mxu0 %v1059
    %1184 = vmatprep.subr.bf16.mxu0 0
    %1185 = vmatpush1.bf16.msra.mxu0 %v1060
    %1186 = vmatprep.subr.bf16.mxu0 0
    %1187 = vmatpush1.bf16.msra.mxu0 %v1061
    %1188 = vmatprep.subr.bf16.mxu0 0
    %1189 = vmatpush1.bf16.msra.mxu0 %v1062
    %1190 = vmatprep.subr.bf16.mxu0 0
    %1191 = vmatpush1.bf16.msra.mxu0 %v1063
    %1192 = vmatprep.subr.bf16.mxu0 0
    %1193 = vmatpush1.bf16.msra.mxu0 %v1064
    %1194 = vmatprep.subr.bf16.mxu0 0
    %1195 = vmatpush1.bf16.msra.mxu0 %v1065
    %1196 = vmatprep.subr.bf16.mxu0 0
    %1197 = vmatpush1.bf16.msra.mxu0 %v1066
    %1198 = vmatprep.subr.bf16.mxu0 0
    %1199 = vmatpush1.bf16.msra.mxu0 %v1067
    %1200 = vmatprep.subr.bf16.mxu0 0
    %1201 = vmatpush1.bf16.msra.mxu0 %v1068
    %1202 = vmatprep.subr.bf16.mxu0 0
    %1203 = vmatpush1.bf16.msra.mxu0 %v1069
    %1204 = vmatprep.subr.bf16.mxu0 0
    %1205 = vmatpush1.bf16.msra.mxu0 %v1070
    %1206 = vmatprep.subr.bf16.mxu0 0
    %1207 = vmatpush1.bf16.msra.mxu0 %v1071
    %1208 = vmatprep.mubr.bf16.mxu0 %v841
    %1209 = vmatmul.mubr.bf16.gmra.mrb[0].mxu0 %v840
    %v1210 = vpop.f32.mrb[0].mxu0
    %v1211 = vadd.f32 %v1171, %v1210
    %v1212 = vpop.f32.mrb[0].mxu0
    %v1213 = vpop.f32.mrb[0].mxu0
    %v1214 = vpop.f32.mrb[0].mxu0
    %1215 = vdwg.mxu0
    %1216 = vmatprep.subr.bf16.mxu0 0
    %1217 = vmatpush1.bf16.msra.mxu0 %v1072
    %1218 = vmatprep.subr.bf16.mxu0 0
    %1219 = vmatpush1.bf16.msra.mxu0 %v1073
    %1220 = vmatprep.subr.bf16.mxu0 0
    %1221 = vmatpush1.bf16.msra.mxu0 %v1074
    %1222 = vmatprep.subr.bf16.mxu0 0
    %1223 = vmatpush1.bf16.msra.mxu0 %v1075
    %1224 = vmatprep.subr.bf16.mxu0 0
    %1225 = vmatpush1.bf16.msra.mxu0 %v1076
    %1226 = vmatprep.subr.bf16.mxu0 0
    %1227 = vmatpush1.bf16.msra.mxu0 %v1077
    %1228 = vmatprep.subr.bf16.mxu0 0
    %1229 = vmatpush1.bf16.msra.mxu0 %v1078
    %1230 = vmatprep.subr.bf16.mxu0 0
    %1231 = vmatpush1.bf16.msra.mxu0 %v1079
    %1232 = vmatprep.subr.bf16.mxu0 0
    %1233 = vmatpush1.bf16.msra.mxu0 %v1080
    %1234 = vmatprep.subr.bf16.mxu0 0
    %1235 = vmatpush1.bf16.msra.mxu0 %v1081
    %1236 = vmatprep.subr.bf16.mxu0 0
    %1237 = vmatpush1.bf16.msra.mxu0 %v1082
    %1238 = vmatprep.subr.bf16.mxu0 0
    %1239 = vmatpush1.bf16.msra.mxu0 %v1083
    %1240 = vmatprep.subr.bf16.mxu0 0
    %1241 = vmatpush1.bf16.msra.mxu0 %v1084
    %1242 = vmatprep.subr.bf16.mxu0 0
    %1243 = vmatpush1.bf16.msra.mxu0 %v1085
    %1244 = vmatprep.subr.bf16.mxu0 0
    %1245 = vmatpush1.bf16.msra.mxu0 %v1086
    %1246 = vmatprep.subr.bf16.mxu0 0
    %1247 = vmatpush1.bf16.msra.mxu0 %v1087
    %1248 = vmatprep.mubr.bf16.mxu0 %v843
    %1249 = vmatmul.mubr.bf16.gmra.mrb[0].mxu0 %v842
    %v1250 = vpop.f32.mrb[0].mxu0
    %v1251 = vadd.f32 %v1211, %v1250
    %v1252 = vpop.f32.mrb[0].mxu0
    %v1253 = vpop.f32.mrb[0].mxu0
    %v1254 = vpop.f32.mrb[0].mxu0
    %1255 = vdwg.mxu0
    %1256 = vadd.xlane.f32.xlu0 %v1251
    %v1257 = vpop.xlane.xlu0 %1256
    %v1258 = vmul.f32 %v1257, %v602
    %v1259 = vsub.f32 %v1251, %v1258
    %v1260 = vmul.f32 %v1259, %v1259
    %1261 = vadd.xlane.f32.xlu0 %v1260
    %v1262 = vpop.xlane.xlu0 %1261
    %v1263 = vmul.f32 %v1262, %v602
    %v1264 = vadd.f32 %v1263, 1e-05
    %v1265 = vrsqrt.pop %v1264
    %v1266 = vmul.f32 %v1259, %v1265
    %v1267 = vlaneseq
    %v1268 = vshrl.u32 %v1267, 7
    %v1269 = vsub.s32 1, %v1268
    %v1270 = vrot.slane %v820, %v1269
    %v1271 = vmul.f32 %v1266, %v1270
    %v1272 = vlaneseq
    %v1273 = vshrl.u32 %v1272, 7
    %v1274 = vsub.s32 2, %v1273
    %v1275 = vrot.slane %v820, %v1274
    %v1276 = vadd.f32 %v1271, %v1275
    %v1277 = vmax.f32 %v1276, 0.0
    %v1278 = vpack.c.bf16 %v1277, %v1277
    %v1279 = vlaneseq
    %v1280 = vshrl.u32 %v1279, 7
    %v1281 = vsub.s32 3, %v1280
    %v1282 = vrot.slane %v820, %v1281
    %v1299 = vunpack.c.l.b16 %v822
    %v1300 = vunpack.c.l.b16 %v823
    %v1301 = vunpack.c.l.b16 %v824
    %v1302 = vunpack.c.l.b16 %v825
    %v1303 = vunpack.c.l.b16 %v826
    %v1304 = vunpack.c.l.b16 %v827
    %v1305 = vunpack.c.l.b16 %v828
    %v1306 = vunpack.c.l.b16 %v829
    %v1307 = vunpack.c.l.b16 %v830
    %v1308 = vunpack.c.l.b16 %v831
    %v1309 = vunpack.c.l.b16 %v832
    %v1310 = vunpack.c.l.b16 %v833
    %v1311 = vunpack.c.l.b16 %v834
    %v1312 = vunpack.c.l.b16 %v835
    %v1313 = vunpack.c.l.b16 %v836
    %v1314 = vunpack.c.l.b16 %v837
    %v1315 = vpack.c.b16 %v1300, %v1299
    %v1316 = vpack.c.b16 %v1302, %v1301
    %v1317 = vpack.c.b16 %v1304, %v1303
    %v1318 = vpack.c.b16 %v1306, %v1305
    %v1319 = vpack.c.b16 %v1308, %v1307
    %v1320 = vpack.c.b16 %v1310, %v1309
    %v1321 = vpack.c.b16 %v1312, %v1311
    %v1322 = vpack.c.b16 %v1314, %v1313
    %1331 = vmatprep.subr.bf16.mxu0 0
    %1332 = vmatpush1.bf16.msra.mxu0 %v1315
    %1333 = vmatprep.subr.bf16.mxu0 0
    %1334 = vmatpush1.bf16.msra.mxu0 %v1316
    %1335 = vmatprep.subr.bf16.mxu0 0
    %1336 = vmatpush1.bf16.msra.mxu0 %v1317
    %1337 = vmatprep.subr.bf16.mxu0 0
    %1338 = vmatpush1.bf16.msra.mxu0 %v1318
    %1339 = vmatprep.subr.bf16.mxu0 0
    %1340 = vmatpush1.bf16.msra.mxu0 %v1319
    %1341 = vmatprep.subr.bf16.mxu0 0
    %1342 = vmatpush1.bf16.msra.mxu0 %v1320
    %1343 = vmatprep.subr.bf16.mxu0 0
    %1344 = vmatpush1.bf16.msra.mxu0 %v1321
    %1345 = vmatprep.subr.bf16.mxu0 0
    %1346 = vmatpush1.bf16.msra.mxu0 %v1322
    %1347 = vmatprep.subr.bf16.mxu0 0
    %1348 = vmatpush1.bf16.msra.mxu0 0
    %1349 = vmatprep.subr.bf16.mxu0 0
    %1350 = vmatpush1.bf16.msra.mxu0 0
    %1351 = vmatprep.subr.bf16.mxu0 0
    %1352 = vmatpush1.bf16.msra.mxu0 0
    %1353 = vmatprep.subr.bf16.mxu0 0
    %1354 = vmatpush1.bf16.msra.mxu0 0
    %1355 = vmatprep.subr.bf16.mxu0 0
    %1356 = vmatpush1.bf16.msra.mxu0 0
    %1357 = vmatprep.subr.bf16.mxu0 0
    %1358 = vmatpush1.bf16.msra.mxu0 0
    %1359 = vmatprep.subr.bf16.mxu0 0
    %1360 = vmatpush1.bf16.msra.mxu0 0
    %1361 = vmatprep.subr.bf16.mxu0 0
    %1362 = vmatpush1.bf16.msra.mxu0 0
    %1363 = vmatprep.mubr.bf16.mxu0 0
    %1364 = vmatmul.mubr.bf16.gmra.mrb[0].mxu0 %v1278
    %v1365 = vpop.f32.mrb[0].mxu0
    %v1366 = vadd.f32 %v1282, %v1365
    %v1367 = vpop.f32.mrb[0].mxu0
    %v1368 = vpop.f32.mrb[0].mxu0
    %v1369 = vpop.f32.mrb[0].mxu0
    %1370 = vdwg.mxu0
    %v1371 = vmul.f32 %v711, %v1366
    %v1372 = vld [vmem:[%s3] sm:$0xff]
    %v1373 = vld [vmem:[%s3 + $0x8] sm:$0xff]
    %v1374 = vld [vmem:[%s3 + $0x10] sm:$0xff]
    %v1375 = vld [vmem:[%s3 + $0x18] sm:$0xff]
    %v1376 = vld [vmem:[%s3 + $0x20] sm:$0xff]
    %v1377 = vld [vmem:[%s3 + $0x28] sm:$0xff]
    %s1378 = scalar_lea.vmem [#allocation5], 768
    %v1379 = vld [vmem:[%s1378] sm:$0xf]
    %v1380 = vld [vmem:[%s1378 + $0x4] sm:$0xf]
    %v1381 = vld [vmem:[%s1378 + $0x8] sm:$0xf]
    %v1382 = vld [vmem:[%s1378 + $0xc] sm:$0xf]
    %v1383 = vld [vmem:[%s1378 + $0x10] sm:$0xf]
    %v1384 = vld [vmem:[%s1378 + $0x14] sm:$0xf]
    %v1385 = vld [vmem:[%s1378 + $0x18] sm:$0xf]
    %v1386 = vld [vmem:[%s1378 + $0x1c] sm:$0xf]
    %v1387 = vld [vmem:[%s1378 + $0x20] sm:$0xf]
    %v1388 = vld [vmem:[%s1378 + $0x24] sm:$0xf]
    %v1389 = vld [vmem:[%s1378 + $0x28] sm:$0xf]
    %v1390 = vld [vmem:[%s1378 + $0x2c] sm:$0xf]
    %v1391 = vld [vmem:[%s1378 + $0x30] sm:$0xf]
    %v1392 = vld [vmem:[%s1378 + $0x34] sm:$0xf]
    %v1393 = vld [vmem:[%s1378 + $0x38] sm:$0xf]
    %v1394 = vld [vmem:[%s1378 + $0x3c] sm:$0xf]
    %v1395 = vld [vmem:[%s1378 + $0x40] sm:$0xf]
    %v1396 = vld [vmem:[%s1378 + $0x44] sm:$0xf]
    %v1397 = vld [vmem:[%s1378 + $0x48] sm:$0xf]
    %v1398 = vld [vmem:[%s1378 + $0x4c] sm:$0xf]
    %v1399 = vld [vmem:[%s1378 + $0x50] sm:$0xf]
    %v1400 = vld [vmem:[%s1378 + $0x54] sm:$0xf]
    %v1401 = vld [vmem:[%s1378 + $0x58] sm:$0xf]
    %v1402 = vld [vmem:[%s1378 + $0x5c] sm:$0xf]
    %v1403 = vld [vmem:[%s1378 + $0x60] sm:$0xf]
    %v1404 = vld [vmem:[%s1378 + $0x64] sm:$0xf]
    %v1405 = vld [vmem:[%s1378 + $0x68] sm:$0xf]
    %v1406 = vld [vmem:[%s1378 + $0x6c] sm:$0xf]
    %v1407 = vld [vmem:[%s1378 + $0x70] sm:$0xf]
    %v1408 = vld [vmem:[%s1378 + $0x74] sm:$0xf]
    %v1409 = vld [vmem:[%s1378 + $0x78] sm:$0xf]
    %v1410 = vld [vmem:[%s1378 + $0x7c] sm:$0xf]
    %v1411 = vld [vmem:[%s1378 + $0x80] sm:$0xf]
    %v1412 = vld [vmem:[%s1378 + $0x84] sm:$0xf]
    %v1413 = vld [vmem:[%s1378 + $0x88] sm:$0xf]
    %v1414 = vld [vmem:[%s1378 + $0x8c] sm:$0xf]
    %v1415 = vld [vmem:[%s1378 + $0x90] sm:$0xf]
    %v1416 = vld [vmem:[%s1378 + $0x94] sm:$0xf]
    %v1417 = vld [vmem:[%s1378 + $0x98] sm:$0xf]
    %v1418 = vld [vmem:[%s1378 + $0x9c] sm:$0xf]
    %v1419 = vld [vmem:[%s1378 + $0xa0] sm:$0xf]
    %v1420 = vld [vmem:[%s1378 + $0xa4] sm:$0xf]
    %v1421 = vld [vmem:[%s1378 + $0xa8] sm:$0xf]
    %v1422 = vld [vmem:[%s1378 + $0xac] sm:$0xf]
    %v1423 = vld [vmem:[%s1378 + $0xb0] sm:$0xf]
    %v1424 = vld [vmem:[%s1378 + $0xb4] sm:$0xf]
    %v1425 = vld [vmem:[%s1378 + $0xb8] sm:$0xf]
    %v1426 = vld [vmem:[%s1378 + $0xbc] sm:$0xf]
    %v1427 = vld [vmem:[%s1378 + $0xc0] sm:$0xf]
    %v1428 = vld [vmem:[%s1378 + $0xc4] sm:$0xf]
    %v1429 = vld [vmem:[%s1378 + $0xc8] sm:$0xf]
    %v1430 = vld [vmem:[%s1378 + $0xcc] sm:$0xf]
    %v1431 = vld [vmem:[%s1378 + $0xd0] sm:$0xf]
    %v1432 = vld [vmem:[%s1378 + $0xd4] sm:$0xf]
    %v1433 = vld [vmem:[%s1378 + $0xd8] sm:$0xf]
    %v1434 = vld [vmem:[%s1378 + $0xdc] sm:$0xf]
    %v1435 = vld [vmem:[%s1378 + $0xe0] sm:$0xf]
    %v1436 = vld [vmem:[%s1378 + $0xe4] sm:$0xf]
    %v1437 = vld [vmem:[%s1378 + $0xe8] sm:$0xf]
    %v1438 = vld [vmem:[%s1378 + $0xec] sm:$0xf]
    %v1439 = vld [vmem:[%s1378 + $0xf0] sm:$0xf]
    %v1440 = vld [vmem:[%s1378 + $0xf4] sm:$0xf]
    %v1441 = vld [vmem:[%s1378 + $0xf8] sm:$0xf]
    %v1442 = vld [vmem:[%s1378 + $0xfc] sm:$0xf]
    %v1443 = vld [vmem:[%s1378 + $0x100] sm:$0xf]
    %v1444 = vld [vmem:[%s1378 + $0x104] sm:$0xf]
    %v1445 = vld [vmem:[%s1378 + $0x108] sm:$0xf]
    %v1446 = vld [vmem:[%s1378 + $0x10c] sm:$0xf]
    %v1447 = vld [vmem:[%s1378 + $0x110] sm:$0xf]
    %v1448 = vld [vmem:[%s1378 + $0x114] sm:$0xf]
    %v1449 = vld [vmem:[%s1378 + $0x118] sm:$0xf]
    %v1450 = vld [vmem:[%s1378 + $0x11c] sm:$0xf]
    %v1451 = vld [vmem:[%s1378 + $0x120] sm:$0xf]
    %v1452 = vld [vmem:[%s1378 + $0x124] sm:$0xf]
    %v1453 = vld [vmem:[%s1378 + $0x128] sm:$0xf]
    %v1454 = vld [vmem:[%s1378 + $0x12c] sm:$0xf]
    %v1455 = vld [vmem:[%s1378 + $0x130] sm:$0xf]
    %v1456 = vld [vmem:[%s1378 + $0x134] sm:$0xf]
    %v1457 = vld [vmem:[%s1378 + $0x138] sm:$0xf]
    %v1458 = vld [vmem:[%s1378 + $0x13c] sm:$0xf]
    %v1459 = vld [vmem:[%s1378 + $0x140] sm:$0xf]
    %v1460 = vld [vmem:[%s1378 + $0x144] sm:$0xf]
    %v1461 = vld [vmem:[%s1378 + $0x148] sm:$0xf]
    %v1462 = vld [vmem:[%s1378 + $0x14c] sm:$0xf]
    %v1463 = vld [vmem:[%s1378 + $0x150] sm:$0xf]
    %v1464 = vld [vmem:[%s1378 + $0x154] sm:$0xf]
    %v1465 = vld [vmem:[%s1378 + $0x158] sm:$0xf]
    %v1466 = vld [vmem:[%s1378 + $0x15c] sm:$0xf]
    %v1467 = vld [vmem:[%s1378 + $0x160] sm:$0xf]
    %v1468 = vld [vmem:[%s1378 + $0x164] sm:$0xf]
    %v1469 = vld [vmem:[%s1378 + $0x168] sm:$0xf]
    %v1470 = vld [vmem:[%s1378 + $0x16c] sm:$0xf]
    %v1471 = vld [vmem:[%s1378 + $0x170] sm:$0xf]
    %v1472 = vld [vmem:[%s1378 + $0x174] sm:$0xf]
    %v1473 = vld [vmem:[%s1378 + $0x178] sm:$0xf]
    %v1474 = vld [vmem:[%s1378 + $0x17c] sm:$0xf]
    %s1475 = scalar_lea.vmem %s7, 8
    %v1476 = vld [vmem:[%s1475] sm:$0xf]
    %s1477 = scalar_lea.vmem %s8, 128
    %v1478 = vld [vmem:[%s1477] sm:$0xf]
    %v1479 = vld [vmem:[%s1477 + $0x4] sm:$0xf]
    %v1480 = vld [vmem:[%s1477 + $0x8] sm:$0xf]
    %v1481 = vld [vmem:[%s1477 + $0xc] sm:$0xf]
    %v1482 = vld [vmem:[%s1477 + $0x10] sm:$0xf]
    %v1483 = vld [vmem:[%s1477 + $0x14] sm:$0xf]
    %v1484 = vld [vmem:[%s1477 + $0x18] sm:$0xf]
    %v1485 = vld [vmem:[%s1477 + $0x1c] sm:$0xf]
    %v1486 = vld [vmem:[%s1477 + $0x20] sm:$0xf]
    %v1487 = vld [vmem:[%s1477 + $0x24] sm:$0xf]
    %v1488 = vld [vmem:[%s1477 + $0x28] sm:$0xf]
    %v1489 = vld [vmem:[%s1477 + $0x2c] sm:$0xf]
    %v1490 = vld [vmem:[%s1477 + $0x30] sm:$0xf]
    %v1491 = vld [vmem:[%s1477 + $0x34] sm:$0xf]
    %v1492 = vld [vmem:[%s1477 + $0x38] sm:$0xf]
    %v1493 = vld [vmem:[%s1477 + $0x3c] sm:$0xf]
    %v1494 = vpack.c.bf16 %v1372, %v1372
    %v1495 = vpack.c.bf16 %v1373, %v1373
    %v1496 = vpack.c.bf16 %v1374, %v1374
    %v1497 = vpack.c.bf16 %v1375, %v1375
    %v1498 = vpack.c.bf16 %v1376, %v1376
    %v1499 = vpack.c.bf16 %v1377, %v1377
    %v1500 = vlaneseq
    %v1501 = vshrl.u32 %v1500, 7
    %v1502 = vsub.s32 0, %v1501
    %v1503 = vrot.slane %v1476, %v1502
    %v1600 = vunpack.c.l.b16 %v1379
    %v1601 = vunpack.c.l.b16 %v1380
    %v1602 = vunpack.c.l.b16 %v1381
    %v1603 = vunpack.c.l.b16 %v1382
    %v1604 = vunpack.c.l.b16 %v1383
    %v1605 = vunpack.c.l.b16 %v1384
    %v1606 = vunpack.c.l.b16 %v1385
    %v1607 = vunpack.c.l.b16 %v1386
    %v1608 = vunpack.c.l.b16 %v1387
    %v1609 = vunpack.c.l.b16 %v1388
    %v1610 = vunpack.c.l.b16 %v1389
    %v1611 = vunpack.c.l.b16 %v1390
    %v1612 = vunpack.c.l.b16 %v1391
    %v1613 = vunpack.c.l.b16 %v1392
    %v1614 = vunpack.c.l.b16 %v1393
    %v1615 = vunpack.c.l.b16 %v1394
    %v1616 = vunpack.c.l.b16 %v1395
    %v1617 = vunpack.c.l.b16 %v1396
    %v1618 = vunpack.c.l.b16 %v1397
    %v1619 = vunpack.c.l.b16 %v1398
    %v1620 = vunpack.c.l.b16 %v1399
    %v1621 = vunpack.c.l.b16 %v1400
    %v1622 = vunpack.c.l.b16 %v1401
    %v1623 = vunpack.c.l.b16 %v1402
    %v1624 = vunpack.c.l.b16 %v1403
    %v1625 = vunpack.c.l.b16 %v1404
    %v1626 = vunpack.c.l.b16 %v1405
    %v1627 = vunpack.c.l.b16 %v1406
    %v1628 = vunpack.c.l.b16 %v1407
    %v1629 = vunpack.c.l.b16 %v1408
    %v1630 = vunpack.c.l.b16 %v1409
    %v1631 = vunpack.c.l.b16 %v1410
    %v1632 = vunpack.c.l.b16 %v1411
    %v1633 = vunpack.c.l.b16 %v1412
    %v1634 = vunpack.c.l.b16 %v1413
    %v1635 = vunpack.c.l.b16 %v1414
    %v1636 = vunpack.c.l.b16 %v1415
    %v1637 = vunpack.c.l.b16 %v1416
    %v1638 = vunpack.c.l.b16 %v1417
    %v1639 = vunpack.c.l.b16 %v1418
    %v1640 = vunpack.c.l.b16 %v1419
    %v1641 = vunpack.c.l.b16 %v1420
    %v1642 = vunpack.c.l.b16 %v1421
    %v1643 = vunpack.c.l.b16 %v1422
    %v1644 = vunpack.c.l.b16 %v1423
    %v1645 = vunpack.c.l.b16 %v1424
    %v1646 = vunpack.c.l.b16 %v1425
    %v1647 = vunpack.c.l.b16 %v1426
    %v1648 = vunpack.c.l.b16 %v1427
    %v1649 = vunpack.c.l.b16 %v1428
    %v1650 = vunpack.c.l.b16 %v1429
    %v1651 = vunpack.c.l.b16 %v1430
    %v1652 = vunpack.c.l.b16 %v1431
    %v1653 = vunpack.c.l.b16 %v1432
    %v1654 = vunpack.c.l.b16 %v1433
    %v1655 = vunpack.c.l.b16 %v1434
    %v1656 = vunpack.c.l.b16 %v1435
    %v1657 = vunpack.c.l.b16 %v1436
    %v1658 = vunpack.c.l.b16 %v1437
    %v1659 = vunpack.c.l.b16 %v1438
    %v1660 = vunpack.c.l.b16 %v1439
    %v1661 = vunpack.c.l.b16 %v1440
    %v1662 = vunpack.c.l.b16 %v1441
    %v1663 = vunpack.c.l.b16 %v1442
    %v1664 = vunpack.c.l.b16 %v1443
    %v1665 = vunpack.c.l.b16 %v1444
    %v1666 = vunpack.c.l.b16 %v1445
    %v1667 = vunpack.c.l.b16 %v1446
    %v1668 = vunpack.c.l.b16 %v1447
    %v1669 = vunpack.c.l.b16 %v1448
    %v1670 = vunpack.c.l.b16 %v1449
    %v1671 = vunpack.c.l.b16 %v1450
    %v1672 = vunpack.c.l.b16 %v1451
    %v1673 = vunpack.c.l.b16 %v1452
    %v1674 = vunpack.c.l.b16 %v1453
    %v1675 = vunpack.c.l.b16 %v1454
    %v1676 = vunpack.c.l.b16 %v1455
    %v1677 = vunpack.c.l.b16 %v1456
    %v1678 = vunpack.c.l.b16 %v1457
    %v1679 = vunpack.c.l.b16 %v1458
    %v1680 = vunpack.c.l.b16 %v1459
    %v1681 = vunpack.c.l.b16 %v1460
    %v1682 = vunpack.c.l.b16 %v1461
    %v1683 = vunpack.c.l.b16 %v1462
    %v1684 = vunpack.c.l.b16 %v1463
    %v1685 = vunpack.c.l.b16 %v1464
    %v1686 = vunpack.c.l.b16 %v1465
    %v1687 = vunpack.c.l.b16 %v1466
    %v1688 = vunpack.c.l.b16 %v1467
    %v1689 = vunpack.c.l.b16 %v1468
    %v1690 = vunpack.c.l.b16 %v1469
    %v1691 = vunpack.c.l.b16 %v1470
    %v1692 = vunpack.c.l.b16 %v1471
    %v1693 = vunpack.c.l.b16 %v1472
    %v1694 = vunpack.c.l.b16 %v1473
    %v1695 = vunpack.c.l.b16 %v1474
    %v1696 = vpack.c.b16 %v1601, %v1600
    %v1697 = vpack.c.b16 %v1603, %v1602
    %v1698 = vpack.c.b16 %v1605, %v1604
    %v1699 = vpack.c.b16 %v1607, %v1606
    %v1700 = vpack.c.b16 %v1609, %v1608
    %v1701 = vpack.c.b16 %v1611, %v1610
    %v1702 = vpack.c.b16 %v1613, %v1612
    %v1703 = vpack.c.b16 %v1615, %v1614
    %v1704 = vpack.c.b16 %v1617, %v1616
    %v1705 = vpack.c.b16 %v1619, %v1618
    %v1706 = vpack.c.b16 %v1621, %v1620
    %v1707 = vpack.c.b16 %v1623, %v1622
    %v1708 = vpack.c.b16 %v1625, %v1624
    %v1709 = vpack.c.b16 %v1627, %v1626
    %v1710 = vpack.c.b16 %v1629, %v1628
    %v1711 = vpack.c.b16 %v1631, %v1630
    %v1712 = vpack.c.b16 %v1633, %v1632
    %v1713 = vpack.c.b16 %v1635, %v1634
    %v1714 = vpack.c.b16 %v1637, %v1636
    %v1715 = vpack.c.b16 %v1639, %v1638
    %v1716 = vpack.c.b16 %v1641, %v1640
    %v1717 = vpack.c.b16 %v1643, %v1642
    %v1718 = vpack.c.b16 %v1645, %v1644
    %v1719 = vpack.c.b16 %v1647, %v1646
    %v1720 = vpack.c.b16 %v1649, %v1648
    %v1721 = vpack.c.b16 %v1651, %v1650
    %v1722 = vpack.c.b16 %v1653, %v1652
    %v1723 = vpack.c.b16 %v1655, %v1654
    %v1724 = vpack.c.b16 %v1657, %v1656
    %v1725 = vpack.c.b16 %v1659, %v1658
    %v1726 = vpack.c.b16 %v1661, %v1660
    %v1727 = vpack.c.b16 %v1663, %v1662
    %v1728 = vpack.c.b16 %v1665, %v1664
    %v1729 = vpack.c.b16 %v1667, %v1666
    %v1730 = vpack.c.b16 %v1669, %v1668
    %v1731 = vpack.c.b16 %v1671, %v1670
    %v1732 = vpack.c.b16 %v1673, %v1672
    %v1733 = vpack.c.b16 %v1675, %v1674
    %v1734 = vpack.c.b16 %v1677, %v1676
    %v1735 = vpack.c.b16 %v1679, %v1678
    %v1736 = vpack.c.b16 %v1681, %v1680
    %v1737 = vpack.c.b16 %v1683, %v1682
    %v1738 = vpack.c.b16 %v1685, %v1684
    %v1739 = vpack.c.b16 %v1687, %v1686
    %v1740 = vpack.c.b16 %v1689, %v1688
    %v1741 = vpack.c.b16 %v1691, %v1690
    %v1742 = vpack.c.b16 %v1693, %v1692
    %v1743 = vpack.c.b16 %v1695, %v1694
    %1792 = vmatprep.subr.bf16.mxu0 0
    %1793 = vmatpush1.bf16.msra.mxu0 %v1696
    %1794 = vmatprep.subr.bf16.mxu0 0
    %1795 = vmatpush1.bf16.msra.mxu0 %v1697
    %1796 = vmatprep.subr.bf16.mxu0 0
    %1797 = vmatpush1.bf16.msra.mxu0 %v1698
    %1798 = vmatprep.subr.bf16.mxu0 0
    %1799 = vmatpush1.bf16.msra.mxu0 %v1699
    %1800 = vmatprep.subr.bf16.mxu0 0
    %1801 = vmatpush1.bf16.msra.mxu0 %v1700
    %1802 = vmatprep.subr.bf16.mxu0 0
    %1803 = vmatpush1.bf16.msra.mxu0 %v1701
    %1804 = vmatprep.subr.bf16.mxu0 0
    %1805 = vmatpush1.bf16.msra.mxu0 %v1702
    %1806 = vmatprep.subr.bf16.mxu0 0
    %1807 = vmatpush1.bf16.msra.mxu0 %v1703
    %1808 = vmatprep.subr.bf16.mxu0 0
    %1809 = vmatpush1.bf16.msra.mxu0 %v1704
    %1810 = vmatprep.subr.bf16.mxu0 0
    %1811 = vmatpush1.bf16.msra.mxu0 %v1705
    %1812 = vmatprep.subr.bf16.mxu0 0
    %1813 = vmatpush1.bf16.msra.mxu0 %v1706
    %1814 = vmatprep.subr.bf16.mxu0 0
    %1815 = vmatpush1.bf16.msra.mxu0 %v1707
    %1816 = vmatprep.subr.bf16.mxu0 0
    %1817 = vmatpush1.bf16.msra.mxu0 %v1708
    %1818 = vmatprep.subr.bf16.mxu0 0
    %1819 = vmatpush1.bf16.msra.mxu0 %v1709
    %1820 = vmatprep.subr.bf16.mxu0 0
    %1821 = vmatpush1.bf16.msra.mxu0 %v1710
    %1822 = vmatprep.subr.bf16.mxu0 0
    %1823 = vmatpush1.bf16.msra.mxu0 %v1711
    %1824 = vmatprep.mubr.bf16.mxu0 %v1495
    %1825 = vmatmul.mubr.bf16.gmra.mrb[0].mxu0 %v1494
    %v1826 = vpop.f32.mrb[0].mxu0
    %v1827 = vadd.f32 %v1503, %v1826
    %v1828 = vpop.f32.mrb[0].mxu0
    %v1829 = vpop.f32.mrb[0].mxu0
    %v1830 = vpop.f32.mrb[0].mxu0
    %1831 = vdwg.mxu0
    %1832 = vmatprep.subr.bf16.mxu0 0
    %1833 = vmatpush1.bf16.msra.mxu0 %v1712
    %1834 = vmatprep.subr.bf16.mxu0 0
    %1835 = vmatpush1.bf16.msra.mxu0 %v1713
    %1836 = vmatprep.subr.bf16.mxu0 0
    %1837 = vmatpush1.bf16.msra.mxu0 %v1714
    %1838 = vmatprep.subr.bf16.mxu0 0
    %1839 = vmatpush1.bf16.msra.mxu0 %v1715
    %1840 = vmatprep.subr.bf16.mxu0 0
    %1841 = vmatpush1.bf16.msra.mxu0 %v1716
    %1842 = vmatprep.subr.bf16.mxu0 0
    %1843 = vmatpush1.bf16.msra.mxu0 %v1717
    %1844 = vmatprep.subr.bf16.mxu0 0
    %1845 = vmatpush1.bf16.msra.mxu0 %v1718
    %1846 = vmatprep.subr.bf16.mxu0 0
    %1847 = vmatpush1.bf16.msra.mxu0 %v1719
    %1848 = vmatprep.subr.bf16.mxu0 0
    %1849 = vmatpush1.bf16.msra.mxu0 %v1720
    %1850 = vmatprep.subr.bf16.mxu0 0
    %1851 = vmatpush1.bf16.msra.mxu0 %v1721
    %1852 = vmatprep.subr.bf16.mxu0 0
    %1853 = vmatpush1.bf16.msra.mxu0 %v1722
    %1854 = vmatprep.subr.bf16.mxu0 0
    %1855 = vmatpush1.bf16.msra.mxu0 %v1723
    %1856 = vmatprep.subr.bf16.mxu0 0
    %1857 = vmatpush1.bf16.msra.mxu0 %v1724
    %1858 = vmatprep.subr.bf16.mxu0 0
    %1859 = vmatpush1.bf16.msra.mxu0 %v1725
    %1860 = vmatprep.subr.bf16.mxu0 0
    %1861 = vmatpush1.bf16.msra.mxu0 %v1726
    %1862 = vmatprep.subr.bf16.mxu0 0
    %1863 = vmatpush1.bf16.msra.mxu0 %v1727
    %1864 = vmatprep.mubr.bf16.mxu0 %v1497
    %1865 = vmatmul.mubr.bf16.gmra.mrb[0].mxu0 %v1496
    %v1866 = vpop.f32.mrb[0].mxu0
    %v1867 = vadd.f32 %v1827, %v1866
    %v1868 = vpop.f32.mrb[0].mxu0
    %v1869 = vpop.f32.mrb[0].mxu0
    %v1870 = vpop.f32.mrb[0].mxu0
    %1871 = vdwg.mxu0
    %1872 = vmatprep.subr.bf16.mxu0 0
    %1873 = vmatpush1.bf16.msra.mxu0 %v1728
    %1874 = vmatprep.subr.bf16.mxu0 0
    %1875 = vmatpush1.bf16.msra.mxu0 %v1729
    %1876 = vmatprep.subr.bf16.mxu0 0
    %1877 = vmatpush1.bf16.msra.mxu0 %v1730
    %1878 = vmatprep.subr.bf16.mxu0 0
    %1879 = vmatpush1.bf16.msra.mxu0 %v1731
    %1880 = vmatprep.subr.bf16.mxu0 0
    %1881 = vmatpush1.bf16.msra.mxu0 %v1732
    %1882 = vmatprep.subr.bf16.mxu0 0
    %1883 = vmatpush1.bf16.msra.mxu0 %v1733
    %1884 = vmatprep.subr.bf16.mxu0 0
    %1885 = vmatpush1.bf16.msra.mxu0 %v1734
    %1886 = vmatprep.subr.bf16.mxu0 0
    %1887 = vmatpush1.bf16.msra.mxu0 %v1735
    %1888 = vmatprep.subr.bf16.mxu0 0
    %1889 = vmatpush1.bf16.msra.mxu0 %v1736
    %1890 = vmatprep.subr.bf16.mxu0 0
    %1891 = vmatpush1.bf16.msra.mxu0 %v1737
    %1892 = vmatprep.subr.bf16.mxu0 0
    %1893 = vmatpush1.bf16.msra.mxu0 %v1738
    %1894 = vmatprep.subr.bf16.mxu0 0
    %1895 = vmatpush1.bf16.msra.mxu0 %v1739
    %1896 = vmatprep.subr.bf16.mxu0 0
    %1897 = vmatpush1.bf16.msra.mxu0 %v1740
    %1898 = vmatprep.subr.bf16.mxu0 0
    %1899 = vmatpush1.bf16.msra.mxu0 %v1741
    %1900 = vmatprep.subr.bf16.mxu0 0
    %1901 = vmatpush1.bf16.msra.mxu0 %v1742
    %1902 = vmatprep.subr.bf16.mxu0 0
    %1903 = vmatpush1.bf16.msra.mxu0 %v1743
    %1904 = vmatprep.mubr.bf16.mxu0 %v1499
    %1905 = vmatmul.mubr.bf16.gmra.mrb[0].mxu0 %v1498
    %v1906 = vpop.f32.mrb[0].mxu0
    %v1907 = vadd.f32 %v1867, %v1906
    %v1908 = vpop.f32.mrb[0].mxu0
    %v1909 = vpop.f32.mrb[0].mxu0
    %v1910 = vpop.f32.mrb[0].mxu0
    %1911 = vdwg.mxu0
    %1912 = vadd.xlane.f32.xlu0 %v1907
    %v1913 = vpop.xlane.xlu0 %1912
    %v1914 = vmul.f32 %v1913, %v602
    %v1915 = vsub.f32 %v1907, %v1914
    %v1916 = vmul.f32 %v1915, %v1915
    %1917 = vadd.xlane.f32.xlu0 %v1916
    %v1918 = vpop.xlane.xlu0 %1917
    %v1919 = vmul.f32 %v1918, %v602
    %v1920 = vadd.f32 %v1919, 1e-05
    %v1921 = vrsqrt.pop %v1920
    %v1922 = vmul.f32 %v1915, %v1921
    %v1923 = vlaneseq
    %v1924 = vshrl.u32 %v1923, 7
    %v1925 = vsub.s32 1, %v1924
    %v1926 = vrot.slane %v1476, %v1925
    %v1927 = vmul.f32 %v1922, %v1926
    %v1928 = vlaneseq
    %v1929 = vshrl.u32 %v1928, 7
    %v1930 = vsub.s32 2, %v1929
    %v1931 = vrot.slane %v1476, %v1930
    %v1932 = vadd.f32 %v1927, %v1931
    %v1933 = vmax.f32 %v1932, 0.0
    %v1934 = vpack.c.bf16 %v1933, %v1933
    %v1935 = vlaneseq
    %v1936 = vshrl.u32 %v1935, 7
    %v1937 = vsub.s32 3, %v1936
    %v1938 = vrot.slane %v1476, %v1937
    %v1955 = vunpack.c.l.b16 %v1478
    %v1956 = vunpack.c.l.b16 %v1479
    %v1957 = vunpack.c.l.b16 %v1480
    %v1958 = vunpack.c.l.b16 %v1481
    %v1959 = vunpack.c.l.b16 %v1482
    %v1960 = vunpack.c.l.b16 %v1483
    %v1961 = vunpack.c.l.b16 %v1484
    %v1962 = vunpack.c.l.b16 %v1485
    %v1963 = vunpack.c.l.b16 %v1486
    %v1964 = vunpack.c.l.b16 %v1487
    %v1965 = vunpack.c.l.b16 %v1488
    %v1966 = vunpack.c.l.b16 %v1489
    %v1967 = vunpack.c.l.b16 %v1490
    %v1968 = vunpack.c.l.b16 %v1491
    %v1969 = vunpack.c.l.b16 %v1492
    %v1970 = vunpack.c.l.b16 %v1493
    %v1971 = vpack.c.b16 %v1956, %v1955
    %v1972 = vpack.c.b16 %v1958, %v1957
    %v1973 = vpack.c.b16 %v1960, %v1959
    %v1974 = vpack.c.b16 %v1962, %v1961
    %v1975 = vpack.c.b16 %v1964, %v1963
    %v1976 = vpack.c.b16 %v1966, %v1965
    %v1977 = vpack.c.b16 %v1968, %v1967
    %v1978 = vpack.c.b16 %v1970, %v1969
    %1987 = vmatprep.subr.bf16.mxu0 0
    %1988 = vmatpush1.bf16.msra.mxu0 %v1971
    %1989 = vmatprep.subr.bf16.mxu0 0
    %1990 = vmatpush1.bf16.msra.mxu0 %v1972
    %1991 = vmatprep.subr.bf16.mxu0 0
    %1992 = vmatpush1.bf16.msra.mxu0 %v1973
    %1993 = vmatprep.subr.bf16.mxu0 0
    %1994 = vmatpush1.bf16.msra.mxu0 %v1974
    %1995 = vmatprep.subr.bf16.mxu0 0
    %1996 = vmatpush1.bf16.msra.mxu0 %v1975
    %1997 = vmatprep.subr.bf16.mxu0 0
    %1998 = vmatpush1.bf16.msra.mxu0 %v1976
    %1999 = vmatprep.subr.bf16.mxu0 0
    %2000 = vmatpush1.bf16.msra.mxu0 %v1977
    %2001 = vmatprep.subr.bf16.mxu0 0
    %2002 = vmatpush1.bf16.msra.mxu0 %v1978
    %2003 = vmatprep.subr.bf16.mxu0 0
    %2004 = vmatpush1.bf16.msra.mxu0 0
    %2005 = vmatprep.subr.bf16.mxu0 0
    %2006 = vmatpush1.bf16.msra.mxu0 0
    %2007 = vmatprep.subr.bf16.mxu0 0
    %2008 = vmatpush1.bf16.msra.mxu0 0
    %2009 = vmatprep.subr.bf16.mxu0 0
    %2010 = vmatpush1.bf16.msra.mxu0 0
    %2011 = vmatprep.subr.bf16.mxu0 0
    %2012 = vmatpush1.bf16.msra.mxu0 0
    %2013 = vmatprep.subr.bf16.mxu0 0
    %2014 = vmatpush1.bf16.msra.mxu0 0
    %2015 = vmatprep.subr.bf16.mxu0 0
    %2016 = vmatpush1.bf16.msra.mxu0 0
    %2017 = vmatprep.subr.bf16.mxu0 0
    %2018 = vmatpush1.bf16.msra.mxu0 0
    %2019 = vmatprep.mubr.bf16.mxu0 0
    %2020 = vmatmul.mubr.bf16.gmra.mrb[0].mxu0 %v1934
    %v2021 = vpop.f32.mrb[0].mxu0
    %v2022 = vadd.f32 %v1938, %v2021
    %v2023 = vpop.f32.mrb[0].mxu0
    %v2024 = vpop.f32.mrb[0].mxu0
    %v2025 = vpop.f32.mrb[0].mxu0
    %2026 = vdwg.mxu0
    %v2027 = vmul.f32 %v1371, %v2022
    %v2028 = vld [vmem:[%s5] sm:$0xff]
    %v2029 = vld [vmem:[%s5 + $0x8] sm:$0xff]
    %v2030 = vld [vmem:[%s5 + $0x10] sm:$0xff]
    %v2031 = vld [vmem:[%s5 + $0x18] sm:$0xff]
    %v2032 = vld [vmem:[%s5 + $0x20] sm:$0xff]
    %v2033 = vld [vmem:[%s5 + $0x28] sm:$0xff]
    %s2034 = scalar_lea.vmem [#allocation5], 1536
    %v2035 = vld [vmem:[%s2034] sm:$0xf]
    %v2036 = vld [vmem:[%s2034 + $0x4] sm:$0xf]
    %v2037 = vld [vmem:[%s2034 + $0x8] sm:$0xf]
    %v2038 = vld [vmem:[%s2034 + $0xc] sm:$0xf]
    %v2039 = vld [vmem:[%s2034 + $0x10] sm:$0xf]
    %v2040 = vld [vmem:[%s2034 + $0x14] sm:$0xf]
    %v2041 = vld [vmem:[%s2034 + $0x18] sm:$0xf]
    %v2042 = vld [vmem:[%s2034 + $0x1c] sm:$0xf]
    %v2043 = vld [vmem:[%s2034 + $0x20] sm:$0xf]
    %v2044 = vld [vmem:[%s2034 + $0x24] sm:$0xf]
    %v2045 = vld [vmem:[%s2034 + $0x28] sm:$0xf]
    %v2046 = vld [vmem:[%s2034 + $0x2c] sm:$0xf]
    %v2047 = vld [vmem:[%s2034 + $0x30] sm:$0xf]
    %v2048 = vld [vmem:[%s2034 + $0x34] sm:$0xf]
    %v2049 = vld [vmem:[%s2034 + $0x38] sm:$0xf]
    %v2050 = vld [vmem:[%s2034 + $0x3c] sm:$0xf]
    %v2051 = vld [vmem:[%s2034 + $0x40] sm:$0xf]
    %v2052 = vld [vmem:[%s2034 + $0x44] sm:$0xf]
    %v2053 = vld [vmem:[%s2034 + $0x48] sm:$0xf]
    %v2054 = vld [vmem:[%s2034 + $0x4c] sm:$0xf]
    %v2055 = vld [vmem:[%s2034 + $0x50] sm:$0xf]
    %v2056 = vld [vmem:[%s2034 + $0x54] sm:$0xf]
    %v2057 = vld [vmem:[%s2034 + $0x58] sm:$0xf]
    %v2058 = vld [vmem:[%s2034 + $0x5c] sm:$0xf]
    %v2059 = vld [vmem:[%s2034 + $0x60] sm:$0xf]
    %v2060 = vld [vmem:[%s2034 + $0x64] sm:$0xf]
    %v2061 = vld [vmem:[%s2034 + $0x68] sm:$0xf]
    %v2062 = vld [vmem:[%s2034 + $0x6c] sm:$0xf]
    %v2063 = vld [vmem:[%s2034 + $0x70] sm:$0xf]
    %v2064 = vld [vmem:[%s2034 + $0x74] sm:$0xf]
    %v2065 = vld [vmem:[%s2034 + $0x78] sm:$0xf]
    %v2066 = vld [vmem:[%s2034 + $0x7c] sm:$0xf]
    %v2067 = vld [vmem:[%s2034 + $0x80] sm:$0xf]
    %v2068 = vld [vmem:[%s2034 + $0x84] sm:$0xf]
    %v2069 = vld [vmem:[%s2034 + $0x88] sm:$0xf]
    %v2070 = vld [vmem:[%s2034 + $0x8c] sm:$0xf]
    %v2071 = vld [vmem:[%s2034 + $0x90] sm:$0xf]
    %v2072 = vld [vmem:[%s2034 + $0x94] sm:$0xf]
    %v2073 = vld [vmem:[%s2034 + $0x98] sm:$0xf]
    %v2074 = vld [vmem:[%s2034 + $0x9c] sm:$0xf]
    %v2075 = vld [vmem:[%s2034 + $0xa0] sm:$0xf]
    %v2076 = vld [vmem:[%s2034 + $0xa4] sm:$0xf]
    %v2077 = vld [vmem:[%s2034 + $0xa8] sm:$0xf]
    %v2078 = vld [vmem:[%s2034 + $0xac] sm:$0xf]
    %v2079 = vld [vmem:[%s2034 + $0xb0] sm:$0xf]
    %v2080 = vld [vmem:[%s2034 + $0xb4] sm:$0xf]
    %v2081 = vld [vmem:[%s2034 + $0xb8] sm:$0xf]
    %v2082 = vld [vmem:[%s2034 + $0xbc] sm:$0xf]
    %v2083 = vld [vmem:[%s2034 + $0xc0] sm:$0xf]
    %v2084 = vld [vmem:[%s2034 + $0xc4] sm:$0xf]
    %v2085 = vld [vmem:[%s2034 + $0xc8] sm:$0xf]
    %v2086 = vld [vmem:[%s2034 + $0xcc] sm:$0xf]
    %v2087 = vld [vmem:[%s2034 + $0xd0] sm:$0xf]
    %v2088 = vld [vmem:[%s2034 + $0xd4] sm:$0xf]
    %v2089 = vld [vmem:[%s2034 + $0xd8] sm:$0xf]
    %v2090 = vld [vmem:[%s2034 + $0xdc] sm:$0xf]
    %v2091 = vld [vmem:[%s2034 + $0xe0] sm:$0xf]
    %v2092 = vld [vmem:[%s2034 + $0xe4] sm:$0xf]
    %v2093 = vld [vmem:[%s2034 + $0xe8] sm:$0xf]
    %v2094 = vld [vmem:[%s2034 + $0xec] sm:$0xf]
    %v2095 = vld [vmem:[%s2034 + $0xf0] sm:$0xf]
    %v2096 = vld [vmem:[%s2034 + $0xf4] sm:$0xf]
    %v2097 = vld [vmem:[%s2034 + $0xf8] sm:$0xf]
    %v2098 = vld [vmem:[%s2034 + $0xfc] sm:$0xf]
    %v2099 = vld [vmem:[%s2034 + $0x100] sm:$0xf]
    %v2100 = vld [vmem:[%s2034 + $0x104] sm:$0xf]
    %v2101 = vld [vmem:[%s2034 + $0x108] sm:$0xf]
    %v2102 = vld [vmem:[%s2034 + $0x10c] sm:$0xf]
    %v2103 = vld [vmem:[%s2034 + $0x110] sm:$0xf]
    %v2104 = vld [vmem:[%s2034 + $0x114] sm:$0xf]
    %v2105 = vld [vmem:[%s2034 + $0x118] sm:$0xf]
    %v2106 = vld [vmem:[%s2034 + $0x11c] sm:$0xf]
    %v2107 = vld [vmem:[%s2034 + $0x120] sm:$0xf]
    %v2108 = vld [vmem:[%s2034 + $0x124] sm:$0xf]
    %v2109 = vld [vmem:[%s2034 + $0x128] sm:$0xf]
    %v2110 = vld [vmem:[%s2034 + $0x12c] sm:$0xf]
    %v2111 = vld [vmem:[%s2034 + $0x130] sm:$0xf]
    %v2112 = vld [vmem:[%s2034 + $0x134] sm:$0xf]
    %v2113 = vld [vmem:[%s2034 + $0x138] sm:$0xf]
    %v2114 = vld [vmem:[%s2034 + $0x13c] sm:$0xf]
    %v2115 = vld [vmem:[%s2034 + $0x140] sm:$0xf]
    %v2116 = vld [vmem:[%s2034 + $0x144] sm:$0xf]
    %v2117 = vld [vmem:[%s2034 + $0x148] sm:$0xf]
    %v2118 = vld [vmem:[%s2034 + $0x14c] sm:$0xf]
    %v2119 = vld [vmem:[%s2034 + $0x150] sm:$0xf]
    %v2120 = vld [vmem:[%s2034 + $0x154] sm:$0xf]
    %v2121 = vld [vmem:[%s2034 + $0x158] sm:$0xf]
    %v2122 = vld [vmem:[%s2034 + $0x15c] sm:$0xf]
    %v2123 = vld [vmem:[%s2034 + $0x160] sm:$0xf]
    %v2124 = vld [vmem:[%s2034 + $0x164] sm:$0xf]
    %v2125 = vld [vmem:[%s2034 + $0x168] sm:$0xf]
    %v2126 = vld [vmem:[%s2034 + $0x16c] sm:$0xf]
    %v2127 = vld [vmem:[%s2034 + $0x170] sm:$0xf]
    %v2128 = vld [vmem:[%s2034 + $0x174] sm:$0xf]
    %v2129 = vld [vmem:[%s2034 + $0x178] sm:$0xf]
    %v2130 = vld [vmem:[%s2034 + $0x17c] sm:$0xf]
    %s2131 = scalar_lea.vmem %s7, 16
    %v2132 = vld [vmem:[%s2131] sm:$0xf]
    %s2133 = scalar_lea.vmem %s8, 256
    %v2134 = vld [vmem:[%s2133] sm:$0xf]
    %v2135 = vld [vmem:[%s2133 + $0x4] sm:$0xf]
    %v2136 = vld [vmem:[%s2133 + $0x8] sm:$0xf]
    %v2137 = vld [vmem:[%s2133 + $0xc] sm:$0xf]
    %v2138 = vld [vmem:[%s2133 + $0x10] sm:$0xf]
    %v2139 = vld [vmem:[%s2133 + $0x14] sm:$0xf]
    %v2140 = vld [vmem:[%s2133 + $0x18] sm:$0xf]
    %v2141 = vld [vmem:[%s2133 + $0x1c] sm:$0xf]
    %v2142 = vld [vmem:[%s2133 + $0x20] sm:$0xf]
    %v2143 = vld [vmem:[%s2133 + $0x24] sm:$0xf]
    %v2144 = vld [vmem:[%s2133 + $0x28] sm:$0xf]
    %v2145 = vld [vmem:[%s2133 + $0x2c] sm:$0xf]
    %v2146 = vld [vmem:[%s2133 + $0x30] sm:$0xf]
    %v2147 = vld [vmem:[%s2133 + $0x34] sm:$0xf]
    %v2148 = vld [vmem:[%s2133 + $0x38] sm:$0xf]
    %v2149 = vld [vmem:[%s2133 + $0x3c] sm:$0xf]
    %v2150 = vpack.c.bf16 %v2028, %v2028
    %v2151 = vpack.c.bf16 %v2029, %v2029
    %v2152 = vpack.c.bf16 %v2030, %v2030
    %v2153 = vpack.c.bf16 %v2031, %v2031
    %v2154 = vpack.c.bf16 %v2032, %v2032
    %v2155 = vpack.c.bf16 %v2033, %v2033
    %v2156 = vlaneseq
    %v2157 = vshrl.u32 %v2156, 7
    %v2158 = vsub.s32 0, %v2157
    %v2159 = vrot.slane %v2132, %v2158
    %v2256 = vunpack.c.l.b16 %v2035
    %v2257 = vunpack.c.l.b16 %v2036
    %v2258 = vunpack.c.l.b16 %v2037
    %v2259 = vunpack.c.l.b16 %v2038
    %v2260 = vunpack.c.l.b16 %v2039
    %v2261 = vunpack.c.l.b16 %v2040
    %v2262 = vunpack.c.l.b16 %v2041
    %v2263 = vunpack.c.l.b16 %v2042
    %v2264 = vunpack.c.l.b16 %v2043
    %v2265 = vunpack.c.l.b16 %v2044
    %v2266 = vunpack.c.l.b16 %v2045
    %v2267 = vunpack.c.l.b16 %v2046
    %v2268 = vunpack.c.l.b16 %v2047
    %v2269 = vunpack.c.l.b16 %v2048
    %v2270 = vunpack.c.l.b16 %v2049
    %v2271 = vunpack.c.l.b16 %v2050
    %v2272 = vunpack.c.l.b16 %v2051
    %v2273 = vunpack.c.l.b16 %v2052
    %v2274 = vunpack.c.l.b16 %v2053
    %v2275 = vunpack.c.l.b16 %v2054
    %v2276 = vunpack.c.l.b16 %v2055
    %v2277 = vunpack.c.l.b16 %v2056
    %v2278 = vunpack.c.l.b16 %v2057
    %v2279 = vunpack.c.l.b16 %v2058
    %v2280 = vunpack.c.l.b16 %v2059
    %v2281 = vunpack.c.l.b16 %v2060
    %v2282 = vunpack.c.l.b16 %v2061
    %v2283 = vunpack.c.l.b16 %v2062
    %v2284 = vunpack.c.l.b16 %v2063
    %v2285 = vunpack.c.l.b16 %v2064
    %v2286 = vunpack.c.l.b16 %v2065
    %v2287 = vunpack.c.l.b16 %v2066
    %v2288 = vunpack.c.l.b16 %v2067
    %v2289 = vunpack.c.l.b16 %v2068
    %v2290 = vunpack.c.l.b16 %v2069
    %v2291 = vunpack.c.l.b16 %v2070
    %v2292 = vunpack.c.l.b16 %v2071
    %v2293 = vunpack.c.l.b16 %v2072
    %v2294 = vunpack.c.l.b16 %v2073
    %v2295 = vunpack.c.l.b16 %v2074
    %v2296 = vunpack.c.l.b16 %v2075
    %v2297 = vunpack.c.l.b16 %v2076
    %v2298 = vunpack.c.l.b16 %v2077
    %v2299 = vunpack.c.l.b16 %v2078
    %v2300 = vunpack.c.l.b16 %v2079
    %v2301 = vunpack.c.l.b16 %v2080
    %v2302 = vunpack.c.l.b16 %v2081
    %v2303 = vunpack.c.l.b16 %v2082
    %v2304 = vunpack.c.l.b16 %v2083
    %v2305 = vunpack.c.l.b16 %v2084
    %v2306 = vunpack.c.l.b16 %v2085
    %v2307 = vunpack.c.l.b16 %v2086
    %v2308 = vunpack.c.l.b16 %v2087
    %v2309 = vunpack.c.l.b16 %v2088
    %v2310 = vunpack.c.l.b16 %v2089
    %v2311 = vunpack.c.l.b16 %v2090
    %v2312 = vunpack.c.l.b16 %v2091
    %v2313 = vunpack.c.l.b16 %v2092
    %v2314 = vunpack.c.l.b16 %v2093
    %v2315 = vunpack.c.l.b16 %v2094
    %v2316 = vunpack.c.l.b16 %v2095
    %v2317 = vunpack.c.l.b16 %v2096
    %v2318 = vunpack.c.l.b16 %v2097
    %v2319 = vunpack.c.l.b16 %v2098
    %v2320 = vunpack.c.l.b16 %v2099
    %v2321 = vunpack.c.l.b16 %v2100
    %v2322 = vunpack.c.l.b16 %v2101
    %v2323 = vunpack.c.l.b16 %v2102
    %v2324 = vunpack.c.l.b16 %v2103
    %v2325 = vunpack.c.l.b16 %v2104
    %v2326 = vunpack.c.l.b16 %v2105
    %v2327 = vunpack.c.l.b16 %v2106
    %v2328 = vunpack.c.l.b16 %v2107
    %v2329 = vunpack.c.l.b16 %v2108
    %v2330 = vunpack.c.l.b16 %v2109
    %v2331 = vunpack.c.l.b16 %v2110
    %v2332 = vunpack.c.l.b16 %v2111
    %v2333 = vunpack.c.l.b16 %v2112
    %v2334 = vunpack.c.l.b16 %v2113
    %v2335 = vunpack.c.l.b16 %v2114
    %v2336 = vunpack.c.l.b16 %v2115
    %v2337 = vunpack.c.l.b16 %v2116
    %v2338 = vunpack.c.l.b16 %v2117
    %v2339 = vunpack.c.l.b16 %v2118
    %v2340 = vunpack.c.l.b16 %v2119
    %v2341 = vunpack.c.l.b16 %v2120
    %v2342 = vunpack.c.l.b16 %v2121
    %v2343 = vunpack.c.l.b16 %v2122
    %v2344 = vunpack.c.l.b16 %v2123
    %v2345 = vunpack.c.l.b16 %v2124
    %v2346 = vunpack.c.l.b16 %v2125
    %v2347 = vunpack.c.l.b16 %v2126
    %v2348 = vunpack.c.l.b16 %v2127
    %v2349 = vunpack.c.l.b16 %v2128
    %v2350 = vunpack.c.l.b16 %v2129
    %v2351 = vunpack.c.l.b16 %v2130
    %v2352 = vpack.c.b16 %v2257, %v2256
    %v2353 = vpack.c.b16 %v2259, %v2258
    %v2354 = vpack.c.b16 %v2261, %v2260
    %v2355 = vpack.c.b16 %v2263, %v2262
    %v2356 = vpack.c.b16 %v2265, %v2264
    %v2357 = vpack.c.b16 %v2267, %v2266
    %v2358 = vpack.c.b16 %v2269, %v2268
    %v2359 = vpack.c.b16 %v2271, %v2270
    %v2360 = vpack.c.b16 %v2273, %v2272
    %v2361 = vpack.c.b16 %v2275, %v2274
    %v2362 = vpack.c.b16 %v2277, %v2276
    %v2363 = vpack.c.b16 %v2279, %v2278
    %v2364 = vpack.c.b16 %v2281, %v2280
    %v2365 = vpack.c.b16 %v2283, %v2282
    %v2366 = vpack.c.b16 %v2285, %v2284
    %v2367 = vpack.c.b16 %v2287, %v2286
    %v2368 = vpack.c.b16 %v2289, %v2288
    %v2369 = vpack.c.b16 %v2291, %v2290
    %v2370 = vpack.c.b16 %v2293, %v2292
    %v2371 = vpack.c.b16 %v2295, %v2294
    %v2372 = vpack.c.b16 %v2297, %v2296
    %v2373 = vpack.c.b16 %v2299, %v2298
    %v2374 = vpack.c.b16 %v2301, %v2300
    %v2375 = vpack.c.b16 %v2303, %v2302
    %v2376 = vpack.c.b16 %v2305, %v2304
    %v2377 = vpack.c.b16 %v2307, %v2306
    %v2378 = vpack.c.b16 %v2309, %v2308
    %v2379 = vpack.c.b16 %v2311, %v2310
    %v2380 = vpack.c.b16 %v2313, %v2312
    %v2381 = vpack.c.b16 %v2315, %v2314
    %v2382 = vpack.c.b16 %v2317, %v2316
    %v2383 = vpack.c.b16 %v2319, %v2318
    %v2384 = vpack.c.b16 %v2321, %v2320
    %v2385 = vpack.c.b16 %v2323, %v2322
    %v2386 = vpack.c.b16 %v2325, %v2324
    %v2387 = vpack.c.b16 %v2327, %v2326
    %v2388 = vpack.c.b16 %v2329, %v2328
    %v2389 = vpack.c.b16 %v2331, %v2330
    %v2390 = vpack.c.b16 %v2333, %v2332
    %v2391 = vpack.c.b16 %v2335, %v2334
    %v2392 = vpack.c.b16 %v2337, %v2336
    %v2393 = vpack.c.b16 %v2339, %v2338
    %v2394 = vpack.c.b16 %v2341, %v2340
    %v2395 = vpack.c.b16 %v2343, %v2342
    %v2396 = vpack.c.b16 %v2345, %v2344
    %v2397 = vpack.c.b16 %v2347, %v2346
    %v2398 = vpack.c.b16 %v2349, %v2348
    %v2399 = vpack.c.b16 %v2351, %v2350
    %2448 = vmatprep.subr.bf16.mxu0 0
    %2449 = vmatpush1.bf16.msra.mxu0 %v2352
    %2450 = vmatprep.subr.bf16.mxu0 0
    %2451 = vmatpush1.bf16.msra.mxu0 %v2353
    %2452 = vmatprep.subr.bf16.mxu0 0
    %2453 = vmatpush1.bf16.msra.mxu0 %v2354
    %2454 = vmatprep.subr.bf16.mxu0 0
    %2455 = vmatpush1.bf16.msra.mxu0 %v2355
    %2456 = vmatprep.subr.bf16.mxu0 0
    %2457 = vmatpush1.bf16.msra.mxu0 %v2356
    %2458 = vmatprep.subr.bf16.mxu0 0
    %2459 = vmatpush1.bf16.msra.mxu0 %v2357
    %2460 = vmatprep.subr.bf16.mxu0 0
    %2461 = vmatpush1.bf16.msra.mxu0 %v2358
    %2462 = vmatprep.subr.bf16.mxu0 0
    %2463 = vmatpush1.bf16.msra.mxu0 %v2359
    %2464 = vmatprep.subr.bf16.mxu0 0
    %2465 = vmatpush1.bf16.msra.mxu0 %v2360
    %2466 = vmatprep.subr.bf16.mxu0 0
    %2467 = vmatpush1.bf16.msra.mxu0 %v2361
    %2468 = vmatprep.subr.bf16.mxu0 0
    %2469 = vmatpush1.bf16.msra.mxu0 %v2362
    %2470 = vmatprep.subr.bf16.mxu0 0
    %2471 = vmatpush1.bf16.msra.mxu0 %v2363
    %2472 = vmatprep.subr.bf16.mxu0 0
    %2473 = vmatpush1.bf16.msra.mxu0 %v2364
    %2474 = vmatprep.subr.bf16.mxu0 0
    %2475 = vmatpush1.bf16.msra.mxu0 %v2365
    %2476 = vmatprep.subr.bf16.mxu0 0
    %2477 = vmatpush1.bf16.msra.mxu0 %v2366
    %2478 = vmatprep.subr.bf16.mxu0 0
    %2479 = vmatpush1.bf16.msra.mxu0 %v2367
    %2480 = vmatprep.mubr.bf16.mxu0 %v2151
    %2481 = vmatmul.mubr.bf16.gmra.mrb[0].mxu0 %v2150
    %v2482 = vpop.f32.mrb[0].mxu0
    %v2483 = vadd.f32 %v2159, %v2482
    %v2484 = vpop.f32.mrb[0].mxu0
    %v2485 = vpop.f32.mrb[0].mxu0
    %v2486 = vpop.f32.mrb[0].mxu0
    %2487 = vdwg.mxu0
    %2488 = vmatprep.subr.bf16.mxu0 0
    %2489 = vmatpush1.bf16.msra.mxu0 %v2368
    %2490 = vmatprep.subr.bf16.mxu0 0
    %2491 = vmatpush1.bf16.msra.mxu0 %v2369
    %2492 = vmatprep.subr.bf16.mxu0 0
    %2493 = vmatpush1.bf16.msra.mxu0 %v2370
    %2494 = vmatprep.subr.bf16.mxu0 0
    %2495 = vmatpush1.bf16.msra.mxu0 %v2371
    %2496 = vmatprep.subr.bf16.mxu0 0
    %2497 = vmatpush1.bf16.msra.mxu0 %v2372
    %2498 = vmatprep.subr.bf16.mxu0 0
    %2499 = vmatpush1.bf16.msra.mxu0 %v2373
    %2500 = vmatprep.subr.bf16.mxu0 0
    %2501 = vmatpush1.bf16.msra.mxu0 %v2374
    %2502 = vmatprep.subr.bf16.mxu0 0
    %2503 = vmatpush1.bf16.msra.mxu0 %v2375
    %2504 = vmatprep.subr.bf16.mxu0 0
    %2505 = vmatpush1.bf16.msra.mxu0 %v2376
    %2506 = vmatprep.subr.bf16.mxu0 0
    %2507 = vmatpush1.bf16.msra.mxu0 %v2377
    %2508 = vmatprep.subr.bf16.mxu0 0
    %2509 = vmatpush1.bf16.msra.mxu0 %v2378
    %2510 = vmatprep.subr.bf16.mxu0 0
    %2511 = vmatpush1.bf16.msra.mxu0 %v2379
    %2512 = vmatprep.subr.bf16.mxu0 0
    %2513 = vmatpush1.bf16.msra.mxu0 %v2380
    %2514 = vmatprep.subr.bf16.mxu0 0
    %2515 = vmatpush1.bf16.msra.mxu0 %v2381
    %2516 = vmatprep.subr.bf16.mxu0 0
    %2517 = vmatpush1.bf16.msra.mxu0 %v2382
    %2518 = vmatprep.subr.bf16.mxu0 0
    %2519 = vmatpush1.bf16.msra.mxu0 %v2383
    %2520 = vmatprep.mubr.bf16.mxu0 %v2153
    %2521 = vmatmul.mubr.bf16.gmra.mrb[0].mxu0 %v2152
    %v2522 = vpop.f32.mrb[0].mxu0
    %v2523 = vadd.f32 %v2483, %v2522
    %v2524 = vpop.f32.mrb[0].mxu0
    %v2525 = vpop.f32.mrb[0].mxu0
    %v2526 = vpop.f32.mrb[0].mxu0
    %2527 = vdwg.mxu0
    %2528 = vmatprep.subr.bf16.mxu0 0
    %2529 = vmatpush1.bf16.msra.mxu0 %v2384
    %2530 = vmatprep.subr.bf16.mxu0 0
    %2531 = vmatpush1.bf16.msra.mxu0 %v2385
    %2532 = vmatprep.subr.bf16.mxu0 0
    %2533 = vmatpush1.bf16.msra.mxu0 %v2386
    %2534 = vmatprep.subr.bf16.mxu0 0
    %2535 = vmatpush1.bf16.msra.mxu0 %v2387
    %2536 = vmatprep.subr.bf16.mxu0 0
    %2537 = vmatpush1.bf16.msra.mxu0 %v2388
    %2538 = vmatprep.subr.bf16.mxu0 0
    %2539 = vmatpush1.bf16.msra.mxu0 %v2389
    %2540 = vmatprep.subr.bf16.mxu0 0
    %2541 = vmatpush1.bf16.msra.mxu0 %v2390
    %2542 = vmatprep.subr.bf16.mxu0 0
    %2543 = vmatpush1.bf16.msra.mxu0 %v2391
    %2544 = vmatprep.subr.bf16.mxu0 0
    %2545 = vmatpush1.bf16.msra.mxu0 %v2392
    %2546 = vmatprep.subr.bf16.mxu0 0
    %2547 = vmatpush1.bf16.msra.mxu0 %v2393
    %2548 = vmatprep.subr.bf16.mxu0 0
    %2549 = vmatpush1.bf16.msra.mxu0 %v2394
    %2550 = vmatprep.subr.bf16.mxu0 0
    %2551 = vmatpush1.bf16.msra.mxu0 %v2395
    %2552 = vmatprep.subr.bf16.mxu0 0
    %2553 = vmatpush1.bf16.msra.mxu0 %v2396
    %2554 = vmatprep.subr.bf16.mxu0 0
    %2555 = vmatpush1.bf16.msra.mxu0 %v2397
    %2556 = vmatprep.subr.bf16.mxu0 0
    %2557 = vmatpush1.bf16.msra.mxu0 %v2398
    %2558 = vmatprep.subr.bf16.mxu0 0
    %2559 = vmatpush1.bf16.msra.mxu0 %v2399
    %2560 = vmatprep.mubr.bf16.mxu0 %v2155
    %2561 = vmatmul.mubr.bf16.gmra.mrb[0].mxu0 %v2154
    %v2562 = vpop.f32.mrb[0].mxu0
    %v2563 = vadd.f32 %v2523, %v2562
    %v2564 = vpop.f32.mrb[0].mxu0
    %v2565 = vpop.f32.mrb[0].mxu0
    %v2566 = vpop.f32.mrb[0].mxu0
    %2567 = vdwg.mxu0
    %2568 = vadd.xlane.f32.xlu0 %v2563
    %v2569 = vpop.xlane.xlu0 %2568
    %v2570 = vmul.f32 %v2569, %v602
    %v2571 = vsub.f32 %v2563, %v2570
    %v2572 = vmul.f32 %v2571, %v2571
    %2573 = vadd.xlane.f32.xlu0 %v2572
    %v2574 = vpop.xlane.xlu0 %2573
    %v2575 = vmul.f32 %v2574, %v602
    %v2576 = vadd.f32 %v2575, 1e-05
    %v2577 = vrsqrt.pop %v2576
    %v2578 = vmul.f32 %v2571, %v2577
    %v2579 = vlaneseq
    %v2580 = vshrl.u32 %v2579, 7
    %v2581 = vsub.s32 1, %v2580
    %v2582 = vrot.slane %v2132, %v2581
    %v2583 = vmul.f32 %v2578, %v2582
    %v2584 = vlaneseq
    %v2585 = vshrl.u32 %v2584, 7
    %v2586 = vsub.s32 2, %v2585
    %v2587 = vrot.slane %v2132, %v2586
    %v2588 = vadd.f32 %v2583, %v2587
    %v2589 = vmax.f32 %v2588, 0.0
    %v2590 = vpack.c.bf16 %v2589, %v2589
    %v2591 = vlaneseq
    %v2592 = vshrl.u32 %v2591, 7
    %v2593 = vsub.s32 3, %v2592
    %v2594 = vrot.slane %v2132, %v2593
    %v2611 = vunpack.c.l.b16 %v2134
    %v2612 = vunpack.c.l.b16 %v2135
    %v2613 = vunpack.c.l.b16 %v2136
    %v2614 = vunpack.c.l.b16 %v2137
    %v2615 = vunpack.c.l.b16 %v2138
    %v2616 = vunpack.c.l.b16 %v2139
    %v2617 = vunpack.c.l.b16 %v2140
    %v2618 = vunpack.c.l.b16 %v2141
    %v2619 = vunpack.c.l.b16 %v2142
    %v2620 = vunpack.c.l.b16 %v2143
    %v2621 = vunpack.c.l.b16 %v2144
    %v2622 = vunpack.c.l.b16 %v2145
    %v2623 = vunpack.c.l.b16 %v2146
    %v2624 = vunpack.c.l.b16 %v2147
    %v2625 = vunpack.c.l.b16 %v2148
    %v2626 = vunpack.c.l.b16 %v2149
    %v2627 = vpack.c.b16 %v2612, %v2611
    %v2628 = vpack.c.b16 %v2614, %v2613
    %v2629 = vpack.c.b16 %v2616, %v2615
    %v2630 = vpack.c.b16 %v2618, %v2617
    %v2631 = vpack.c.b16 %v2620, %v2619
    %v2632 = vpack.c.b16 %v2622, %v2621
    %v2633 = vpack.c.b16 %v2624, %v2623
    %v2634 = vpack.c.b16 %v2626, %v2625
    %2643 = vmatprep.subr.bf16.mxu0 0
    %2644 = vmatpush1.bf16.msra.mxu0 %v2627
    %2645 = vmatprep.subr.bf16.mxu0 0
    %2646 = vmatpush1.bf16.msra.mxu0 %v2628
    %2647 = vmatprep.subr.bf16.mxu0 0
    %2648 = vmatpush1.bf16.msra.mxu0 %v2629
    %2649 = vmatprep.subr.bf16.mxu0 0
    %2650 = vmatpush1.bf16.msra.mxu0 %v2630
    %2651 = vmatprep.subr.bf16.mxu0 0
    %2652 = vmatpush1.bf16.msra.mxu0 %v2631
    %2653 = vmatprep.subr.bf16.mxu0 0
    %2654 = vmatpush1.bf16.msra.mxu0 %v2632
    %2655 = vmatprep.subr.bf16.mxu0 0
    %2656 = vmatpush1.bf16.msra.mxu0 %v2633
    %2657 = vmatprep.subr.bf16.mxu0 0
    %2658 = vmatpush1.bf16.msra.mxu0 %v2634
    %2659 = vmatprep.subr.bf16.mxu0 0
    %2660 = vmatpush1.bf16.msra.mxu0 0
    %2661 = vmatprep.subr.bf16.mxu0 0
    %2662 = vmatpush1.bf16.msra.mxu0 0
    %2663 = vmatprep.subr.bf16.mxu0 0
    %2664 = vmatpush1.bf16.msra.mxu0 0
    %2665 = vmatprep.subr.bf16.mxu0 0
    %2666 = vmatpush1.bf16.msra.mxu0 0
    %2667 = vmatprep.subr.bf16.mxu0 0
    %2668 = vmatpush1.bf16.msra.mxu0 0
    %2669 = vmatprep.subr.bf16.mxu0 0
    %2670 = vmatpush1.bf16.msra.mxu0 0
    %2671 = vmatprep.subr.bf16.mxu0 0
    %2672 = vmatpush1.bf16.msra.mxu0 0
    %2673 = vmatprep.subr.bf16.mxu0 0
    %2674 = vmatpush1.bf16.msra.mxu0 0
    %2675 = vmatprep.mubr.bf16.mxu0 0
    %2676 = vmatmul.mubr.bf16.gmra.mrb[0].mxu0 %v2590
    %v2677 = vpop.f32.mrb[0].mxu0
    %v2678 = vadd.f32 %v2594, %v2677
    %v2679 = vpop.f32.mrb[0].mxu0
    %v2680 = vpop.f32.mrb[0].mxu0
    %v2681 = vpop.f32.mrb[0].mxu0
    %2682 = vdwg.mxu0
    %v2683 = vmul.f32 %v2027, %v2678
    %v2684 = vld [vmem:[%s4] sm:$0xff]
    %v2685 = vld [vmem:[%s4 + $0x8] sm:$0xff]
    %v2686 = vld [vmem:[%s4 + $0x10] sm:$0xff]
    %v2687 = vld [vmem:[%s4 + $0x18] sm:$0xff]
    %v2688 = vld [vmem:[%s4 + $0x20] sm:$0xff]
    %v2689 = vld [vmem:[%s4 + $0x28] sm:$0xff]
    %s2690 = scalar_lea.vmem [#allocation5], 1152
    %v2691 = vld [vmem:[%s2690] sm:$0xf]
    %v2692 = vld [vmem:[%s2690 + $0x4] sm:$0xf]
    %v2693 = vld [vmem:[%s2690 + $0x8] sm:$0xf]
    %v2694 = vld [vmem:[%s2690 + $0xc] sm:$0xf]
    %v2695 = vld [vmem:[%s2690 + $0x10] sm:$0xf]
    %v2696 = vld [vmem:[%s2690 + $0x14] sm:$0xf]
    %v2697 = vld [vmem:[%s2690 + $0x18] sm:$0xf]
    %v2698 = vld [vmem:[%s2690 + $0x1c] sm:$0xf]
    %v2699 = vld [vmem:[%s2690 + $0x20] sm:$0xf]
    %v2700 = vld [vmem:[%s2690 + $0x24] sm:$0xf]
    %v2701 = vld [vmem:[%s2690 + $0x28] sm:$0xf]
    %v2702 = vld [vmem:[%s2690 + $0x2c] sm:$0xf]
    %v2703 = vld [vmem:[%s2690 + $0x30] sm:$0xf]
    %v2704 = vld [vmem:[%s2690 + $0x34] sm:$0xf]
    %v2705 = vld [vmem:[%s2690 + $0x38] sm:$0xf]
    %v2706 = vld [vmem:[%s2690 + $0x3c] sm:$0xf]
    %v2707 = vld [vmem:[%s2690 + $0x40] sm:$0xf]
    %v2708 = vld [vmem:[%s2690 + $0x44] sm:$0xf]
    %v2709 = vld [vmem:[%s2690 + $0x48] sm:$0xf]
    %v2710 = vld [vmem:[%s2690 + $0x4c] sm:$0xf]
    %v2711 = vld [vmem:[%s2690 + $0x50] sm:$0xf]
    %v2712 = vld [vmem:[%s2690 + $0x54] sm:$0xf]
    %v2713 = vld [vmem:[%s2690 + $0x58] sm:$0xf]
    %v2714 = vld [vmem:[%s2690 + $0x5c] sm:$0xf]
    %v2715 = vld [vmem:[%s2690 + $0x60] sm:$0xf]
    %v2716 = vld [vmem:[%s2690 + $0x64] sm:$0xf]
    %v2717 = vld [vmem:[%s2690 + $0x68] sm:$0xf]
    %v2718 = vld [vmem:[%s2690 + $0x6c] sm:$0xf]
    %v2719 = vld [vmem:[%s2690 + $0x70] sm:$0xf]
    %v2720 = vld [vmem:[%s2690 + $0x74] sm:$0xf]
    %v2721 = vld [vmem:[%s2690 + $0x78] sm:$0xf]
    %v2722 = vld [vmem:[%s2690 + $0x7c] sm:$0xf]
    %v2723 = vld [vmem:[%s2690 + $0x80] sm:$0xf]
    %v2724 = vld [vmem:[%s2690 + $0x84] sm:$0xf]
    %v2725 = vld [vmem:[%s2690 + $0x88] sm:$0xf]
    %v2726 = vld [vmem:[%s2690 + $0x8c] sm:$0xf]
    %v2727 = vld [vmem:[%s2690 + $0x90] sm:$0xf]
    %v2728 = vld [vmem:[%s2690 + $0x94] sm:$0xf]
    %v2729 = vld [vmem:[%s2690 + $0x98] sm:$0xf]
    %v2730 = vld [vmem:[%s2690 + $0x9c] sm:$0xf]
    %v2731 = vld [vmem:[%s2690 + $0xa0] sm:$0xf]
    %v2732 = vld [vmem:[%s2690 + $0xa4] sm:$0xf]
    %v2733 = vld [vmem:[%s2690 + $0xa8] sm:$0xf]
    %v2734 = vld [vmem:[%s2690 + $0xac] sm:$0xf]
    %v2735 = vld [vmem:[%s2690 + $0xb0] sm:$0xf]
    %v2736 = vld [vmem:[%s2690 + $0xb4] sm:$0xf]
    %v2737 = vld [vmem:[%s2690 + $0xb8] sm:$0xf]
    %v2738 = vld [vmem:[%s2690 + $0xbc] sm:$0xf]
    %v2739 = vld [vmem:[%s2690 + $0xc0] sm:$0xf]
    %v2740 = vld [vmem:[%s2690 + $0xc4] sm:$0xf]
    %v2741 = vld [vmem:[%s2690 + $0xc8] sm:$0xf]
    %v2742 = vld [vmem:[%s2690 + $0xcc] sm:$0xf]
    %v2743 = vld [vmem:[%s2690 + $0xd0] sm:$0xf]
    %v2744 = vld [vmem:[%s2690 + $0xd4] sm:$0xf]
    %v2745 = vld [vmem:[%s2690 + $0xd8] sm:$0xf]
    %v2746 = vld [vmem:[%s2690 + $0xdc] sm:$0xf]
    %v2747 = vld [vmem:[%s2690 + $0xe0] sm:$0xf]
    %v2748 = vld [vmem:[%s2690 + $0xe4] sm:$0xf]
    %v2749 = vld [vmem:[%s2690 + $0xe8] sm:$0xf]
    %v2750 = vld [vmem:[%s2690 + $0xec] sm:$0xf]
    %v2751 = vld [vmem:[%s2690 + $0xf0] sm:$0xf]
    %v2752 = vld [vmem:[%s2690 + $0xf4] sm:$0xf]
    %v2753 = vld [vmem:[%s2690 + $0xf8] sm:$0xf]
    %v2754 = vld [vmem:[%s2690 + $0xfc] sm:$0xf]
    %v2755 = vld [vmem:[%s2690 + $0x100] sm:$0xf]
    %v2756 = vld [vmem:[%s2690 + $0x104] sm:$0xf]
    %v2757 = vld [vmem:[%s2690 + $0x108] sm:$0xf]
    %v2758 = vld [vmem:[%s2690 + $0x10c] sm:$0xf]
    %v2759 = vld [vmem:[%s2690 + $0x110] sm:$0xf]
    %v2760 = vld [vmem:[%s2690 + $0x114] sm:$0xf]
    %v2761 = vld [vmem:[%s2690 + $0x118] sm:$0xf]
    %v2762 = vld [vmem:[%s2690 + $0x11c] sm:$0xf]
    %v2763 = vld [vmem:[%s2690 + $0x120] sm:$0xf]
    %v2764 = vld [vmem:[%s2690 + $0x124] sm:$0xf]
    %v2765 = vld [vmem:[%s2690 + $0x128] sm:$0xf]
    %v2766 = vld [vmem:[%s2690 + $0x12c] sm:$0xf]
    %v2767 = vld [vmem:[%s2690 + $0x130] sm:$0xf]
    %v2768 = vld [vmem:[%s2690 + $0x134] sm:$0xf]
    %v2769 = vld [vmem:[%s2690 + $0x138] sm:$0xf]
    %v2770 = vld [vmem:[%s2690 + $0x13c] sm:$0xf]
    %v2771 = vld [vmem:[%s2690 + $0x140] sm:$0xf]
    %v2772 = vld [vmem:[%s2690 + $0x144] sm:$0xf]
    %v2773 = vld [vmem:[%s2690 + $0x148] sm:$0xf]
    %v2774 = vld [vmem:[%s2690 + $0x14c] sm:$0xf]
    %v2775 = vld [vmem:[%s2690 + $0x150] sm:$0xf]
    %v2776 = vld [vmem:[%s2690 + $0x154] sm:$0xf]
    %v2777 = vld [vmem:[%s2690 + $0x158] sm:$0xf]
    %v2778 = vld [vmem:[%s2690 + $0x15c] sm:$0xf]
    %v2779 = vld [vmem:[%s2690 + $0x160] sm:$0xf]
    %v2780 = vld [vmem:[%s2690 + $0x164] sm:$0xf]
    %v2781 = vld [vmem:[%s2690 + $0x168] sm:$0xf]
    %v2782 = vld [vmem:[%s2690 + $0x16c] sm:$0xf]
    %v2783 = vld [vmem:[%s2690 + $0x170] sm:$0xf]
    %v2784 = vld [vmem:[%s2690 + $0x174] sm:$0xf]
    %v2785 = vld [vmem:[%s2690 + $0x178] sm:$0xf]
    %v2786 = vld [vmem:[%s2690 + $0x17c] sm:$0xf]
    %s2787 = scalar_lea.vmem %s7, 12
    %v2788 = vld [vmem:[%s2787] sm:$0xf]
    %s2789 = scalar_lea.vmem %s8, 192
    %v2790 = vld [vmem:[%s2789] sm:$0xf]
    %v2791 = vld [vmem:[%s2789 + $0x4] sm:$0xf]
    %v2792 = vld [vmem:[%s2789 + $0x8] sm:$0xf]
    %v2793 = vld [vmem:[%s2789 + $0xc] sm:$0xf]
    %v2794 = vld [vmem:[%s2789 + $0x10] sm:$0xf]
    %v2795 = vld [vmem:[%s2789 + $0x14] sm:$0xf]
    %v2796 = vld [vmem:[%s2789 + $0x18] sm:$0xf]
    %v2797 = vld [vmem:[%s2789 + $0x1c] sm:$0xf]
    %v2798 = vld [vmem:[%s2789 + $0x20] sm:$0xf]
    %v2799 = vld [vmem:[%s2789 + $0x24] sm:$0xf]
    %v2800 = vld [vmem:[%s2789 + $0x28] sm:$0xf]
    %v2801 = vld [vmem:[%s2789 + $0x2c] sm:$0xf]
    %v2802 = vld [vmem:[%s2789 + $0x30] sm:$0xf]
    %v2803 = vld [vmem:[%s2789 + $0x34] sm:$0xf]
    %v2804 = vld [vmem:[%s2789 + $0x38] sm:$0xf]
    %v2805 = vld [vmem:[%s2789 + $0x3c] sm:$0xf]
    %v2806 = vpack.c.bf16 %v2684, %v2684
    %v2807 = vpack.c.bf16 %v2685, %v2685
    %v2808 = vpack.c.bf16 %v2686, %v2686
    %v2809 = vpack.c.bf16 %v2687, %v2687
    %v2810 = vpack.c.bf16 %v2688, %v2688
    %v2811 = vpack.c.bf16 %v2689, %v2689
    %v2812 = vlaneseq
    %v2813 = vshrl.u32 %v2812, 7
    %v2814 = vsub.s32 0, %v2813
    %v2815 = vrot.slane %v2788, %v2814
    %v2912 = vunpack.c.l.b16 %v2691
    %v2913 = vunpack.c.l.b16 %v2692
    %v2914 = vunpack.c.l.b16 %v2693
    %v2915 = vunpack.c.l.b16 %v2694
    %v2916 = vunpack.c.l.b16 %v2695
    %v2917 = vunpack.c.l.b16 %v2696
    %v2918 = vunpack.c.l.b16 %v2697
    %v2919 = vunpack.c.l.b16 %v2698
    %v2920 = vunpack.c.l.b16 %v2699
    %v2921 = vunpack.c.l.b16 %v2700
    %v2922 = vunpack.c.l.b16 %v2701
    %v2923 = vunpack.c.l.b16 %v2702
    %v2924 = vunpack.c.l.b16 %v2703
    %v2925 = vunpack.c.l.b16 %v2704
    %v2926 = vunpack.c.l.b16 %v2705
    %v2927 = vunpack.c.l.b16 %v2706
    %v2928 = vunpack.c.l.b16 %v2707
    %v2929 = vunpack.c.l.b16 %v2708
    %v2930 = vunpack.c.l.b16 %v2709
    %v2931 = vunpack.c.l.b16 %v2710
    %v2932 = vunpack.c.l.b16 %v2711
    %v2933 = vunpack.c.l.b16 %v2712
    %v2934 = vunpack.c.l.b16 %v2713
    %v2935 = vunpack.c.l.b16 %v2714
    %v2936 = vunpack.c.l.b16 %v2715
    %v2937 = vunpack.c.l.b16 %v2716
    %v2938 = vunpack.c.l.b16 %v2717
    %v2939 = vunpack.c.l.b16 %v2718
    %v2940 = vunpack.c.l.b16 %v2719
    %v2941 = vunpack.c.l.b16 %v2720
    %v2942 = vunpack.c.l.b16 %v2721
    %v2943 = vunpack.c.l.b16 %v2722
    %v2944 = vunpack.c.l.b16 %v2723
    %v2945 = vunpack.c.l.b16 %v2724
    %v2946 = vunpack.c.l.b16 %v2725
    %v2947 = vunpack.c.l.b16 %v2726
    %v2948 = vunpack.c.l.b16 %v2727
    %v2949 = vunpack.c.l.b16 %v2728
    %v2950 = vunpack.c.l.b16 %v2729
    %v2951 = vunpack.c.l.b16 %v2730
    %v2952 = vunpack.c.l.b16 %v2731
    %v2953 = vunpack.c.l.b16 %v2732
    %v2954 = vunpack.c.l.b16 %v2733
    %v2955 = vunpack.c.l.b16 %v2734
    %v2956 = vunpack.c.l.b16 %v2735
    %v2957 = vunpack.c.l.b16 %v2736
    %v2958 = vunpack.c.l.b16 %v2737
    %v2959 = vunpack.c.l.b16 %v2738
    %v2960 = vunpack.c.l.b16 %v2739
    %v2961 = vunpack.c.l.b16 %v2740
    %v2962 = vunpack.c.l.b16 %v2741
    %v2963 = vunpack.c.l.b16 %v2742
    %v2964 = vunpack.c.l.b16 %v2743
    %v2965 = vunpack.c.l.b16 %v2744
    %v2966 = vunpack.c.l.b16 %v2745
    %v2967 = vunpack.c.l.b16 %v2746
    %v2968 = vunpack.c.l.b16 %v2747
    %v2969 = vunpack.c.l.b16 %v2748
    %v2970 = vunpack.c.l.b16 %v2749
    %v2971 = vunpack.c.l.b16 %v2750
    %v2972 = vunpack.c.l.b16 %v2751
    %v2973 = vunpack.c.l.b16 %v2752
    %v2974 = vunpack.c.l.b16 %v2753
    %v2975 = vunpack.c.l.b16 %v2754
    %v2976 = vunpack.c.l.b16 %v2755
    %v2977 = vunpack.c.l.b16 %v2756
    %v2978 = vunpack.c.l.b16 %v2757
    %v2979 = vunpack.c.l.b16 %v2758
    %v2980 = vunpack.c.l.b16 %v2759
    %v2981 = vunpack.c.l.b16 %v2760
    %v2982 = vunpack.c.l.b16 %v2761
    %v2983 = vunpack.c.l.b16 %v2762
    %v2984 = vunpack.c.l.b16 %v2763
    %v2985 = vunpack.c.l.b16 %v2764
    %v2986 = vunpack.c.l.b16 %v2765
    %v2987 = vunpack.c.l.b16 %v2766
    %v2988 = vunpack.c.l.b16 %v2767
    %v2989 = vunpack.c.l.b16 %v2768
    %v2990 = vunpack.c.l.b16 %v2769
    %v2991 = vunpack.c.l.b16 %v2770
    %v2992 = vunpack.c.l.b16 %v2771
    %v2993 = vunpack.c.l.b16 %v2772
    %v2994 = vunpack.c.l.b16 %v2773
    %v2995 = vunpack.c.l.b16 %v2774
    %v2996 = vunpack.c.l.b16 %v2775
    %v2997 = vunpack.c.l.b16 %v2776
    %v2998 = vunpack.c.l.b16 %v2777
    %v2999 = vunpack.c.l.b16 %v2778
    %v3000 = vunpack.c.l.b16 %v2779
    %v3001 = vunpack.c.l.b16 %v2780
    %v3002 = vunpack.c.l.b16 %v2781
    %v3003 = vunpack.c.l.b16 %v2782
    %v3004 = vunpack.c.l.b16 %v2783
    %v3005 = vunpack.c.l.b16 %v2784
    %v3006 = vunpack.c.l.b16 %v2785
    %v3007 = vunpack.c.l.b16 %v2786
    %v3008 = vpack.c.b16 %v2913, %v2912
    %v3009 = vpack.c.b16 %v2915, %v2914
    %v3010 = vpack.c.b16 %v2917, %v2916
    %v3011 = vpack.c.b16 %v2919, %v2918
    %v3012 = vpack.c.b16 %v2921, %v2920
    %v3013 = vpack.c.b16 %v2923, %v2922
    %v3014 = vpack.c.b16 %v2925, %v2924
    %v3015 = vpack.c.b16 %v2927, %v2926
    %v3016 = vpack.c.b16 %v2929, %v2928
    %v3017 = vpack.c.b16 %v2931, %v2930
    %v3018 = vpack.c.b16 %v2933, %v2932
    %v3019 = vpack.c.b16 %v2935, %v2934
    %v3020 = vpack.c.b16 %v2937, %v2936
    %v3021 = vpack.c.b16 %v2939, %v2938
    %v3022 = vpack.c.b16 %v2941, %v2940
    %v3023 = vpack.c.b16 %v2943, %v2942
    %v3024 = vpack.c.b16 %v2945, %v2944
    %v3025 = vpack.c.b16 %v2947, %v2946
    %v3026 = vpack.c.b16 %v2949, %v2948
    %v3027 = vpack.c.b16 %v2951, %v2950
    %v3028 = vpack.c.b16 %v2953, %v2952
    %v3029 = vpack.c.b16 %v2955, %v2954
    %v3030 = vpack.c.b16 %v2957, %v2956
    %v3031 = vpack.c.b16 %v2959, %v2958
    %v3032 = vpack.c.b16 %v2961, %v2960
    %v3033 = vpack.c.b16 %v2963, %v2962
    %v3034 = vpack.c.b16 %v2965, %v2964
    %v3035 = vpack.c.b16 %v2967, %v2966
    %v3036 = vpack.c.b16 %v2969, %v2968
    %v3037 = vpack.c.b16 %v2971, %v2970
    %v3038 = vpack.c.b16 %v2973, %v2972
    %v3039 = vpack.c.b16 %v2975, %v2974
    %v3040 = vpack.c.b16 %v2977, %v2976
    %v3041 = vpack.c.b16 %v2979, %v2978
    %v3042 = vpack.c.b16 %v2981, %v2980
    %v3043 = vpack.c.b16 %v2983, %v2982
    %v3044 = vpack.c.b16 %v2985, %v2984
    %v3045 = vpack.c.b16 %v2987, %v2986
    %v3046 = vpack.c.b16 %v2989, %v2988
    %v3047 = vpack.c.b16 %v2991, %v2990
    %v3048 = vpack.c.b16 %v2993, %v2992
    %v3049 = vpack.c.b16 %v2995, %v2994
    %v3050 = vpack.c.b16 %v2997, %v2996
    %v3051 = vpack.c.b16 %v2999, %v2998
    %v3052 = vpack.c.b16 %v3001, %v3000
    %v3053 = vpack.c.b16 %v3003, %v3002
    %v3054 = vpack.c.b16 %v3005, %v3004
    %v3055 = vpack.c.b16 %v3007, %v3006
    %3104 = vmatprep.subr.bf16.mxu0 0
    %3105 = vmatpush1.bf16.msra.mxu0 %v3008
    %3106 = vmatprep.subr.bf16.mxu0 0
    %3107 = vmatpush1.bf16.msra.mxu0 %v3009
    %3108 = vmatprep.subr.bf16.mxu0 0
    %3109 = vmatpush1.bf16.msra.mxu0 %v3010
    %3110 = vmatprep.subr.bf16.mxu0 0
    %3111 = vmatpush1.bf16.msra.mxu0 %v3011
    %3112 = vmatprep.subr.bf16.mxu0 0
    %3113 = vmatpush1.bf16.msra.mxu0 %v3012
    %3114 = vmatprep.subr.bf16.mxu0 0
    %3115 = vmatpush1.bf16.msra.mxu0 %v3013
    %3116 = vmatprep.subr.bf16.mxu0 0
    %3117 = vmatpush1.bf16.msra.mxu0 %v3014
    %3118 = vmatprep.subr.bf16.mxu0 0
    %3119 = vmatpush1.bf16.msra.mxu0 %v3015
    %3120 = vmatprep.subr.bf16.mxu0 0
    %3121 = vmatpush1.bf16.msra.mxu0 %v3016
    %3122 = vmatprep.subr.bf16.mxu0 0
    %3123 = vmatpush1.bf16.msra.mxu0 %v3017
    %3124 = vmatprep.subr.bf16.mxu0 0
    %3125 = vmatpush1.bf16.msra.mxu0 %v3018
    %3126 = vmatprep.subr.bf16.mxu0 0
    %3127 = vmatpush1.bf16.msra.mxu0 %v3019
    %3128 = vmatprep.subr.bf16.mxu0 0
    %3129 = vmatpush1.bf16.msra.mxu0 %v3020
    %3130 = vmatprep.subr.bf16.mxu0 0
    %3131 = vmatpush1.bf16.msra.mxu0 %v3021
    %3132 = vmatprep.subr.bf16.mxu0 0
    %3133 = vmatpush1.bf16.msra.mxu0 %v3022
    %3134 = vmatprep.subr.bf16.mxu0 0
    %3135 = vmatpush1.bf16.msra.mxu0 %v3023
    %3136 = vmatprep.mubr.bf16.mxu0 %v2807
    %3137 = vmatmul.mubr.bf16.gmra.mrb[0].mxu0 %v2806
    %v3138 = vpop.f32.mrb[0].mxu0
    %v3139 = vadd.f32 %v2815, %v3138
    %v3140 = vpop.f32.mrb[0].mxu0
    %v3141 = vpop.f32.mrb[0].mxu0
    %v3142 = vpop.f32.mrb[0].mxu0
    %3143 = vdwg.mxu0
    %3144 = vmatprep.subr.bf16.mxu0 0
    %3145 = vmatpush1.bf16.msra.mxu0 %v3024
    %3146 = vmatprep.subr.bf16.mxu0 0
    %3147 = vmatpush1.bf16.msra.mxu0 %v3025
    %3148 = vmatprep.subr.bf16.mxu0 0
    %3149 = vmatpush1.bf16.msra.mxu0 %v3026
    %3150 = vmatprep.subr.bf16.mxu0 0
    %3151 = vmatpush1.bf16.msra.mxu0 %v3027
    %3152 = vmatprep.subr.bf16.mxu0 0
    %3153 = vmatpush1.bf16.msra.mxu0 %v3028
    %3154 = vmatprep.subr.bf16.mxu0 0
    %3155 = vmatpush1.bf16.msra.mxu0 %v3029
    %3156 = vmatprep.subr.bf16.mxu0 0
    %3157 = vmatpush1.bf16.msra.mxu0 %v3030
    %3158 = vmatprep.subr.bf16.mxu0 0
    %3159 = vmatpush1.bf16.msra.mxu0 %v3031
    %3160 = vmatprep.subr.bf16.mxu0 0
    %3161 = vmatpush1.bf16.msra.mxu0 %v3032
    %3162 = vmatprep.subr.bf16.mxu0 0
    %3163 = vmatpush1.bf16.msra.mxu0 %v3033
    %3164 = vmatprep.subr.bf16.mxu0 0
    %3165 = vmatpush1.bf16.msra.mxu0 %v3034
    %3166 = vmatprep.subr.bf16.mxu0 0
    %3167 = vmatpush1.bf16.msra.mxu0 %v3035
    %3168 = vmatprep.subr.bf16.mxu0 0
    %3169 = vmatpush1.bf16.msra.mxu0 %v3036
    %3170 = vmatprep.subr.bf16.mxu0 0
    %3171 = vmatpush1.bf16.msra.mxu0 %v3037
    %3172 = vmatprep.subr.bf16.mxu0 0
    %3173 = vmatpush1.bf16.msra.mxu0 %v3038
    %3174 = vmatprep.subr.bf16.mxu0 0
    %3175 = vmatpush1.bf16.msra.mxu0 %v3039
    %3176 = vmatprep.mubr.bf16.mxu0 %v2809
    %3177 = vmatmul.mubr.bf16.gmra.mrb[0].mxu0 %v2808
    %v3178 = vpop.f32.mrb[0].mxu0
    %v3179 = vadd.f32 %v3139, %v3178
    %v3180 = vpop.f32.mrb[0].mxu0
    %v3181 = vpop.f32.mrb[0].mxu0
    %v3182 = vpop.f32.mrb[0].mxu0
    %3183 = vdwg.mxu0
    %3184 = vmatprep.subr.bf16.mxu0 0
    %3185 = vmatpush1.bf16.msra.mxu0 %v3040
    %3186 = vmatprep.subr.bf16.mxu0 0
    %3187 = vmatpush1.bf16.msra.mxu0 %v3041
    %3188 = vmatprep.subr.bf16.mxu0 0
    %3189 = vmatpush1.bf16.msra.mxu0 %v3042
    %3190 = vmatprep.subr.bf16.mxu0 0
    %3191 = vmatpush1.bf16.msra.mxu0 %v3043
    %3192 = vmatprep.subr.bf16.mxu0 0
    %3193 = vmatpush1.bf16.msra.mxu0 %v3044
    %3194 = vmatprep.subr.bf16.mxu0 0
    %3195 = vmatpush1.bf16.msra.mxu0 %v3045
    %3196 = vmatprep.subr.bf16.mxu0 0
    %3197 = vmatpush1.bf16.msra.mxu0 %v3046
    %3198 = vmatprep.subr.bf16.mxu0 0
    %3199 = vmatpush1.bf16.msra.mxu0 %v3047
    %3200 = vmatprep.subr.bf16.mxu0 0
    %3201 = vmatpush1.bf16.msra.mxu0 %v3048
    %3202 = vmatprep.subr.bf16.mxu0 0
    %3203 = vmatpush1.bf16.msra.mxu0 %v3049
    %3204 = vmatprep.subr.bf16.mxu0 0
    %3205 = vmatpush1.bf16.msra.mxu0 %v3050
    %3206 = vmatprep.subr.bf16.mxu0 0
    %3207 = vmatpush1.bf16.msra.mxu0 %v3051
    %3208 = vmatprep.subr.bf16.mxu0 0
    %3209 = vmatpush1.bf16.msra.mxu0 %v3052
    %3210 = vmatprep.subr.bf16.mxu0 0
    %3211 = vmatpush1.bf16.msra.mxu0 %v3053
    %3212 = vmatprep.subr.bf16.mxu0 0
    %3213 = vmatpush1.bf16.msra.mxu0 %v3054
    %3214 = vmatprep.subr.bf16.mxu0 0
    %3215 = vmatpush1.bf16.msra.mxu0 %v3055
    %3216 = vmatprep.mubr.bf16.mxu0 %v2811
    %3217 = vmatmul.mubr.bf16.gmra.mrb[0].mxu0 %v2810
    %v3218 = vpop.f32.mrb[0].mxu0
    %v3219 = vadd.f32 %v3179, %v3218
    %v3220 = vpop.f32.mrb[0].mxu0
    %v3221 = vpop.f32.mrb[0].mxu0
    %v3222 = vpop.f32.mrb[0].mxu0
    %3223 = vdwg.mxu0
    %3224 = vadd.xlane.f32.xlu0 %v3219
    %v3225 = vpop.xlane.xlu0 %3224
    %v3226 = vmul.f32 %v3225, %v602
    %v3227 = vsub.f32 %v3219, %v3226
    %v3228 = vmul.f32 %v3227, %v3227
    %3229 = vadd.xlane.f32.xlu0 %v3228
    %v3230 = vpop.xlane.xlu0 %3229
    %v3231 = vmul.f32 %v3230, %v602
    %v3232 = vadd.f32 %v3231, 1e-05
    %v3233 = vrsqrt.pop %v3232
    %v3234 = vmul.f32 %v3227, %v3233
    %v3235 = vlaneseq
    %v3236 = vshrl.u32 %v3235, 7
    %v3237 = vsub.s32 1, %v3236
    %v3238 = vrot.slane %v2788, %v3237
    %v3239 = vmul.f32 %v3234, %v3238
    %v3240 = vlaneseq
    %v3241 = vshrl.u32 %v3240, 7
    %v3242 = vsub.s32 2, %v3241
    %v3243 = vrot.slane %v2788, %v3242
    %v3244 = vadd.f32 %v3239, %v3243
    %v3245 = vmax.f32 %v3244, 0.0
    %v3246 = vpack.c.bf16 %v3245, %v3245
    %v3247 = vlaneseq
    %v3248 = vshrl.u32 %v3247, 7
    %v3249 = vsub.s32 3, %v3248
    %v3250 = vrot.slane %v2788, %v3249
    %v3267 = vunpack.c.l.b16 %v2790
    %v3268 = vunpack.c.l.b16 %v2791
    %v3269 = vunpack.c.l.b16 %v2792
    %v3270 = vunpack.c.l.b16 %v2793
    %v3271 = vunpack.c.l.b16 %v2794
    %v3272 = vunpack.c.l.b16 %v2795
    %v3273 = vunpack.c.l.b16 %v2796
    %v3274 = vunpack.c.l.b16 %v2797
    %v3275 = vunpack.c.l.b16 %v2798
    %v3276 = vunpack.c.l.b16 %v2799
    %v3277 = vunpack.c.l.b16 %v2800
    %v3278 = vunpack.c.l.b16 %v2801
    %v3279 = vunpack.c.l.b16 %v2802
    %v3280 = vunpack.c.l.b16 %v2803
    %v3281 = vunpack.c.l.b16 %v2804
    %v3282 = vunpack.c.l.b16 %v2805
    %v3283 = vpack.c.b16 %v3268, %v3267
    %v3284 = vpack.c.b16 %v3270, %v3269
    %v3285 = vpack.c.b16 %v3272, %v3271
    %v3286 = vpack.c.b16 %v3274, %v3273
    %v3287 = vpack.c.b16 %v3276, %v3275
    %v3288 = vpack.c.b16 %v3278, %v3277
    %v3289 = vpack.c.b16 %v3280, %v3279
    %v3290 = vpack.c.b16 %v3282, %v3281
    %3299 = vmatprep.subr.bf16.mxu0 0
    %3300 = vmatpush1.bf16.msra.mxu0 %v3283
    %3301 = vmatprep.subr.bf16.mxu0 0
    %3302 = vmatpush1.bf16.msra.mxu0 %v3284
    %3303 = vmatprep.subr.bf16.mxu0 0
    %3304 = vmatpush1.bf16.msra.mxu0 %v3285
    %3305 = vmatprep.subr.bf16.mxu0 0
    %3306 = vmatpush1.bf16.msra.mxu0 %v3286
    %3307 = vmatprep.subr.bf16.mxu0 0
    %3308 = vmatpush1.bf16.msra.mxu0 %v3287
    %3309 = vmatprep.subr.bf16.mxu0 0
    %3310 = vmatpush1.bf16.msra.mxu0 %v3288
    %3311 = vmatprep.subr.bf16.mxu0 0
    %3312 = vmatpush1.bf16.msra.mxu0 %v3289
    %3313 = vmatprep.subr.bf16.mxu0 0
    %3314 = vmatpush1.bf16.msra.mxu0 %v3290
    %3315 = vmatprep.subr.bf16.mxu0 0
    %3316 = vmatpush1.bf16.msra.mxu0 0
    %3317 = vmatprep.subr.bf16.mxu0 0
    %3318 = vmatpush1.bf16.msra.mxu0 0
    %3319 = vmatprep.subr.bf16.mxu0 0
    %3320 = vmatpush1.bf16.msra.mxu0 0
    %3321 = vmatprep.subr.bf16.mxu0 0
    %3322 = vmatpush1.bf16.msra.mxu0 0
    %3323 = vmatprep.subr.bf16.mxu0 0
    %3324 = vmatpush1.bf16.msra.mxu0 0
    %3325 = vmatprep.subr.bf16.mxu0 0
    %3326 = vmatpush1.bf16.msra.mxu0 0
    %3327 = vmatprep.subr.bf16.mxu0 0
    %3328 = vmatpush1.bf16.msra.mxu0 0
    %3329 = vmatprep.subr.bf16.mxu0 0
    %3330 = vmatpush1.bf16.msra.mxu0 0
    %3331 = vmatprep.mubr.bf16.mxu0 0
    %3332 = vmatmul.mubr.bf16.gmra.mrb[0].mxu0 %v3246
    %v3333 = vpop.f32.mrb[0].mxu0
    %v3334 = vadd.f32 %v3250, %v3333
    %v3335 = vpop.f32.mrb[0].mxu0
    %v3336 = vpop.f32.mrb[0].mxu0
    %v3337 = vpop.f32.mrb[0].mxu0
    %3338 = vdwg.mxu0
    %v3339 = vmul.f32 %v2683, %v3334
    %3340 = vadd.xlane.f32.xlu0 %v3339
    %v3341 = vpop.xlane.xlu0 %3340
    %v3342 = vstv %s61
    %v3343 = vmul.f32 %v3341, %v3342
    %v3344 = vstv %s62
    %v3345 = vadd.f32 %v3343, %v3344
    %vm3346 = vcmask 7168
    %3347 = vst.msk [vmem:[%s9] sm:$0xff] %vm3346, %v3345
    // Predicated region
    $region46: #{rl_model_forward.1} parent=1 // pred_check
      _
    $region47: #{rl_model_forward.1} parent=1 // pred_check_branch
      %3349 = sbr.rel (0) target = $region49
    $region48: #{rl_model_forward.1} parent=1 // pred_region
      _
    $region49: #{rl_model_forward.1} parent=1 // pred_fallthru
      _
    // Predicated region
    $region50: #{rl_model_forward.1} parent=1 // pred_check
      _
    $region51: #{rl_model_forward.1} parent=1 // pred_check_branch
      %3351 = sbr.rel (0) target = $region53
    $region52: #{rl_model_forward.1} parent=1 // pred_region
      _
    $region53: #{rl_model_forward.1} parent=1 // pred_fallthru
      _
    %3352 = vsyncpa [#allocation3], 1
    %3353 = vsyncpa [#allocation4], 1

</llo_original>
